<compile_context>
chip_gen: v5e
topology: v5e:2x2
jax: 0.10.0
libtpu: 0.0.40
codegen_flags: <defaults>
</compile_context>

<pallas_src>
import math

import jax
import jax.numpy as jnp
from jax import lax
from jax.experimental import pallas as pl
from jax.experimental.pallas import tpu as pltpu

# ---------------- model hyper-parameters (small, consistent with the module) --
B = 2            # batch
S = 8            # sequence length
INPUT_DIM = 32   # input feature dim (module default 1024, shrunk)
D_MODEL = 32
NUM_HEADS = 4
D_K = D_MODEL // NUM_HEADS
D_FF = 64
NUM_LAYERS = 2
NUM_CLASSES = [4, 5, 6, 7]
NC_PAD = 8                                # per-head logits padded to 8 lanes
OUT_W = len(NUM_CLASSES) * NC_PAD         # lane-dense output slab width (32)
LANES = 128
EPS = 1e-5                                # nn.LayerNorm default

# ---------------- packed weight-slab layout (row offsets, lane-0 aligned) ------
ROW_WP = 0                                                  # [32, 32]


def ROW_LAYER(l):                                           # qkv|wo|w1|w2 block
    return 32 + 160 * l


ROW_HBASE = 32 + 160 * NUM_LAYERS                           # [32, 128]


def ROW_HPREV(i):                                           # [8, 32] per head
    return ROW_HBASE + 32 + 32 * i


def ROW_HW2(i):                                             # [32, 8] per head
    return ROW_HBASE + 32 + 32 * len(NUM_CLASSES) + 32 * i


WMAT_ROWS = ROW_HW2(len(NUM_CLASSES) - 1) + 32              # 640

VR_BP = 0


def VR_LAYER(l):                                            # 8 vector rows/layer
    return 1 + 8 * l


VR_WGA = 1 + 8 * NUM_LAYERS                                 # 17


def VR_HEAD(i):                                             # 4 vector rows/head
    return VR_WGA + 1 + 4 * i


VVEC_ROWS = 40


# ---------------- Pallas kernel (single fused invocation, no grid) --------------
def fused_kernel(x_ref, wmat_ref, vvec_ref, out_ref):
    f32 = jnp.float32
    bf16 = jnp.bfloat16

    def w(r, nrow, ncol):                     # weight slice -> bf16 MXU operand
        return wmat_ref[r:r + nrow, 0:ncol].astype(bf16)

    def vrow(r, ncol):                        # bias / LN vector, f32 [1, ncol]
        return vvec_ref[r:r + 1, 0:ncol]

    def softmax(z, axis=-1):
        m = jnp.max(z, axis=axis, keepdims=True)
        e = jnp.exp(z - m)
        return e * pl.reciprocal(jnp.sum(e, axis=axis, keepdims=True), approx=True)

    def layernorm(z, gamma, beta):
        mu = jnp.mean(z, axis=-1, keepdims=True)
        zc = z - mu
        var = jnp.mean(zc * zc, axis=-1, keepdims=True)
        return zc * lax.rsqrt(var + EPS) * gamma + beta

    # ---- input projection (batch*seq folded into sublanes) ----
    x = x_ref[...]                                           # [B*S, INPUT_DIM]
    h = jnp.dot(x.astype(bf16), w(ROW_WP, INPUT_DIM, D_MODEL),
                preferred_element_type=f32) + vrow(VR_BP, D_MODEL)   # [B*S, D]

    # ---- encoder layers ----
    for l in range(NUM_LAYERS):
        rw = ROW_LAYER(l)
        rv = VR_LAYER(l)

        # fused Q|K|V projection: one 96-lane MXU push (scale folded into Wq/bq)
        qkv = jnp.dot(h.astype(bf16), w(rw, D_MODEL, 3 * D_MODEL),
                      preferred_element_type=f32) + vrow(rv + 0, 3 * D_MODEL)
        q3 = qkv[:, 0:D_MODEL].reshape(B, S, D_MODEL)
        k3 = qkv[:, D_MODEL:2 * D_MODEL].reshape(B, S, D_MODEL)
        v3 = qkv[:, 2 * D_MODEL:3 * D_MODEL].reshape(B, S, D_MODEL)

        # per-head attention; output projection as Wo-slice accumulation
        attn_acc = None
        for hd in range(NUM_HEADS):
            sl = slice(hd * D_K, (hd + 1) * D_K)
            sc = jnp.einsum('bsk,btk->bst', q3[:, :, sl].astype(bf16),
                            k3[:, :, sl].astype(bf16),
                            preferred_element_type=f32)       # [B, S, S]
            pw = softmax(sc, axis=-1)
            ctx = jnp.einsum('bst,btk->bsk', pw.astype(bf16),
                             v3[:, :, sl].astype(bf16),
                             preferred_element_type=f32)      # [B, S, D_K]
            wo_h = w(rw + 32 + hd * D_K, D_K, D_MODEL)         # Wo rows of head hd
            part = jnp.dot(ctx.reshape(B * S, D_K).astype(bf16), wo_h,
                           preferred_element_type=f32)
            attn_acc = part if attn_acc is None else attn_acc + part
        attn_out = attn_acc + vrow(rv + 1, D_MODEL)
        h = layernorm(h + attn_out, vrow(rv + 2, D_MODEL), vrow(rv + 3, D_MODEL))

        # feed-forward
        ff = jnp.maximum(
            jnp.dot(h.astype(bf16), w(rw + 64, D_MODEL, D_FF),
                    preferred_element_type=f32) + vrow(rv + 4, D_FF), 0.0)
        ff = jnp.dot(ff.astype(bf16), w(rw + 96, D_FF, D_MODEL),
                     preferred_element_type=f32) + vrow(rv + 5, D_MODEL)
        h = layernorm(h + ff, vrow(rv + 6, D_MODEL), vrow(rv + 7, D_MODEL))

    # ---- global attention pooling (softmax over the sequence axis) ----
    h3 = h.reshape(B, S, D_MODEL)
    # NOTE: the Linear(d_model, 1) bias is constant over positions and cancels
    # exactly in the softmax over dim=1, so it is dropped here.
    pool_sc = jnp.sum(h3 * vrow(VR_WGA, D_MODEL), axis=-1, keepdims=True)  # [B,S,1]
    pool_w = softmax(pool_sc, axis=1)
    g = jnp.sum(pool_w * h3, axis=1)                                       # [B, D]

    # ---- hierarchical classifier heads ----
    # prev-independent part hoisted into ONE 128-lane matmul
    hbase = jnp.dot(g.astype(bf16), w(ROW_HBASE, D_MODEL, 4 * D_MODEL),
                    preferred_element_type=f32)                            # [B, 128]
    prev = None
    for i, nc in enumerate(NUM_CLASSES):
        rv = VR_HEAD(i)
        y = hbase[:, i * D_MODEL:(i + 1) * D_MODEL] + vrow(rv + 0, D_MODEL)
        if i > 0:
            # concat([g, prev_probs]) @ W1 == g @ W1[:D] + prev @ W1[D:]
            y = y + jnp.dot(prev.astype(bf16), w(ROW_HPREV(i), NC_PAD, D_MODEL),
                            preferred_element_type=f32)
        y = jnp.maximum(layernorm(y, vrow(rv + 1, D_MODEL), vrow(rv + 2, D_MODEL)),
                        0.0)
        # padded W2 columns are zero; padded bias lanes are -1e9 so the padded
        # softmax equals the softmax over the valid lanes.
        lp = jnp.dot(y.astype(bf16), w(ROW_HW2(i), D_MODEL, NC_PAD),
                     preferred_element_type=f32) + vrow(rv + 3, NC_PAD)    # [B, 8]
        out_ref[:, i * NC_PAD:(i + 1) * NC_PAD] = lp
        prev = softmax(lp, axis=-1)


# ---------------- wrapper -------------------------------------------------------
@jax.jit
def hierarchical_transformer_forward(pooled_output, sequence_output, wmat, vvec):
    del pooled_output  # unused, exactly as in the PyTorch forward
    x2d = sequence_output.reshape(B * S, INPUT_DIM)   # fold batch into sublanes
    slab = pl.pallas_call(
        fused_kernel,
        out_shape=jax.ShapeDtypeStruct((B, OUT_W), jnp.float32),
        in_specs=[pl.BlockSpec(memory_space=pltpu.MemorySpace.VMEM)] * 3,
        out_specs=pl.BlockSpec(memory_space=pltpu.MemorySpace.VMEM),
    )(x2d, wmat, vvec)
    return [slab[:, i * NC_PAD:i * NC_PAD + nc]
            for i, nc in enumerate(NUM_CLASSES)]


# ---------------- independent pure-JAX reference (mirrors the PyTorch module) ---
def _ln_ref(x, g, b):
    mu = jnp.mean(x, axis=-1, keepdims=True)
    var = jnp.mean((x - mu) ** 2, axis=-1, keepdims=True)
    return (x - mu) / jnp.sqrt(var + EPS) * g + b


def reference_forward(params, pooled_output, sequence_output):
    del pooled_output
    h = sequence_output @ params['wp'] + params['bp']                  # [B,S,D]
    for lp_ in params['layers']:
        q = h @ lp_['wq'] + lp_['bq']
        k = h @ lp_['wk'] + lp_['bk']
        v = h @ lp_['wv'] + lp_['bv']

        def split(t):
            return t.reshape(B, S, NUM_HEADS, D_K).transpose(0, 2, 1, 3)

        qh, kh, vh = split(q), split(k), split(v)
        sc = jnp.einsum('bhsk,bhtk->bhst', qh, kh) / math.sqrt(D_K)
        aw = jax.nn.softmax(sc, axis=-1)
        ctx = jnp.einsum('bhst,bhtk->bhsk', aw, vh)
        ctx = ctx.transpose(0, 2, 1, 3).reshape(B, S, D_MODEL)
        attn_out = ctx @ lp_['wo'] + lp_['bo']
        h = _ln_ref(h + attn_out, lp_['ln1_g'], lp_['ln1_b'])
        ff = jax.nn.relu(h @ lp_['w1'] + lp_['b1'])
        ff = ff @ lp_['w2'] + lp_['b2']
        h = _ln_ref(h + ff, lp_['ln2_g'], lp_['ln2_b'])

    sc = h @ params['wg'] + params['bg']                               # [B,S,1]
    aw = jax.nn.softmax(sc, axis=1)
    g = jnp.sum(aw * h, axis=1)                                        # [B, D]

    logits = []
    prev = None
    for hp in params['heads']:
        inp = g if prev is None else jnp.concatenate([g, prev], axis=-1)
        y = inp @ hp['w1'] + hp['b1']
        y = jax.nn.relu(_ln_ref(y, hp['ln_g'], hp['ln_b']))
        lg = y @ hp['w2'] + hp['b2']
        logits.append(lg)
        prev = jax.nn.softmax(lg, axis=-1)
    return logits


# ---------------- deterministic parameter init & packing ------------------------
def init_params(key):
    keys = iter(jax.random.split(key, 64))

    def nrm(shape, scale=0.1):
        return jax.random.normal(next(keys), shape, jnp.float32) * scale

    params = dict(wp=nrm((INPUT_DIM, D_MODEL)), bp=nrm((D_MODEL,)),
                  layers=[], wg=nrm((D_MODEL, 1)), bg=nrm((1,)), heads=[])
    for _ in range(NUM_LAYERS):
        params['layers'].append(dict(
            wq=nrm((D_MODEL, D_MODEL)), bq=nrm((D_MODEL,)),
            wk=nrm((D_MODEL, D_MODEL)), bk=nrm((D_MODEL,)),
            wv=nrm((D_MODEL, D_MODEL)), bv=nrm((D_MODEL,)),
            wo=nrm((D_MODEL, D_MODEL)), bo=nrm((D_MODEL,)),
            ln1_g=jnp.ones((D_MODEL,), jnp.float32),
            ln1_b=jnp.zeros((D_MODEL,), jnp.float32),
            w1=nrm((D_MODEL, D_FF)), b1=nrm((D_FF,)),
            w2=nrm((D_FF, D_MODEL)), b2=nrm((D_MODEL,)),
            ln2_g=jnp.ones((D_MODEL,), jnp.float32),
            ln2_b=jnp.zeros((D_MODEL,), jnp.float32)))
    prev_nc = 0
    for nc in NUM_CLASSES:
        params['heads'].append(dict(
            w1=nrm((D_MODEL + prev_nc, D_MODEL)), b1=nrm((D_MODEL,)),
            ln_g=jnp.ones((D_MODEL,), jnp.float32),
            ln_b=jnp.zeros((D_MODEL,), jnp.float32),
            w2=nrm((D_MODEL, nc)), b2=nrm((nc,))))
        prev_nc = nc
    return params


def pack_params(p):
    """Pack all weights into two lane-dense f32 slabs (wmat, vvec)."""
    scale = 1.0 / math.sqrt(D_K)
    wmat = jnp.zeros((WMAT_ROWS, LANES), jnp.float32)
    vvec = jnp.zeros((VVEC_ROWS, LANES), jnp.float32)

    wmat = wmat.at[ROW_WP:ROW_WP + INPUT_DIM, :D_MODEL].set(p['wp'])
    vvec = vvec.at[VR_BP, :D_MODEL].set(p['bp'])

    for l, lp_ in enumerate(p['layers']):
        r, rv = ROW_LAYER(l), VR_LAYER(l)
        wqkv = jnp.concatenate([lp_['wq'] * scale, lp_['wk'], lp_['wv']], axis=1)
        bqkv = jnp.concatenate([lp_['bq'] * scale, lp_['bk'], lp_['bv']])
        wmat = wmat.at[r:r + D_MODEL, :3 * D_MODEL].set(wqkv)
        wmat = wmat.at[r + 32:r + 64, :D_MODEL].set(lp_['wo'])
        wmat = wmat.at[r + 64:r + 96, :D_FF].set(lp_['w1'])
        wmat = wmat.at[r + 96:r + 160, :D_MODEL].set(lp_['w2'])
        vvec = vvec.at[rv + 0, :3 * D_MODEL].set(bqkv)
        vvec = vvec.at[rv + 1, :D_MODEL].set(lp_['bo'])
        vvec = vvec.at[rv + 2, :D_MODEL].set(lp_['ln1_g'])
        vvec = vvec.at[rv + 3, :D_MODEL].set(lp_['ln1_b'])
        vvec = vvec.at[rv + 4, :D_FF].set(lp_['b1'])
        vvec = vvec.at[rv + 5, :D_MODEL].set(lp_['b2'])
        vvec = vvec.at[rv + 6, :D_MODEL].set(lp_['ln2_g'])
        vvec = vvec.at[rv + 7, :D_MODEL].set(lp_['ln2_b'])

    hbase = jnp.concatenate([hp['w1'][:D_MODEL, :] for hp in p['heads']], axis=1)
    wmat = wmat.at[ROW_HBASE:ROW_HBASE + D_MODEL, :4 * D_MODEL].set(hbase)
    vvec = vvec.at[VR_WGA, :D_MODEL].set(p['wg'][:, 0])

    prev_nc = 0
    for i, hp in enumerate(p['heads']):
        nc = NUM_CLASSES[i]
        if i > 0:
            wprev = hp['w1'][D_MODEL:, :]                      # [prev_nc, 32]
            wmat = wmat.at[ROW_HPREV(i):ROW_HPREV(i) + prev_nc, :D_MODEL].set(wprev)
        wmat = wmat.at[ROW_HW2(i):ROW_HW2(i) + D_MODEL, :nc].set(hp['w2'])
        rv = VR_HEAD(i)
        vvec = vvec.at[rv + 0, :D_MODEL].set(hp['b1'])
        vvec = vvec.at[rv + 1, :D_MODEL].set(hp['ln_g'])
        vvec = vvec.at[rv + 2, :D_MODEL].set(hp['ln_b'])
        b2pad = jnp.full((NC_PAD,), -1e9, jnp.float32).at[:nc].set(hp['b2'])
        vvec = vvec.at[rv + 3, :NC_PAD].set(b2pad)
        prev_nc = nc
    return wmat, vvec


# ---------------- main -----------------------------------------------------------
if __name__ == "__main__":
    key = jax.random.PRNGKey(0)
    k_seq, k_pool, k_par = jax.random.split(key, 3)

    params = init_params(k_par)
    wmat, vvec = pack_params(params)
    sequence_output = jax.random.normal(k_seq, (B, S, INPUT_DIM), jnp.float32)
    pooled_output = jax.random.normal(k_pool, (B, INPUT_DIM), jnp.float32)

    outs = hierarchical_transformer_forward(pooled_output, sequence_output,
                                            wmat, vvec)
    outs = jax.block_until_ready(outs)

    refs = reference_forward(params, pooled_output, sequence_output)
    max_err = 0.0
    for o, r, nc in zip(outs, refs, NUM_CLASSES):
        assert o.shape == (B, nc), (o.shape, nc)
        max_err = max(max_err, float(jnp.max(jnp.abs(o - r))))
    # kernel uses bf16 MXU operands + approx reciprocal; reference is plain f32
    assert max_err < 5e-2, f"mismatch vs reference: {max_err}"

    print("KERNEL_OK")
</pallas_src>

<mosaic_0001>
module attributes {stable_mosaic.version = 11 : i64} {
  func.func @fused_kernel(%arg0: memref<16x32xf32, #tpu.memory_space<vmem>>, %arg1: memref<640x128xf32, #tpu.memory_space<vmem>>, %arg2: memref<40x128xf32, #tpu.memory_space<vmem>>, %arg3: memref<2x32xf32, #tpu.memory_space<vmem>>) attributes {dimension_semantics = [], scalar_prefetch = 0 : i64, scratch_operands = 0 : i64, tpu.core_type = #tpu.core_type<tc>} {
    %c0 = arith.constant 0 : index
    %c0_0 = arith.constant 0 : index
    %0 = vector.load %arg0[%c0, %c0_0] : memref<16x32xf32, #tpu.memory_space<vmem>>, vector<16x32xf32>
    %1 = arith.truncf %0 : vector<16x32xf32> to vector<16x32xbf16>
    %c0_1 = arith.constant 0 : index
    %c0_2 = arith.constant 0 : index
    %2 = vector.load %arg1[%c0_1, %c0_2] : memref<640x128xf32, #tpu.memory_space<vmem>>, vector<32x32xf32>
    %3 = arith.truncf %2 : vector<32x32xf32> to vector<32x32xbf16>
    %cst = arith.constant dense<0.000000e+00> : vector<16x32xf32>
    %4 = tpu.matmul %1, %3, %cst {dimension_numbers = #tpu.dot_dimension_numbers<[1], [0], [0], [1], [0, 0, 1, 1], [], []>} : vector<16x32xbf16>, vector<32x32xbf16>, vector<16x32xf32> -> vector<16x32xf32>
    %c0_3 = arith.constant 0 : index
    %c0_4 = arith.constant 0 : index
    %5 = vector.load %arg2[%c0_3, %c0_4] : memref<40x128xf32, #tpu.memory_space<vmem>>, vector<1x32xf32>
    %6 = vector.broadcast %5 : vector<1x32xf32> to vector<16x32xf32>
    %7 = arith.addf %4, %6 : vector<16x32xf32>
    %8 = arith.truncf %7 : vector<16x32xf32> to vector<16x32xbf16>
    %c32 = arith.constant 32 : index
    %c0_5 = arith.constant 0 : index
    %9 = vector.load %arg1[%c32, %c0_5] : memref<640x128xf32, #tpu.memory_space<vmem>>, vector<32x96xf32>
    %10 = arith.truncf %9 : vector<32x96xf32> to vector<32x96xbf16>
    %cst_6 = arith.constant dense<0.000000e+00> : vector<16x96xf32>
    %11 = tpu.matmul %8, %10, %cst_6 {dimension_numbers = #tpu.dot_dimension_numbers<[1], [0], [0], [1], [0, 0, 1, 1], [], []>} : vector<16x32xbf16>, vector<32x96xbf16>, vector<16x96xf32> -> vector<16x96xf32>
    %c1 = arith.constant 1 : index
    %c0_7 = arith.constant 0 : index
    %12 = vector.load %arg2[%c1, %c0_7] : memref<40x128xf32, #tpu.memory_space<vmem>>, vector<1x96xf32>
    %13 = vector.broadcast %12 : vector<1x96xf32> to vector<16x96xf32>
    %14 = arith.addf %11, %13 : vector<16x96xf32>
    %15 = vector.extract_strided_slice %14 {offsets = [0, 0], sizes = [16, 32], strides = [1, 1]} : vector<16x96xf32> to vector<16x32xf32>
    %16 = vector.shape_cast %15 : vector<16x32xf32> to vector<2x8x32xf32>
    %17 = vector.extract_strided_slice %14 {offsets = [0, 32], sizes = [16, 32], strides = [1, 1]} : vector<16x96xf32> to vector<16x32xf32>
    %18 = vector.shape_cast %17 : vector<16x32xf32> to vector<2x8x32xf32>
    %19 = vector.extract_strided_slice %14 {offsets = [0, 64], sizes = [16, 32], strides = [1, 1]} : vector<16x96xf32> to vector<16x32xf32>
    %20 = vector.shape_cast %19 : vector<16x32xf32> to vector<2x8x32xf32>
    %21 = vector.extract_strided_slice %16 {offsets = [0, 0, 0], sizes = [2, 8, 8], strides = [1, 1, 1]} : vector<2x8x32xf32> to vector<2x8x8xf32>
    %22 = arith.truncf %21 : vector<2x8x8xf32> to vector<2x8x8xbf16>
    %23 = vector.extract_strided_slice %18 {offsets = [0, 0, 0], sizes = [2, 8, 8], strides = [1, 1, 1]} : vector<2x8x32xf32> to vector<2x8x8xf32>
    %24 = arith.truncf %23 : vector<2x8x8xf32> to vector<2x8x8xbf16>
    "tpu.trace_start"() <{level = 10 : i32, message = "bsk,btk->bst"}> : () -> ()
    %cst_8 = arith.constant dense<0.000000e+00> : vector<2x8x8xf32>
    %25 = tpu.matmul %22, %24, %cst_8 {dimension_numbers = #tpu.dot_dimension_numbers<[2], [2], [1], [1], [0, 0, 0, 1, 1, 1], [0], [0]>} : vector<2x8x8xbf16>, vector<2x8x8xbf16>, vector<2x8x8xf32> -> vector<2x8x8xf32>
    "tpu.trace_stop"() : () -> ()
    %cst_9 = arith.constant dense<0xFF800000> : vector<2x8xf32>
    %26 = vector.multi_reduction <maximumf>, %25, %cst_9 [2] : vector<2x8x8xf32> to vector<2x8xf32>
    %27 = vector.shape_cast %26 : vector<2x8xf32> to vector<2x8x1xf32>
    %28 = vector.broadcast %27 : vector<2x8x1xf32> to vector<2x8x8xf32>
    %29 = arith.subf %25, %28 : vector<2x8x8xf32>
    %30 = math.exp %29 : vector<2x8x8xf32>
    %cst_10 = arith.constant dense<0.000000e+00> : vector<2x8xf32>
    %31 = vector.multi_reduction <add>, %30, %cst_10 [2] : vector<2x8x8xf32> to vector<2x8xf32>
    %32 = vector.shape_cast %31 : vector<2x8xf32> to vector<2x8x1xf32>
    %33 = tpu.reciprocal %32 {approx = true} : vector<2x8x1xf32> -> vector<2x8x1xf32>
    %34 = vector.broadcast %33 : vector<2x8x1xf32> to vector<2x8x8xf32>
    %35 = arith.mulf %30, %34 : vector<2x8x8xf32>
    %36 = arith.truncf %35 : vector<2x8x8xf32> to vector<2x8x8xbf16>
    %37 = vector.extract_strided_slice %20 {offsets = [0, 0, 0], sizes = [2, 8, 8], strides = [1, 1, 1]} : vector<2x8x32xf32> to vector<2x8x8xf32>
    %38 = arith.truncf %37 : vector<2x8x8xf32> to vector<2x8x8xbf16>
    "tpu.trace_start"() <{level = 10 : i32, message = "bst,btk->bsk"}> : () -> ()
    %cst_11 = arith.constant dense<0.000000e+00> : vector<2x8x8xf32>
    %39 = tpu.matmul %36, %38, %cst_11 {dimension_numbers = #tpu.dot_dimension_numbers<[2], [1], [1], [2], [0, 0, 0, 1, 1, 2], [0], [0]>} : vector<2x8x8xbf16>, vector<2x8x8xbf16>, vector<2x8x8xf32> -> vector<2x8x8xf32>
    "tpu.trace_stop"() : () -> ()
    %c64 = arith.constant 64 : index
    %c0_12 = arith.constant 0 : index
    %40 = vector.load %arg1[%c64, %c0_12] : memref<640x128xf32, #tpu.memory_space<vmem>>, vector<8x32xf32>
    %41 = arith.truncf %40 : vector<8x32xf32> to vector<8x32xbf16>
    %42 = vector.shape_cast %39 : vector<2x8x8xf32> to vector<16x8xf32>
    %43 = arith.truncf %42 : vector<16x8xf32> to vector<16x8xbf16>
    %cst_13 = arith.constant dense<0.000000e+00> : vector<16x32xf32>
    %44 = tpu.matmul %43, %41, %cst_13 {dimension_numbers = #tpu.dot_dimension_numbers<[1], [0], [0], [1], [0, 0, 1, 1], [], []>} : vector<16x8xbf16>, vector<8x32xbf16>, vector<16x32xf32> -> vector<16x32xf32>
    %45 = vector.extract_strided_slice %16 {offsets = [0, 0, 8], sizes = [2, 8, 8], strides = [1, 1, 1]} : vector<2x8x32xf32> to vector<2x8x8xf32>
    %46 = arith.truncf %45 : vector<2x8x8xf32> to vector<2x8x8xbf16>
    %47 = vector.extract_strided_slice %18 {offsets = [0, 0, 8], sizes = [2, 8, 8], strides = [1, 1, 1]} : vector<2x8x32xf32> to vector<2x8x8xf32>
    %48 = arith.truncf %47 : vector<2x8x8xf32> to vector<2x8x8xbf16>
    "tpu.trace_start"() <{level = 10 : i32, message = "bsk,btk->bst"}> : () -> ()
    %cst_14 = arith.constant dense<0.000000e+00> : vector<2x8x8xf32>
    %49 = tpu.matmul %46, %48, %cst_14 {dimension_numbers = #tpu.dot_dimension_numbers<[2], [2], [1], [1], [0, 0, 0, 1, 1, 1], [0], [0]>} : vector<2x8x8xbf16>, vector<2x8x8xbf16>, vector<2x8x8xf32> -> vector<2x8x8xf32>
    "tpu.trace_stop"() : () -> ()
    %cst_15 = arith.constant dense<0xFF800000> : vector<2x8xf32>
    %50 = vector.multi_reduction <maximumf>, %49, %cst_15 [2] : vector<2x8x8xf32> to vector<2x8xf32>
    %51 = vector.shape_cast %50 : vector<2x8xf32> to vector<2x8x1xf32>
    %52 = vector.broadcast %51 : vector<2x8x1xf32> to vector<2x8x8xf32>
    %53 = arith.subf %49, %52 : vector<2x8x8xf32>
    %54 = math.exp %53 : vector<2x8x8xf32>
    %cst_16 = arith.constant dense<0.000000e+00> : vector<2x8xf32>
    %55 = vector.multi_reduction <add>, %54, %cst_16 [2] : vector<2x8x8xf32> to vector<2x8xf32>
    %56 = vector.shape_cast %55 : vector<2x8xf32> to vector<2x8x1xf32>
    %57 = tpu.reciprocal %56 {approx = true} : vector<2x8x1xf32> -> vector<2x8x1xf32>
    %58 = vector.broadcast %57 : vector<2x8x1xf32> to vector<2x8x8xf32>
    %59 = arith.mulf %54, %58 : vector<2x8x8xf32>
    %60 = arith.truncf %59 : vector<2x8x8xf32> to vector<2x8x8xbf16>
    %61 = vector.extract_strided_slice %20 {offsets = [0, 0, 8], sizes = [2, 8, 8], strides = [1, 1, 1]} : vector<2x8x32xf32> to vector<2x8x8xf32>
    %62 = arith.truncf %61 : vector<2x8x8xf32> to vector<2x8x8xbf16>
    "tpu.trace_start"() <{level = 10 : i32, message = "bst,btk->bsk"}> : () -> ()
    %cst_17 = arith.constant dense<0.000000e+00> : vector<2x8x8xf32>
    %63 = tpu.matmul %60, %62, %cst_17 {dimension_numbers = #tpu.dot_dimension_numbers<[2], [1], [1], [2], [0, 0, 0, 1, 1, 2], [0], [0]>} : vector<2x8x8xbf16>, vector<2x8x8xbf16>, vector<2x8x8xf32> -> vector<2x8x8xf32>
    "tpu.trace_stop"() : () -> ()
    %c72 = arith.constant 72 : index
    %c0_18 = arith.constant 0 : index
    %64 = vector.load %arg1[%c72, %c0_18] : memref<640x128xf32, #tpu.memory_space<vmem>>, vector<8x32xf32>
    %65 = arith.truncf %64 : vector<8x32xf32> to vector<8x32xbf16>
    %66 = vector.shape_cast %63 : vector<2x8x8xf32> to vector<16x8xf32>
    %67 = arith.truncf %66 : vector<16x8xf32> to vector<16x8xbf16>
    %cst_19 = arith.constant dense<0.000000e+00> : vector<16x32xf32>
    %68 = tpu.matmul %67, %65, %cst_19 {dimension_numbers = #tpu.dot_dimension_numbers<[1], [0], [0], [1], [0, 0, 1, 1], [], []>} : vector<16x8xbf16>, vector<8x32xbf16>, vector<16x32xf32> -> vector<16x32xf32>
    %69 = arith.addf %44, %68 : vector<16x32xf32>
    %70 = vector.extract_strided_slice %16 {offsets = [0, 0, 16], sizes = [2, 8, 8], strides = [1, 1, 1]} : vector<2x8x32xf32> to vector<2x8x8xf32>
    %71 = arith.truncf %70 : vector<2x8x8xf32> to vector<2x8x8xbf16>
    %72 = vector.extract_strided_slice %18 {offsets = [0, 0, 16], sizes = [2, 8, 8], strides = [1, 1, 1]} : vector<2x8x32xf32> to vector<2x8x8xf32>
    %73 = arith.truncf %72 : vector<2x8x8xf32> to vector<2x8x8xbf16>
    "tpu.trace_start"() <{level = 10 : i32, message = "bsk,btk->bst"}> : () -> ()
    %cst_20 = arith.constant dense<0.000000e+00> : vector<2x8x8xf32>
    %74 = tpu.matmul %71, %73, %cst_20 {dimension_numbers = #tpu.dot_dimension_numbers<[2], [2], [1], [1], [0, 0, 0, 1, 1, 1], [0], [0]>} : vector<2x8x8xbf16>, vector<2x8x8xbf16>, vector<2x8x8xf32> -> vector<2x8x8xf32>
    "tpu.trace_stop"() : () -> ()
    %cst_21 = arith.constant dense<0xFF800000> : vector<2x8xf32>
    %75 = vector.multi_reduction <maximumf>, %74, %cst_21 [2] : vector<2x8x8xf32> to vector<2x8xf32>
    %76 = vector.shape_cast %75 : vector<2x8xf32> to vector<2x8x1xf32>
    %77 = vector.broadcast %76 : vector<2x8x1xf32> to vector<2x8x8xf32>
    %78 = arith.subf %74, %77 : vector<2x8x8xf32>
    %79 = math.exp %78 : vector<2x8x8xf32>
    %cst_22 = arith.constant dense<0.000000e+00> : vector<2x8xf32>
    %80 = vector.multi_reduction <add>, %79, %cst_22 [2] : vector<2x8x8xf32> to vector<2x8xf32>
    %81 = vector.shape_cast %80 : vector<2x8xf32> to vector<2x8x1xf32>
    %82 = tpu.reciprocal %81 {approx = true} : vector<2x8x1xf32> -> vector<2x8x1xf32>
    %83 = vector.broadcast %82 : vector<2x8x1xf32> to vector<2x8x8xf32>
    %84 = arith.mulf %79, %83 : vector<2x8x8xf32>
    %85 = arith.truncf %84 : vector<2x8x8xf32> to vector<2x8x8xbf16>
    %86 = vector.extract_strided_slice %20 {offsets = [0, 0, 16], sizes = [2, 8, 8], strides = [1, 1, 1]} : vector<2x8x32xf32> to vector<2x8x8xf32>
    %87 = arith.truncf %86 : vector<2x8x8xf32> to vector<2x8x8xbf16>
    "tpu.trace_start"() <{level = 10 : i32, message = "bst,btk->bsk"}> : () -> ()
    %cst_23 = arith.constant dense<0.000000e+00> : vector<2x8x8xf32>
    %88 = tpu.matmul %85, %87, %cst_23 {dimension_numbers = #tpu.dot_dimension_numbers<[2], [1], [1], [2], [0, 0, 0, 1, 1, 2], [0], [0]>} : vector<2x8x8xbf16>, vector<2x8x8xbf16>, vector<2x8x8xf32> -> vector<2x8x8xf32>
    "tpu.trace_stop"() : () -> ()
    %c80 = arith.constant 80 : index
    %c0_24 = arith.constant 0 : index
    %89 = vector.load %arg1[%c80, %c0_24] : memref<640x128xf32, #tpu.memory_space<vmem>>, vector<8x32xf32>
    %90 = arith.truncf %89 : vector<8x32xf32> to vector<8x32xbf16>
    %91 = vector.shape_cast %88 : vector<2x8x8xf32> to vector<16x8xf32>
    %92 = arith.truncf %91 : vector<16x8xf32> to vector<16x8xbf16>
    %cst_25 = arith.constant dense<0.000000e+00> : vector<16x32xf32>
    %93 = tpu.matmul %92, %90, %cst_25 {dimension_numbers = #tpu.dot_dimension_numbers<[1], [0], [0], [1], [0, 0, 1, 1], [], []>} : vector<16x8xbf16>, vector<8x32xbf16>, vector<16x32xf32> -> vector<16x32xf32>
    %94 = arith.addf %69, %93 : vector<16x32xf32>
    %95 = vector.extract_strided_slice %16 {offsets = [0, 0, 24], sizes = [2, 8, 8], strides = [1, 1, 1]} : vector<2x8x32xf32> to vector<2x8x8xf32>
    %96 = arith.truncf %95 : vector<2x8x8xf32> to vector<2x8x8xbf16>
    %97 = vector.extract_strided_slice %18 {offsets = [0, 0, 24], sizes = [2, 8, 8], strides = [1, 1, 1]} : vector<2x8x32xf32> to vector<2x8x8xf32>
    %98 = arith.truncf %97 : vector<2x8x8xf32> to vector<2x8x8xbf16>
    "tpu.trace_start"() <{level = 10 : i32, message = "bsk,btk->bst"}> : () -> ()
    %cst_26 = arith.constant dense<0.000000e+00> : vector<2x8x8xf32>
    %99 = tpu.matmul %96, %98, %cst_26 {dimension_numbers = #tpu.dot_dimension_numbers<[2], [2], [1], [1], [0, 0, 0, 1, 1, 1], [0], [0]>} : vector<2x8x8xbf16>, vector<2x8x8xbf16>, vector<2x8x8xf32> -> vector<2x8x8xf32>
    "tpu.trace_stop"() : () -> ()
    %cst_27 = arith.constant dense<0xFF800000> : vector<2x8xf32>
    %100 = vector.multi_reduction <maximumf>, %99, %cst_27 [2] : vector<2x8x8xf32> to vector<2x8xf32>
    %101 = vector.shape_cast %100 : vector<2x8xf32> to vector<2x8x1xf32>
    %102 = vector.broadcast %101 : vector<2x8x1xf32> to vector<2x8x8xf32>
    %103 = arith.subf %99, %102 : vector<2x8x8xf32>
    %104 = math.exp %103 : vector<2x8x8xf32>
    %cst_28 = arith.constant dense<0.000000e+00> : vector<2x8xf32>
    %105 = vector.multi_reduction <add>, %104, %cst_28 [2] : vector<2x8x8xf32> to vector<2x8xf32>
    %106 = vector.shape_cast %105 : vector<2x8xf32> to vector<2x8x1xf32>
    %107 = tpu.reciprocal %106 {approx = true} : vector<2x8x1xf32> -> vector<2x8x1xf32>
    %108 = vector.broadcast %107 : vector<2x8x1xf32> to vector<2x8x8xf32>
    %109 = arith.mulf %104, %108 : vector<2x8x8xf32>
    %110 = arith.truncf %109 : vector<2x8x8xf32> to vector<2x8x8xbf16>
    %111 = vector.extract_strided_slice %20 {offsets = [0, 0, 24], sizes = [2, 8, 8], strides = [1, 1, 1]} : vector<2x8x32xf32> to vector<2x8x8xf32>
    %112 = arith.truncf %111 : vector<2x8x8xf32> to vector<2x8x8xbf16>
    "tpu.trace_start"() <{level = 10 : i32, message = "bst,btk->bsk"}> : () -> ()
    %cst_29 = arith.constant dense<0.000000e+00> : vector<2x8x8xf32>
    %113 = tpu.matmul %110, %112, %cst_29 {dimension_numbers = #tpu.dot_dimension_numbers<[2], [1], [1], [2], [0, 0, 0, 1, 1, 2], [0], [0]>} : vector<2x8x8xbf16>, vector<2x8x8xbf16>, vector<2x8x8xf32> -> vector<2x8x8xf32>
    "tpu.trace_stop"() : () -> ()
    %c88 = arith.constant 88 : index
    %c0_30 = arith.constant 0 : index
    %114 = vector.load %arg1[%c88, %c0_30] : memref<640x128xf32, #tpu.memory_space<vmem>>, vector<8x32xf32>
    %115 = arith.truncf %114 : vector<8x32xf32> to vector<8x32xbf16>
    %116 = vector.shape_cast %113 : vector<2x8x8xf32> to vector<16x8xf32>
    %117 = arith.truncf %116 : vector<16x8xf32> to vector<16x8xbf16>
    %cst_31 = arith.constant dense<0.000000e+00> : vector<16x32xf32>
    %118 = tpu.matmul %117, %115, %cst_31 {dimension_numbers = #tpu.dot_dimension_numbers<[1], [0], [0], [1], [0, 0, 1, 1], [], []>} : vector<16x8xbf16>, vector<8x32xbf16>, vector<16x32xf32> -> vector<16x32xf32>
    %119 = arith.addf %94, %118 : vector<16x32xf32>
    %c2 = arith.constant 2 : index
    %c0_32 = arith.constant 0 : index
    %120 = vector.load %arg2[%c2, %c0_32] : memref<40x128xf32, #tpu.memory_space<vmem>>, vector<1x32xf32>
    %121 = vector.broadcast %120 : vector<1x32xf32> to vector<16x32xf32>
    %122 = arith.addf %119, %121 : vector<16x32xf32>
    %123 = arith.addf %7, %122 : vector<16x32xf32>
    %c3 = arith.constant 3 : index
    %c0_33 = arith.constant 0 : index
    %124 = vector.load %arg2[%c3, %c0_33] : memref<40x128xf32, #tpu.memory_space<vmem>>, vector<1x32xf32>
    %c4 = arith.constant 4 : index
    %c0_34 = arith.constant 0 : index
    %125 = vector.load %arg2[%c4, %c0_34] : memref<40x128xf32, #tpu.memory_space<vmem>>, vector<1x32xf32>
    %cst_35 = arith.constant dense<0.000000e+00> : vector<16xf32>
    %126 = vector.multi_reduction <add>, %123, %cst_35 [1] : vector<16x32xf32> to vector<16xf32>
    %127 = vector.shape_cast %126 : vector<16xf32> to vector<16x1xf32>
    %cst_36 = arith.constant 3.200000e+01 : f32
    %128 = vector.broadcast %cst_36 : f32 to vector<16x1xf32>
    %129 = arith.divf %127, %128 : vector<16x1xf32>
    %130 = vector.broadcast %129 : vector<16x1xf32> to vector<16x32xf32>
    %131 = arith.subf %123, %130 : vector<16x32xf32>
    %132 = arith.mulf %131, %131 : vector<16x32xf32>
    %cst_37 = arith.constant dense<0.000000e+00> : vector<16xf32>
    %133 = vector.multi_reduction <add>, %132, %cst_37 [1] : vector<16x32xf32> to vector<16xf32>
    %134 = vector.shape_cast %133 : vector<16xf32> to vector<16x1xf32>
    %cst_38 = arith.constant 3.200000e+01 : f32
    %135 = vector.broadcast %cst_38 : f32 to vector<16x1xf32>
    %136 = arith.divf %134, %135 : vector<16x1xf32>
    %cst_39 = arith.constant 9.99999974E-6 : f32
    %137 = vector.broadcast %cst_39 : f32 to vector<16x1xf32>
    %138 = arith.addf %136, %137 : vector<16x1xf32>
    %139 = math.rsqrt %138 : vector<16x1xf32>
    %140 = vector.broadcast %139 : vector<16x1xf32> to vector<16x32xf32>
    %141 = arith.mulf %131, %140 : vector<16x32xf32>
    %142 = vector.broadcast %124 : vector<1x32xf32> to vector<16x32xf32>
    %143 = arith.mulf %141, %142 : vector<16x32xf32>
    %144 = vector.broadcast %125 : vector<1x32xf32> to vector<16x32xf32>
    %145 = arith.addf %143, %144 : vector<16x32xf32>
    %146 = arith.truncf %145 : vector<16x32xf32> to vector<16x32xbf16>
    %c96 = arith.constant 96 : index
    %c0_40 = arith.constant 0 : index
    %147 = vector.load %arg1[%c96, %c0_40] : memref<640x128xf32, #tpu.memory_space<vmem>>, vector<32x64xf32>
    %148 = arith.truncf %147 : vector<32x64xf32> to vector<32x64xbf16>
    %cst_41 = arith.constant dense<0.000000e+00> : vector<16x64xf32>
    %149 = tpu.matmul %146, %148, %cst_41 {dimension_numbers = #tpu.dot_dimension_numbers<[1], [0], [0], [1], [0, 0, 1, 1], [], []>} : vector<16x32xbf16>, vector<32x64xbf16>, vector<16x64xf32> -> vector<16x64xf32>
    %c5 = arith.constant 5 : index
    %c0_42 = arith.constant 0 : index
    %150 = vector.load %arg2[%c5, %c0_42] : memref<40x128xf32, #tpu.memory_space<vmem>>, vector<1x64xf32>
    %151 = vector.broadcast %150 : vector<1x64xf32> to vector<16x64xf32>
    %152 = arith.addf %149, %151 : vector<16x64xf32>
    %cst_43 = arith.constant 0.000000e+00 : f32
    %153 = vector.broadcast %cst_43 : f32 to vector<16x64xf32>
    %154 = arith.maximumf %152, %153 : vector<16x64xf32>
    %155 = arith.truncf %154 : vector<16x64xf32> to vector<16x64xbf16>
    %c128 = arith.constant 128 : index
    %c0_44 = arith.constant 0 : index
    %156 = vector.load %arg1[%c128, %c0_44] : memref<640x128xf32, #tpu.memory_space<vmem>>, vector<64x32xf32>
    %157 = arith.truncf %156 : vector<64x32xf32> to vector<64x32xbf16>
    %cst_45 = arith.constant dense<0.000000e+00> : vector<16x32xf32>
    %158 = tpu.matmul %155, %157, %cst_45 {dimension_numbers = #tpu.dot_dimension_numbers<[1], [0], [0], [1], [0, 0, 1, 1], [], []>} : vector<16x64xbf16>, vector<64x32xbf16>, vector<16x32xf32> -> vector<16x32xf32>
    %c6 = arith.constant 6 : index
    %c0_46 = arith.constant 0 : index
    %159 = vector.load %arg2[%c6, %c0_46] : memref<40x128xf32, #tpu.memory_space<vmem>>, vector<1x32xf32>
    %160 = vector.broadcast %159 : vector<1x32xf32> to vector<16x32xf32>
    %161 = arith.addf %158, %160 : vector<16x32xf32>
    %162 = arith.addf %145, %161 : vector<16x32xf32>
    %c7 = arith.constant 7 : index
    %c0_47 = arith.constant 0 : index
    %163 = vector.load %arg2[%c7, %c0_47] : memref<40x128xf32, #tpu.memory_space<vmem>>, vector<1x32xf32>
    %c8 = arith.constant 8 : index
    %c0_48 = arith.constant 0 : index
    %164 = vector.load %arg2[%c8, %c0_48] : memref<40x128xf32, #tpu.memory_space<vmem>>, vector<1x32xf32>
    %cst_49 = arith.constant dense<0.000000e+00> : vector<16xf32>
    %165 = vector.multi_reduction <add>, %162, %cst_49 [1] : vector<16x32xf32> to vector<16xf32>
    %166 = vector.shape_cast %165 : vector<16xf32> to vector<16x1xf32>
    %cst_50 = arith.constant 3.200000e+01 : f32
    %167 = vector.broadcast %cst_50 : f32 to vector<16x1xf32>
    %168 = arith.divf %166, %167 : vector<16x1xf32>
    %169 = vector.broadcast %168 : vector<16x1xf32> to vector<16x32xf32>
    %170 = arith.subf %162, %169 : vector<16x32xf32>
    %171 = arith.mulf %170, %170 : vector<16x32xf32>
    %cst_51 = arith.constant dense<0.000000e+00> : vector<16xf32>
    %172 = vector.multi_reduction <add>, %171, %cst_51 [1] : vector<16x32xf32> to vector<16xf32>
    %173 = vector.shape_cast %172 : vector<16xf32> to vector<16x1xf32>
    %cst_52 = arith.constant 3.200000e+01 : f32
    %174 = vector.broadcast %cst_52 : f32 to vector<16x1xf32>
    %175 = arith.divf %173, %174 : vector<16x1xf32>
    %cst_53 = arith.constant 9.99999974E-6 : f32
    %176 = vector.broadcast %cst_53 : f32 to vector<16x1xf32>
    %177 = arith.addf %175, %176 : vector<16x1xf32>
    %178 = math.rsqrt %177 : vector<16x1xf32>
    %179 = vector.broadcast %178 : vector<16x1xf32> to vector<16x32xf32>
    %180 = arith.mulf %170, %179 : vector<16x32xf32>
    %181 = vector.broadcast %163 : vector<1x32xf32> to vector<16x32xf32>
    %182 = arith.mulf %180, %181 : vector<16x32xf32>
    %183 = vector.broadcast %164 : vector<1x32xf32> to vector<16x32xf32>
    %184 = arith.addf %182, %183 : vector<16x32xf32>
    %185 = arith.truncf %184 : vector<16x32xf32> to vector<16x32xbf16>
    %c192 = arith.constant 192 : index
    %c0_54 = arith.constant 0 : index
    %186 = vector.load %arg1[%c192, %c0_54] : memref<640x128xf32, #tpu.memory_space<vmem>>, vector<32x96xf32>
    %187 = arith.truncf %186 : vector<32x96xf32> to vector<32x96xbf16>
    %cst_55 = arith.constant dense<0.000000e+00> : vector<16x96xf32>
    %188 = tpu.matmul %185, %187, %cst_55 {dimension_numbers = #tpu.dot_dimension_numbers<[1], [0], [0], [1], [0, 0, 1, 1], [], []>} : vector<16x32xbf16>, vector<32x96xbf16>, vector<16x96xf32> -> vector<16x96xf32>
    %c9 = arith.constant 9 : index
    %c0_56 = arith.constant 0 : index
    %189 = vector.load %arg2[%c9, %c0_56] : memref<40x128xf32, #tpu.memory_space<vmem>>, vector<1x96xf32>
    %190 = vector.broadcast %189 : vector<1x96xf32> to vector<16x96xf32>
    %191 = arith.addf %188, %190 : vector<16x96xf32>
    %192 = vector.extract_strided_slice %191 {offsets = [0, 0], sizes = [16, 32], strides = [1, 1]} : vector<16x96xf32> to vector<16x32xf32>
    %193 = vector.shape_cast %192 : vector<16x32xf32> to vector<2x8x32xf32>
    %194 = vector.extract_strided_slice %191 {offsets = [0, 32], sizes = [16, 32], strides = [1, 1]} : vector<16x96xf32> to vector<16x32xf32>
    %195 = vector.shape_cast %194 : vector<16x32xf32> to vector<2x8x32xf32>
    %196 = vector.extract_strided_slice %191 {offsets = [0, 64], sizes = [16, 32], strides = [1, 1]} : vector<16x96xf32> to vector<16x32xf32>
    %197 = vector.shape_cast %196 : vector<16x32xf32> to vector<2x8x32xf32>
    %198 = vector.extract_strided_slice %193 {offsets = [0, 0, 0], sizes = [2, 8, 8], strides = [1, 1, 1]} : vector<2x8x32xf32> to vector<2x8x8xf32>
    %199 = arith.truncf %198 : vector<2x8x8xf32> to vector<2x8x8xbf16>
    %200 = vector.extract_strided_slice %195 {offsets = [0, 0, 0], sizes = [2, 8, 8], strides = [1, 1, 1]} : vector<2x8x32xf32> to vector<2x8x8xf32>
    %201 = arith.truncf %200 : vector<2x8x8xf32> to vector<2x8x8xbf16>
    "tpu.trace_start"() <{level = 10 : i32, message = "bsk,btk->bst"}> : () -> ()
    %cst_57 = arith.constant dense<0.000000e+00> : vector<2x8x8xf32>
    %202 = tpu.matmul %199, %201, %cst_57 {dimension_numbers = #tpu.dot_dimension_numbers<[2], [2], [1], [1], [0, 0, 0, 1, 1, 1], [0], [0]>} : vector<2x8x8xbf16>, vector<2x8x8xbf16>, vector<2x8x8xf32> -> vector<2x8x8xf32>
    "tpu.trace_stop"() : () -> ()
    %cst_58 = arith.constant dense<0xFF800000> : vector<2x8xf32>
    %203 = vector.multi_reduction <maximumf>, %202, %cst_58 [2] : vector<2x8x8xf32> to vector<2x8xf32>
    %204 = vector.shape_cast %203 : vector<2x8xf32> to vector<2x8x1xf32>
    %205 = vector.broadcast %204 : vector<2x8x1xf32> to vector<2x8x8xf32>
    %206 = arith.subf %202, %205 : vector<2x8x8xf32>
    %207 = math.exp %206 : vector<2x8x8xf32>
    %cst_59 = arith.constant dense<0.000000e+00> : vector<2x8xf32>
    %208 = vector.multi_reduction <add>, %207, %cst_59 [2] : vector<2x8x8xf32> to vector<2x8xf32>
    %209 = vector.shape_cast %208 : vector<2x8xf32> to vector<2x8x1xf32>
    %210 = tpu.reciprocal %209 {approx = true} : vector<2x8x1xf32> -> vector<2x8x1xf32>
    %211 = vector.broadcast %210 : vector<2x8x1xf32> to vector<2x8x8xf32>
    %212 = arith.mulf %207, %211 : vector<2x8x8xf32>
    %213 = arith.truncf %212 : vector<2x8x8xf32> to vector<2x8x8xbf16>
    %214 = vector.extract_strided_slice %197 {offsets = [0, 0, 0], sizes = [2, 8, 8], strides = [1, 1, 1]} : vector<2x8x32xf32> to vector<2x8x8xf32>
    %215 = arith.truncf %214 : vector<2x8x8xf32> to vector<2x8x8xbf16>
    "tpu.trace_start"() <{level = 10 : i32, message = "bst,btk->bsk"}> : () -> ()
    %cst_60 = arith.constant dense<0.000000e+00> : vector<2x8x8xf32>
    %216 = tpu.matmul %213, %215, %cst_60 {dimension_numbers = #tpu.dot_dimension_numbers<[2], [1], [1], [2], [0, 0, 0, 1, 1, 2], [0], [0]>} : vector<2x8x8xbf16>, vector<2x8x8xbf16>, vector<2x8x8xf32> -> vector<2x8x8xf32>
    "tpu.trace_stop"() : () -> ()
    %c224 = arith.constant 224 : index
    %c0_61 = arith.constant 0 : index
    %217 = vector.load %arg1[%c224, %c0_61] : memref<640x128xf32, #tpu.memory_space<vmem>>, vector<8x32xf32>
    %218 = arith.truncf %217 : vector<8x32xf32> to vector<8x32xbf16>
    %219 = vector.shape_cast %216 : vector<2x8x8xf32> to vector<16x8xf32>
    %220 = arith.truncf %219 : vector<16x8xf32> to vector<16x8xbf16>
    %cst_62 = arith.constant dense<0.000000e+00> : vector<16x32xf32>
    %221 = tpu.matmul %220, %218, %cst_62 {dimension_numbers = #tpu.dot_dimension_numbers<[1], [0], [0], [1], [0, 0, 1, 1], [], []>} : vector<16x8xbf16>, vector<8x32xbf16>, vector<16x32xf32> -> vector<16x32xf32>
    %222 = vector.extract_strided_slice %193 {offsets = [0, 0, 8], sizes = [2, 8, 8], strides = [1, 1, 1]} : vector<2x8x32xf32> to vector<2x8x8xf32>
    %223 = arith.truncf %222 : vector<2x8x8xf32> to vector<2x8x8xbf16>
    %224 = vector.extract_strided_slice %195 {offsets = [0, 0, 8], sizes = [2, 8, 8], strides = [1, 1, 1]} : vector<2x8x32xf32> to vector<2x8x8xf32>
    %225 = arith.truncf %224 : vector<2x8x8xf32> to vector<2x8x8xbf16>
    "tpu.trace_start"() <{level = 10 : i32, message = "bsk,btk->bst"}> : () -> ()
    %cst_63 = arith.constant dense<0.000000e+00> : vector<2x8x8xf32>
    %226 = tpu.matmul %223, %225, %cst_63 {dimension_numbers = #tpu.dot_dimension_numbers<[2], [2], [1], [1], [0, 0, 0, 1, 1, 1], [0], [0]>} : vector<2x8x8xbf16>, vector<2x8x8xbf16>, vector<2x8x8xf32> -> vector<2x8x8xf32>
    "tpu.trace_stop"() : () -> ()
    %cst_64 = arith.constant dense<0xFF800000> : vector<2x8xf32>
    %227 = vector.multi_reduction <maximumf>, %226, %cst_64 [2] : vector<2x8x8xf32> to vector<2x8xf32>
    %228 = vector.shape_cast %227 : vector<2x8xf32> to vector<2x8x1xf32>
    %229 = vector.broadcast %228 : vector<2x8x1xf32> to vector<2x8x8xf32>
    %230 = arith.subf %226, %229 : vector<2x8x8xf32>
    %231 = math.exp %230 : vector<2x8x8xf32>
    %cst_65 = arith.constant dense<0.000000e+00> : vector<2x8xf32>
    %232 = vector.multi_reduction <add>, %231, %cst_65 [2] : vector<2x8x8xf32> to vector<2x8xf32>
    %233 = vector.shape_cast %232 : vector<2x8xf32> to vector<2x8x1xf32>
    %234 = tpu.reciprocal %233 {approx = true} : vector<2x8x1xf32> -> vector<2x8x1xf32>
    %235 = vector.broadcast %234 : vector<2x8x1xf32> to vector<2x8x8xf32>
    %236 = arith.mulf %231, %235 : vector<2x8x8xf32>
    %237 = arith.truncf %236 : vector<2x8x8xf32> to vector<2x8x8xbf16>
    %238 = vector.extract_strided_slice %197 {offsets = [0, 0, 8], sizes = [2, 8, 8], strides = [1, 1, 1]} : vector<2x8x32xf32> to vector<2x8x8xf32>
    %239 = arith.truncf %238 : vector<2x8x8xf32> to vector<2x8x8xbf16>
    "tpu.trace_start"() <{level = 10 : i32, message = "bst,btk->bsk"}> : () -> ()
    %cst_66 = arith.constant dense<0.000000e+00> : vector<2x8x8xf32>
    %240 = tpu.matmul %237, %239, %cst_66 {dimension_numbers = #tpu.dot_dimension_numbers<[2], [1], [1], [2], [0, 0, 0, 1, 1, 2], [0], [0]>} : vector<2x8x8xbf16>, vector<2x8x8xbf16>, vector<2x8x8xf32> -> vector<2x8x8xf32>
    "tpu.trace_stop"() : () -> ()
    %c232 = arith.constant 232 : index
    %c0_67 = arith.constant 0 : index
    %241 = vector.load %arg1[%c232, %c0_67] : memref<640x128xf32, #tpu.memory_space<vmem>>, vector<8x32xf32>
    %242 = arith.truncf %241 : vector<8x32xf32> to vector<8x32xbf16>
    %243 = vector.shape_cast %240 : vector<2x8x8xf32> to vector<16x8xf32>
    %244 = arith.truncf %243 : vector<16x8xf32> to vector<16x8xbf16>
    %cst_68 = arith.constant dense<0.000000e+00> : vector<16x32xf32>
    %245 = tpu.matmul %244, %242, %cst_68 {dimension_numbers = #tpu.dot_dimension_numbers<[1], [0], [0], [1], [0, 0, 1, 1], [], []>} : vector<16x8xbf16>, vector<8x32xbf16>, vector<16x32xf32> -> vector<16x32xf32>
    %246 = arith.addf %221, %245 : vector<16x32xf32>
    %247 = vector.extract_strided_slice %193 {offsets = [0, 0, 16], sizes = [2, 8, 8], strides = [1, 1, 1]} : vector<2x8x32xf32> to vector<2x8x8xf32>
    %248 = arith.truncf %247 : vector<2x8x8xf32> to vector<2x8x8xbf16>
    %249 = vector.extract_strided_slice %195 {offsets = [0, 0, 16], sizes = [2, 8, 8], strides = [1, 1, 1]} : vector<2x8x32xf32> to vector<2x8x8xf32>
    %250 = arith.truncf %249 : vector<2x8x8xf32> to vector<2x8x8xbf16>
    "tpu.trace_start"() <{level = 10 : i32, message = "bsk,btk->bst"}> : () -> ()
    %cst_69 = arith.constant dense<0.000000e+00> : vector<2x8x8xf32>
    %251 = tpu.matmul %248, %250, %cst_69 {dimension_numbers = #tpu.dot_dimension_numbers<[2], [2], [1], [1], [0, 0, 0, 1, 1, 1], [0], [0]>} : vector<2x8x8xbf16>, vector<2x8x8xbf16>, vector<2x8x8xf32> -> vector<2x8x8xf32>
    "tpu.trace_stop"() : () -> ()
    %cst_70 = arith.constant dense<0xFF800000> : vector<2x8xf32>
    %252 = vector.multi_reduction <maximumf>, %251, %cst_70 [2] : vector<2x8x8xf32> to vector<2x8xf32>
    %253 = vector.shape_cast %252 : vector<2x8xf32> to vector<2x8x1xf32>
    %254 = vector.broadcast %253 : vector<2x8x1xf32> to vector<2x8x8xf32>
    %255 = arith.subf %251, %254 : vector<2x8x8xf32>
    %256 = math.exp %255 : vector<2x8x8xf32>
    %cst_71 = arith.constant dense<0.000000e+00> : vector<2x8xf32>
    %257 = vector.multi_reduction <add>, %256, %cst_71 [2] : vector<2x8x8xf32> to vector<2x8xf32>
    %258 = vector.shape_cast %257 : vector<2x8xf32> to vector<2x8x1xf32>
    %259 = tpu.reciprocal %258 {approx = true} : vector<2x8x1xf32> -> vector<2x8x1xf32>
    %260 = vector.broadcast %259 : vector<2x8x1xf32> to vector<2x8x8xf32>
    %261 = arith.mulf %256, %260 : vector<2x8x8xf32>
    %262 = arith.truncf %261 : vector<2x8x8xf32> to vector<2x8x8xbf16>
    %263 = vector.extract_strided_slice %197 {offsets = [0, 0, 16], sizes = [2, 8, 8], strides = [1, 1, 1]} : vector<2x8x32xf32> to vector<2x8x8xf32>
    %264 = arith.truncf %263 : vector<2x8x8xf32> to vector<2x8x8xbf16>
    "tpu.trace_start"() <{level = 10 : i32, message = "bst,btk->bsk"}> : () -> ()
    %cst_72 = arith.constant dense<0.000000e+00> : vector<2x8x8xf32>
    %265 = tpu.matmul %262, %264, %cst_72 {dimension_numbers = #tpu.dot_dimension_numbers<[2], [1], [1], [2], [0, 0, 0, 1, 1, 2], [0], [0]>} : vector<2x8x8xbf16>, vector<2x8x8xbf16>, vector<2x8x8xf32> -> vector<2x8x8xf32>
    "tpu.trace_stop"() : () -> ()
    %c240 = arith.constant 240 : index
    %c0_73 = arith.constant 0 : index
    %266 = vector.load %arg1[%c240, %c0_73] : memref<640x128xf32, #tpu.memory_space<vmem>>, vector<8x32xf32>
    %267 = arith.truncf %266 : vector<8x32xf32> to vector<8x32xbf16>
    %268 = vector.shape_cast %265 : vector<2x8x8xf32> to vector<16x8xf32>
    %269 = arith.truncf %268 : vector<16x8xf32> to vector<16x8xbf16>
    %cst_74 = arith.constant dense<0.000000e+00> : vector<16x32xf32>
    %270 = tpu.matmul %269, %267, %cst_74 {dimension_numbers = #tpu.dot_dimension_numbers<[1], [0], [0], [1], [0, 0, 1, 1], [], []>} : vector<16x8xbf16>, vector<8x32xbf16>, vector<16x32xf32> -> vector<16x32xf32>
    %271 = arith.addf %246, %270 : vector<16x32xf32>
    %272 = vector.extract_strided_slice %193 {offsets = [0, 0, 24], sizes = [2, 8, 8], strides = [1, 1, 1]} : vector<2x8x32xf32> to vector<2x8x8xf32>
    %273 = arith.truncf %272 : vector<2x8x8xf32> to vector<2x8x8xbf16>
    %274 = vector.extract_strided_slice %195 {offsets = [0, 0, 24], sizes = [2, 8, 8], strides = [1, 1, 1]} : vector<2x8x32xf32> to vector<2x8x8xf32>
    %275 = arith.truncf %274 : vector<2x8x8xf32> to vector<2x8x8xbf16>
    "tpu.trace_start"() <{level = 10 : i32, message = "bsk,btk->bst"}> : () -> ()
    %cst_75 = arith.constant dense<0.000000e+00> : vector<2x8x8xf32>
    %276 = tpu.matmul %273, %275, %cst_75 {dimension_numbers = #tpu.dot_dimension_numbers<[2], [2], [1], [1], [0, 0, 0, 1, 1, 1], [0], [0]>} : vector<2x8x8xbf16>, vector<2x8x8xbf16>, vector<2x8x8xf32> -> vector<2x8x8xf32>
    "tpu.trace_stop"() : () -> ()
    %cst_76 = arith.constant dense<0xFF800000> : vector<2x8xf32>
    %277 = vector.multi_reduction <maximumf>, %276, %cst_76 [2] : vector<2x8x8xf32> to vector<2x8xf32>
    %278 = vector.shape_cast %277 : vector<2x8xf32> to vector<2x8x1xf32>
    %279 = vector.broadcast %278 : vector<2x8x1xf32> to vector<2x8x8xf32>
    %280 = arith.subf %276, %279 : vector<2x8x8xf32>
    %281 = math.exp %280 : vector<2x8x8xf32>
    %cst_77 = arith.constant dense<0.000000e+00> : vector<2x8xf32>
    %282 = vector.multi_reduction <add>, %281, %cst_77 [2] : vector<2x8x8xf32> to vector<2x8xf32>
    %283 = vector.shape_cast %282 : vector<2x8xf32> to vector<2x8x1xf32>
    %284 = tpu.reciprocal %283 {approx = true} : vector<2x8x1xf32> -> vector<2x8x1xf32>
    %285 = vector.broadcast %284 : vector<2x8x1xf32> to vector<2x8x8xf32>
    %286 = arith.mulf %281, %285 : vector<2x8x8xf32>
    %287 = arith.truncf %286 : vector<2x8x8xf32> to vector<2x8x8xbf16>
    %288 = vector.extract_strided_slice %197 {offsets = [0, 0, 24], sizes = [2, 8, 8], strides = [1, 1, 1]} : vector<2x8x32xf32> to vector<2x8x8xf32>
    %289 = arith.truncf %288 : vector<2x8x8xf32> to vector<2x8x8xbf16>
    "tpu.trace_start"() <{level = 10 : i32, message = "bst,btk->bsk"}> : () -> ()
    %cst_78 = arith.constant dense<0.000000e+00> : vector<2x8x8xf32>
    %290 = tpu.matmul %287, %289, %cst_78 {dimension_numbers = #tpu.dot_dimension_numbers<[2], [1], [1], [2], [0, 0, 0, 1, 1, 2], [0], [0]>} : vector<2x8x8xbf16>, vector<2x8x8xbf16>, vector<2x8x8xf32> -> vector<2x8x8xf32>
    "tpu.trace_stop"() : () -> ()
    %c248 = arith.constant 248 : index
    %c0_79 = arith.constant 0 : index
    %291 = vector.load %arg1[%c248, %c0_79] : memref<640x128xf32, #tpu.memory_space<vmem>>, vector<8x32xf32>
    %292 = arith.truncf %291 : vector<8x32xf32> to vector<8x32xbf16>
    %293 = vector.shape_cast %290 : vector<2x8x8xf32> to vector<16x8xf32>
    %294 = arith.truncf %293 : vector<16x8xf32> to vector<16x8xbf16>
    %cst_80 = arith.constant dense<0.000000e+00> : vector<16x32xf32>
    %295 = tpu.matmul %294, %292, %cst_80 {dimension_numbers = #tpu.dot_dimension_numbers<[1], [0], [0], [1], [0, 0, 1, 1], [], []>} : vector<16x8xbf16>, vector<8x32xbf16>, vector<16x32xf32> -> vector<16x32xf32>
    %296 = arith.addf %271, %295 : vector<16x32xf32>
    %c10 = arith.constant 10 : index
    %c0_81 = arith.constant 0 : index
    %297 = vector.load %arg2[%c10, %c0_81] : memref<40x128xf32, #tpu.memory_space<vmem>>, vector<1x32xf32>
    %298 = vector.broadcast %297 : vector<1x32xf32> to vector<16x32xf32>
    %299 = arith.addf %296, %298 : vector<16x32xf32>
    %300 = arith.addf %184, %299 : vector<16x32xf32>
    %c11 = arith.constant 11 : index
    %c0_82 = arith.constant 0 : index
    %301 = vector.load %arg2[%c11, %c0_82] : memref<40x128xf32, #tpu.memory_space<vmem>>, vector<1x32xf32>
    %c12 = arith.constant 12 : index
    %c0_83 = arith.constant 0 : index
    %302 = vector.load %arg2[%c12, %c0_83] : memref<40x128xf32, #tpu.memory_space<vmem>>, vector<1x32xf32>
    %cst_84 = arith.constant dense<0.000000e+00> : vector<16xf32>
    %303 = vector.multi_reduction <add>, %300, %cst_84 [1] : vector<16x32xf32> to vector<16xf32>
    %304 = vector.shape_cast %303 : vector<16xf32> to vector<16x1xf32>
    %cst_85 = arith.constant 3.200000e+01 : f32
    %305 = vector.broadcast %cst_85 : f32 to vector<16x1xf32>
    %306 = arith.divf %304, %305 : vector<16x1xf32>
    %307 = vector.broadcast %306 : vector<16x1xf32> to vector<16x32xf32>
    %308 = arith.subf %300, %307 : vector<16x32xf32>
    %309 = arith.mulf %308, %308 : vector<16x32xf32>
    %cst_86 = arith.constant dense<0.000000e+00> : vector<16xf32>
    %310 = vector.multi_reduction <add>, %309, %cst_86 [1] : vector<16x32xf32> to vector<16xf32>
    %311 = vector.shape_cast %310 : vector<16xf32> to vector<16x1xf32>
    %cst_87 = arith.constant 3.200000e+01 : f32
    %312 = vector.broadcast %cst_87 : f32 to vector<16x1xf32>
    %313 = arith.divf %311, %312 : vector<16x1xf32>
    %cst_88 = arith.constant 9.99999974E-6 : f32
    %314 = vector.broadcast %cst_88 : f32 to vector<16x1xf32>
    %315 = arith.addf %313, %314 : vector<16x1xf32>
    %316 = math.rsqrt %315 : vector<16x1xf32>
    %317 = vector.broadcast %316 : vector<16x1xf32> to vector<16x32xf32>
    %318 = arith.mulf %308, %317 : vector<16x32xf32>
    %319 = vector.broadcast %301 : vector<1x32xf32> to vector<16x32xf32>
    %320 = arith.mulf %318, %319 : vector<16x32xf32>
    %321 = vector.broadcast %302 : vector<1x32xf32> to vector<16x32xf32>
    %322 = arith.addf %320, %321 : vector<16x32xf32>
    %323 = arith.truncf %322 : vector<16x32xf32> to vector<16x32xbf16>
    %c256 = arith.constant 256 : index
    %c0_89 = arith.constant 0 : index
    %324 = vector.load %arg1[%c256, %c0_89] : memref<640x128xf32, #tpu.memory_space<vmem>>, vector<32x64xf32>
    %325 = arith.truncf %324 : vector<32x64xf32> to vector<32x64xbf16>
    %cst_90 = arith.constant dense<0.000000e+00> : vector<16x64xf32>
    %326 = tpu.matmul %323, %325, %cst_90 {dimension_numbers = #tpu.dot_dimension_numbers<[1], [0], [0], [1], [0, 0, 1, 1], [], []>} : vector<16x32xbf16>, vector<32x64xbf16>, vector<16x64xf32> -> vector<16x64xf32>
    %c13 = arith.constant 13 : index
    %c0_91 = arith.constant 0 : index
    %327 = vector.load %arg2[%c13, %c0_91] : memref<40x128xf32, #tpu.memory_space<vmem>>, vector<1x64xf32>
    %328 = vector.broadcast %327 : vector<1x64xf32> to vector<16x64xf32>
    %329 = arith.addf %326, %328 : vector<16x64xf32>
    %cst_92 = arith.constant 0.000000e+00 : f32
    %330 = vector.broadcast %cst_92 : f32 to vector<16x64xf32>
    %331 = arith.maximumf %329, %330 : vector<16x64xf32>
    %332 = arith.truncf %331 : vector<16x64xf32> to vector<16x64xbf16>
    %c288 = arith.constant 288 : index
    %c0_93 = arith.constant 0 : index
    %333 = vector.load %arg1[%c288, %c0_93] : memref<640x128xf32, #tpu.memory_space<vmem>>, vector<64x32xf32>
    %334 = arith.truncf %333 : vector<64x32xf32> to vector<64x32xbf16>
    %cst_94 = arith.constant dense<0.000000e+00> : vector<16x32xf32>
    %335 = tpu.matmul %332, %334, %cst_94 {dimension_numbers = #tpu.dot_dimension_numbers<[1], [0], [0], [1], [0, 0, 1, 1], [], []>} : vector<16x64xbf16>, vector<64x32xbf16>, vector<16x32xf32> -> vector<16x32xf32>
    %c14 = arith.constant 14 : index
    %c0_95 = arith.constant 0 : index
    %336 = vector.load %arg2[%c14, %c0_95] : memref<40x128xf32, #tpu.memory_space<vmem>>, vector<1x32xf32>
    %337 = vector.broadcast %336 : vector<1x32xf32> to vector<16x32xf32>
    %338 = arith.addf %335, %337 : vector<16x32xf32>
    %339 = arith.addf %322, %338 : vector<16x32xf32>
    %c15 = arith.constant 15 : index
    %c0_96 = arith.constant 0 : index
    %340 = vector.load %arg2[%c15, %c0_96] : memref<40x128xf32, #tpu.memory_space<vmem>>, vector<1x32xf32>
    %c16 = arith.constant 16 : index
    %c0_97 = arith.constant 0 : index
    %341 = vector.load %arg2[%c16, %c0_97] : memref<40x128xf32, #tpu.memory_space<vmem>>, vector<1x32xf32>
    %cst_98 = arith.constant dense<0.000000e+00> : vector<16xf32>
    %342 = vector.multi_reduction <add>, %339, %cst_98 [1] : vector<16x32xf32> to vector<16xf32>
    %343 = vector.shape_cast %342 : vector<16xf32> to vector<16x1xf32>
    %cst_99 = arith.constant 3.200000e+01 : f32
    %344 = vector.broadcast %cst_99 : f32 to vector<16x1xf32>
    %345 = arith.divf %343, %344 : vector<16x1xf32>
    %346 = vector.broadcast %345 : vector<16x1xf32> to vector<16x32xf32>
    %347 = arith.subf %339, %346 : vector<16x32xf32>
    %348 = arith.mulf %347, %347 : vector<16x32xf32>
    %cst_100 = arith.constant dense<0.000000e+00> : vector<16xf32>
    %349 = vector.multi_reduction <add>, %348, %cst_100 [1] : vector<16x32xf32> to vector<16xf32>
    %350 = vector.shape_cast %349 : vector<16xf32> to vector<16x1xf32>
    %cst_101 = arith.constant 3.200000e+01 : f32
    %351 = vector.broadcast %cst_101 : f32 to vector<16x1xf32>
    %352 = arith.divf %350, %351 : vector<16x1xf32>
    %cst_102 = arith.constant 9.99999974E-6 : f32
    %353 = vector.broadcast %cst_102 : f32 to vector<16x1xf32>
    %354 = arith.addf %352, %353 : vector<16x1xf32>
    %355 = math.rsqrt %354 : vector<16x1xf32>
    %356 = vector.broadcast %355 : vector<16x1xf32> to vector<16x32xf32>
    %357 = arith.mulf %347, %356 : vector<16x32xf32>
    %358 = vector.broadcast %340 : vector<1x32xf32> to vector<16x32xf32>
    %359 = arith.mulf %357, %358 : vector<16x32xf32>
    %360 = vector.broadcast %341 : vector<1x32xf32> to vector<16x32xf32>
    %361 = arith.addf %359, %360 : vector<16x32xf32>
    %362 = vector.shape_cast %361 : vector<16x32xf32> to vector<2x8x32xf32>
    %c17 = arith.constant 17 : index
    %c0_103 = arith.constant 0 : index
    %363 = vector.load %arg2[%c17, %c0_103] : memref<40x128xf32, #tpu.memory_space<vmem>>, vector<1x32xf32>
    %364 = vector.shape_cast %363 : vector<1x32xf32> to vector<1x1x32xf32>
    %365 = vector.broadcast %364 : vector<1x1x32xf32> to vector<2x8x32xf32>
    %366 = arith.mulf %362, %365 : vector<2x8x32xf32>
    %cst_104 = arith.constant dense<0.000000e+00> : vector<2x8xf32>
    %367 = vector.multi_reduction <add>, %366, %cst_104 [2] : vector<2x8x32xf32> to vector<2x8xf32>
    %368 = vector.shape_cast %367 : vector<2x8xf32> to vector<2x8x1xf32>
    %cst_105 = arith.constant dense<0xFF800000> : vector<2x1xf32>
    %369 = vector.multi_reduction <maximumf>, %368, %cst_105 [1] : vector<2x8x1xf32> to vector<2x1xf32>
    %370 = vector.shape_cast %369 : vector<2x1xf32> to vector<2x1x1xf32>
    %371 = vector.broadcast %370 : vector<2x1x1xf32> to vector<2x8x1xf32>
    %372 = arith.subf %368, %371 : vector<2x8x1xf32>
    %373 = math.exp %372 : vector<2x8x1xf32>
    %cst_106 = arith.constant dense<0.000000e+00> : vector<2x1xf32>
    %374 = vector.multi_reduction <add>, %373, %cst_106 [1] : vector<2x8x1xf32> to vector<2x1xf32>
    %375 = vector.shape_cast %374 : vector<2x1xf32> to vector<2x1x1xf32>
    %376 = tpu.reciprocal %375 {approx = true} : vector<2x1x1xf32> -> vector<2x1x1xf32>
    %377 = vector.broadcast %376 : vector<2x1x1xf32> to vector<2x8x1xf32>
    %378 = arith.mulf %373, %377 : vector<2x8x1xf32>
    %379 = vector.broadcast %378 : vector<2x8x1xf32> to vector<2x8x32xf32>
    %380 = arith.mulf %379, %362 : vector<2x8x32xf32>
    %cst_107 = arith.constant dense<0.000000e+00> : vector<2x32xf32>
    %381 = vector.multi_reduction <add>, %380, %cst_107 [1] : vector<2x8x32xf32> to vector<2x32xf32>
    %382 = arith.truncf %381 : vector<2x32xf32> to vector<2x32xbf16>
    %c352 = arith.constant 352 : index
    %c0_108 = arith.constant 0 : index
    %383 = vector.load %arg1[%c352, %c0_108] : memref<640x128xf32, #tpu.memory_space<vmem>>, vector<32x128xf32>
    %384 = arith.truncf %383 : vector<32x128xf32> to vector<32x128xbf16>
    %cst_109 = arith.constant dense<0.000000e+00> : vector<2x128xf32>
    %385 = tpu.matmul %382, %384, %cst_109 {dimension_numbers = #tpu.dot_dimension_numbers<[1], [0], [0], [1], [0, 0, 1, 1], [], []>} : vector<2x32xbf16>, vector<32x128xbf16>, vector<2x128xf32> -> vector<2x128xf32>
    %386 = vector.extract_strided_slice %385 {offsets = [0, 0], sizes = [2, 32], strides = [1, 1]} : vector<2x128xf32> to vector<2x32xf32>
    %c18 = arith.constant 18 : index
    %c0_110 = arith.constant 0 : index
    %387 = vector.load %arg2[%c18, %c0_110] : memref<40x128xf32, #tpu.memory_space<vmem>>, vector<1x32xf32>
    %388 = vector.broadcast %387 : vector<1x32xf32> to vector<2x32xf32>
    %389 = arith.addf %386, %388 : vector<2x32xf32>
    %c19 = arith.constant 19 : index
    %c0_111 = arith.constant 0 : index
    %390 = vector.load %arg2[%c19, %c0_111] : memref<40x128xf32, #tpu.memory_space<vmem>>, vector<1x32xf32>
    %c20 = arith.constant 20 : index
    %c0_112 = arith.constant 0 : index
    %391 = vector.load %arg2[%c20, %c0_112] : memref<40x128xf32, #tpu.memory_space<vmem>>, vector<1x32xf32>
    %cst_113 = arith.constant dense<0.000000e+00> : vector<2xf32>
    %392 = vector.multi_reduction <add>, %389, %cst_113 [1] : vector<2x32xf32> to vector<2xf32>
    %393 = vector.shape_cast %392 : vector<2xf32> to vector<2x1xf32>
    %cst_114 = arith.constant 3.200000e+01 : f32
    %394 = vector.broadcast %cst_114 : f32 to vector<2x1xf32>
    %395 = arith.divf %393, %394 : vector<2x1xf32>
    %396 = vector.broadcast %395 : vector<2x1xf32> to vector<2x32xf32>
    %397 = arith.subf %389, %396 : vector<2x32xf32>
    %398 = arith.mulf %397, %397 : vector<2x32xf32>
    %cst_115 = arith.constant dense<0.000000e+00> : vector<2xf32>
    %399 = vector.multi_reduction <add>, %398, %cst_115 [1] : vector<2x32xf32> to vector<2xf32>
    %400 = vector.shape_cast %399 : vector<2xf32> to vector<2x1xf32>
    %cst_116 = arith.constant 3.200000e+01 : f32
    %401 = vector.broadcast %cst_116 : f32 to vector<2x1xf32>
    %402 = arith.divf %400, %401 : vector<2x1xf32>
    %cst_117 = arith.constant 9.99999974E-6 : f32
    %403 = vector.broadcast %cst_117 : f32 to vector<2x1xf32>
    %404 = arith.addf %402, %403 : vector<2x1xf32>
    %405 = math.rsqrt %404 : vector<2x1xf32>
    %406 = vector.broadcast %405 : vector<2x1xf32> to vector<2x32xf32>
    %407 = arith.mulf %397, %406 : vector<2x32xf32>
    %408 = vector.broadcast %390 : vector<1x32xf32> to vector<2x32xf32>
    %409 = arith.mulf %407, %408 : vector<2x32xf32>
    %410 = vector.broadcast %391 : vector<1x32xf32> to vector<2x32xf32>
    %411 = arith.addf %409, %410 : vector<2x32xf32>
    %cst_118 = arith.constant 0.000000e+00 : f32
    %412 = vector.broadcast %cst_118 : f32 to vector<2x32xf32>
    %413 = arith.maximumf %411, %412 : vector<2x32xf32>
    %414 = arith.truncf %413 : vector<2x32xf32> to vector<2x32xbf16>
    %c512 = arith.constant 512 : index
    %c0_119 = arith.constant 0 : index
    %415 = vector.load %arg1[%c512, %c0_119] : memref<640x128xf32, #tpu.memory_space<vmem>>, vector<32x8xf32>
    %416 = arith.truncf %415 : vector<32x8xf32> to vector<32x8xbf16>
    %cst_120 = arith.constant dense<0.000000e+00> : vector<2x8xf32>
    %417 = tpu.matmul %414, %416, %cst_120 {dimension_numbers = #tpu.dot_dimension_numbers<[1], [0], [0], [1], [0, 0, 1, 1], [], []>} : vector<2x32xbf16>, vector<32x8xbf16>, vector<2x8xf32> -> vector<2x8xf32>
    %c21 = arith.constant 21 : index
    %c0_121 = arith.constant 0 : index
    %418 = vector.load %arg2[%c21, %c0_121] : memref<40x128xf32, #tpu.memory_space<vmem>>, vector<1x8xf32>
    %419 = vector.broadcast %418 : vector<1x8xf32> to vector<2x8xf32>
    %420 = arith.addf %417, %419 : vector<2x8xf32>
    %c0_122 = arith.constant 0 : index
    %c0_123 = arith.constant 0 : index
    %421 = vector.load %arg3[%c0_122, %c0_123] : memref<2x32xf32, #tpu.memory_space<vmem>>, vector<2x8xf32>
    tpu.vector_store %arg3[%c0_122, %c0_123], %420 {strides = array<i32>} : memref<2x32xf32, #tpu.memory_space<vmem>>, vector<2x8xf32>,
    %cst_124 = arith.constant dense<0xFF800000> : vector<2xf32>
    %422 = vector.multi_reduction <maximumf>, %420, %cst_124 [1] : vector<2x8xf32> to vector<2xf32>
    %423 = vector.shape_cast %422 : vector<2xf32> to vector<2x1xf32>
    %424 = vector.broadcast %423 : vector<2x1xf32> to vector<2x8xf32>
    %425 = arith.subf %420, %424 : vector<2x8xf32>
    %426 = math.exp %425 : vector<2x8xf32>
    %cst_125 = arith.constant dense<0.000000e+00> : vector<2xf32>
    %427 = vector.multi_reduction <add>, %426, %cst_125 [1] : vector<2x8xf32> to vector<2xf32>
    %428 = vector.shape_cast %427 : vector<2xf32> to vector<2x1xf32>
    %429 = tpu.reciprocal %428 {approx = true} : vector<2x1xf32> -> vector<2x1xf32>
    %430 = vector.broadcast %429 : vector<2x1xf32> to vector<2x8xf32>
    %431 = arith.mulf %426, %430 : vector<2x8xf32>
    %432 = vector.extract_strided_slice %385 {offsets = [0, 32], sizes = [2, 32], strides = [1, 1]} : vector<2x128xf32> to vector<2x32xf32>
    %c22 = arith.constant 22 : index
    %c0_126 = arith.constant 0 : index
    %433 = vector.load %arg2[%c22, %c0_126] : memref<40x128xf32, #tpu.memory_space<vmem>>, vector<1x32xf32>
    %434 = vector.broadcast %433 : vector<1x32xf32> to vector<2x32xf32>
    %435 = arith.addf %432, %434 : vector<2x32xf32>
    %436 = arith.truncf %431 : vector<2x8xf32> to vector<2x8xbf16>
    %c416 = arith.constant 416 : index
    %c0_127 = arith.constant 0 : index
    %437 = vector.load %arg1[%c416, %c0_127] : memref<640x128xf32, #tpu.memory_space<vmem>>, vector<8x32xf32>
    %438 = arith.truncf %437 : vector<8x32xf32> to vector<8x32xbf16>
    %cst_128 = arith.constant dense<0.000000e+00> : vector<2x32xf32>
    %439 = tpu.matmul %436, %438, %cst_128 {dimension_numbers = #tpu.dot_dimension_numbers<[1], [0], [0], [1], [0, 0, 1, 1], [], []>} : vector<2x8xbf16>, vector<8x32xbf16>, vector<2x32xf32> -> vector<2x32xf32>
    %440 = arith.addf %435, %439 : vector<2x32xf32>
    %c23 = arith.constant 23 : index
    %c0_129 = arith.constant 0 : index
    %441 = vector.load %arg2[%c23, %c0_129] : memref<40x128xf32, #tpu.memory_space<vmem>>, vector<1x32xf32>
    %c24 = arith.constant 24 : index
    %c0_130 = arith.constant 0 : index
    %442 = vector.load %arg2[%c24, %c0_130] : memref<40x128xf32, #tpu.memory_space<vmem>>, vector<1x32xf32>
    %cst_131 = arith.constant dense<0.000000e+00> : vector<2xf32>
    %443 = vector.multi_reduction <add>, %440, %cst_131 [1] : vector<2x32xf32> to vector<2xf32>
    %444 = vector.shape_cast %443 : vector<2xf32> to vector<2x1xf32>
    %cst_132 = arith.constant 3.200000e+01 : f32
    %445 = vector.broadcast %cst_132 : f32 to vector<2x1xf32>
    %446 = arith.divf %444, %445 : vector<2x1xf32>
    %447 = vector.broadcast %446 : vector<2x1xf32> to vector<2x32xf32>
    %448 = arith.subf %440, %447 : vector<2x32xf32>
    %449 = arith.mulf %448, %448 : vector<2x32xf32>
    %cst_133 = arith.constant dense<0.000000e+00> : vector<2xf32>
    %450 = vector.multi_reduction <add>, %449, %cst_133 [1] : vector<2x32xf32> to vector<2xf32>
    %451 = vector.shape_cast %450 : vector<2xf32> to vector<2x1xf32>
    %cst_134 = arith.constant 3.200000e+01 : f32
    %452 = vector.broadcast %cst_134 : f32 to vector<2x1xf32>
    %453 = arith.divf %451, %452 : vector<2x1xf32>
    %cst_135 = arith.constant 9.99999974E-6 : f32
    %454 = vector.broadcast %cst_135 : f32 to vector<2x1xf32>
    %455 = arith.addf %453, %454 : vector<2x1xf32>
    %456 = math.rsqrt %455 : vector<2x1xf32>
    %457 = vector.broadcast %456 : vector<2x1xf32> to vector<2x32xf32>
    %458 = arith.mulf %448, %457 : vector<2x32xf32>
    %459 = vector.broadcast %441 : vector<1x32xf32> to vector<2x32xf32>
    %460 = arith.mulf %458, %459 : vector<2x32xf32>
    %461 = vector.broadcast %442 : vector<1x32xf32> to vector<2x32xf32>
    %462 = arith.addf %460, %461 : vector<2x32xf32>
    %cst_136 = arith.constant 0.000000e+00 : f32
    %463 = vector.broadcast %cst_136 : f32 to vector<2x32xf32>
    %464 = arith.maximumf %462, %463 : vector<2x32xf32>
    %465 = arith.truncf %464 : vector<2x32xf32> to vector<2x32xbf16>
    %c544 = arith.constant 544 : index
    %c0_137 = arith.constant 0 : index
    %466 = vector.load %arg1[%c544, %c0_137] : memref<640x128xf32, #tpu.memory_space<vmem>>, vector<32x8xf32>
    %467 = arith.truncf %466 : vector<32x8xf32> to vector<32x8xbf16>
    %cst_138 = arith.constant dense<0.000000e+00> : vector<2x8xf32>
    %468 = tpu.matmul %465, %467, %cst_138 {dimension_numbers = #tpu.dot_dimension_numbers<[1], [0], [0], [1], [0, 0, 1, 1], [], []>} : vector<2x32xbf16>, vector<32x8xbf16>, vector<2x8xf32> -> vector<2x8xf32>
    %c25 = arith.constant 25 : index
    %c0_139 = arith.constant 0 : index
    %469 = vector.load %arg2[%c25, %c0_139] : memref<40x128xf32, #tpu.memory_space<vmem>>, vector<1x8xf32>
    %470 = vector.broadcast %469 : vector<1x8xf32> to vector<2x8xf32>
    %471 = arith.addf %468, %470 : vector<2x8xf32>
    %c0_140 = arith.constant 0 : index
    %c8_141 = arith.constant 8 : index
    %472 = vector.load %arg3[%c0_140, %c8_141] : memref<2x32xf32, #tpu.memory_space<vmem>>, vector<2x8xf32>
    tpu.vector_store %arg3[%c0_140, %c8_141], %471 {strides = array<i32>} : memref<2x32xf32, #tpu.memory_space<vmem>>, vector<2x8xf32>,
    %cst_142 = arith.constant dense<0xFF800000> : vector<2xf32>
    %473 = vector.multi_reduction <maximumf>, %471, %cst_142 [1] : vector<2x8xf32> to vector<2xf32>
    %474 = vector.shape_cast %473 : vector<2xf32> to vector<2x1xf32>
    %475 = vector.broadcast %474 : vector<2x1xf32> to vector<2x8xf32>
    %476 = arith.subf %471, %475 : vector<2x8xf32>
    %477 = math.exp %476 : vector<2x8xf32>
    %cst_143 = arith.constant dense<0.000000e+00> : vector<2xf32>
    %478 = vector.multi_reduction <add>, %477, %cst_143 [1] : vector<2x8xf32> to vector<2xf32>
    %479 = vector.shape_cast %478 : vector<2xf32> to vector<2x1xf32>
    %480 = tpu.reciprocal %479 {approx = true} : vector<2x1xf32> -> vector<2x1xf32>
    %481 = vector.broadcast %480 : vector<2x1xf32> to vector<2x8xf32>
    %482 = arith.mulf %477, %481 : vector<2x8xf32>
    %483 = vector.extract_strided_slice %385 {offsets = [0, 64], sizes = [2, 32], strides = [1, 1]} : vector<2x128xf32> to vector<2x32xf32>
    %c26 = arith.constant 26 : index
    %c0_144 = arith.constant 0 : index
    %484 = vector.load %arg2[%c26, %c0_144] : memref<40x128xf32, #tpu.memory_space<vmem>>, vector<1x32xf32>
    %485 = vector.broadcast %484 : vector<1x32xf32> to vector<2x32xf32>
    %486 = arith.addf %483, %485 : vector<2x32xf32>
    %487 = arith.truncf %482 : vector<2x8xf32> to vector<2x8xbf16>
    %c448 = arith.constant 448 : index
    %c0_145 = arith.constant 0 : index
    %488 = vector.load %arg1[%c448, %c0_145] : memref<640x128xf32, #tpu.memory_space<vmem>>, vector<8x32xf32>
    %489 = arith.truncf %488 : vector<8x32xf32> to vector<8x32xbf16>
    %cst_146 = arith.constant dense<0.000000e+00> : vector<2x32xf32>
    %490 = tpu.matmul %487, %489, %cst_146 {dimension_numbers = #tpu.dot_dimension_numbers<[1], [0], [0], [1], [0, 0, 1, 1], [], []>} : vector<2x8xbf16>, vector<8x32xbf16>, vector<2x32xf32> -> vector<2x32xf32>
    %491 = arith.addf %486, %490 : vector<2x32xf32>
    %c27 = arith.constant 27 : index
    %c0_147 = arith.constant 0 : index
    %492 = vector.load %arg2[%c27, %c0_147] : memref<40x128xf32, #tpu.memory_space<vmem>>, vector<1x32xf32>
    %c28 = arith.constant 28 : index
    %c0_148 = arith.constant 0 : index
    %493 = vector.load %arg2[%c28, %c0_148] : memref<40x128xf32, #tpu.memory_space<vmem>>, vector<1x32xf32>
    %cst_149 = arith.constant dense<0.000000e+00> : vector<2xf32>
    %494 = vector.multi_reduction <add>, %491, %cst_149 [1] : vector<2x32xf32> to vector<2xf32>
    %495 = vector.shape_cast %494 : vector<2xf32> to vector<2x1xf32>
    %cst_150 = arith.constant 3.200000e+01 : f32
    %496 = vector.broadcast %cst_150 : f32 to vector<2x1xf32>
    %497 = arith.divf %495, %496 : vector<2x1xf32>
    %498 = vector.broadcast %497 : vector<2x1xf32> to vector<2x32xf32>
    %499 = arith.subf %491, %498 : vector<2x32xf32>
    %500 = arith.mulf %499, %499 : vector<2x32xf32>
    %cst_151 = arith.constant dense<0.000000e+00> : vector<2xf32>
    %501 = vector.multi_reduction <add>, %500, %cst_151 [1] : vector<2x32xf32> to vector<2xf32>
    %502 = vector.shape_cast %501 : vector<2xf32> to vector<2x1xf32>
    %cst_152 = arith.constant 3.200000e+01 : f32
    %503 = vector.broadcast %cst_152 : f32 to vector<2x1xf32>
    %504 = arith.divf %502, %503 : vector<2x1xf32>
    %cst_153 = arith.constant 9.99999974E-6 : f32
    %505 = vector.broadcast %cst_153 : f32 to vector<2x1xf32>
    %506 = arith.addf %504, %505 : vector<2x1xf32>
    %507 = math.rsqrt %506 : vector<2x1xf32>
    %508 = vector.broadcast %507 : vector<2x1xf32> to vector<2x32xf32>
    %509 = arith.mulf %499, %508 : vector<2x32xf32>
    %510 = vector.broadcast %492 : vector<1x32xf32> to vector<2x32xf32>
    %511 = arith.mulf %509, %510 : vector<2x32xf32>
    %512 = vector.broadcast %493 : vector<1x32xf32> to vector<2x32xf32>
    %513 = arith.addf %511, %512 : vector<2x32xf32>
    %cst_154 = arith.constant 0.000000e+00 : f32
    %514 = vector.broadcast %cst_154 : f32 to vector<2x32xf32>
    %515 = arith.maximumf %513, %514 : vector<2x32xf32>
    %516 = arith.truncf %515 : vector<2x32xf32> to vector<2x32xbf16>
    %c576 = arith.constant 576 : index
    %c0_155 = arith.constant 0 : index
    %517 = vector.load %arg1[%c576, %c0_155] : memref<640x128xf32, #tpu.memory_space<vmem>>, vector<32x8xf32>
    %518 = arith.truncf %517 : vector<32x8xf32> to vector<32x8xbf16>
    %cst_156 = arith.constant dense<0.000000e+00> : vector<2x8xf32>
    %519 = tpu.matmul %516, %518, %cst_156 {dimension_numbers = #tpu.dot_dimension_numbers<[1], [0], [0], [1], [0, 0, 1, 1], [], []>} : vector<2x32xbf16>, vector<32x8xbf16>, vector<2x8xf32> -> vector<2x8xf32>
    %c29 = arith.constant 29 : index
    %c0_157 = arith.constant 0 : index
    %520 = vector.load %arg2[%c29, %c0_157] : memref<40x128xf32, #tpu.memory_space<vmem>>, vector<1x8xf32>
    %521 = vector.broadcast %520 : vector<1x8xf32> to vector<2x8xf32>
    %522 = arith.addf %519, %521 : vector<2x8xf32>
    %c0_158 = arith.constant 0 : index
    %c16_159 = arith.constant 16 : index
    %523 = vector.load %arg3[%c0_158, %c16_159] : memref<2x32xf32, #tpu.memory_space<vmem>>, vector<2x8xf32>
    tpu.vector_store %arg3[%c0_158, %c16_159], %522 {strides = array<i32>} : memref<2x32xf32, #tpu.memory_space<vmem>>, vector<2x8xf32>,
    %cst_160 = arith.constant dense<0xFF800000> : vector<2xf32>
    %524 = vector.multi_reduction <maximumf>, %522, %cst_160 [1] : vector<2x8xf32> to vector<2xf32>
    %525 = vector.shape_cast %524 : vector<2xf32> to vector<2x1xf32>
    %526 = vector.broadcast %525 : vector<2x1xf32> to vector<2x8xf32>
    %527 = arith.subf %522, %526 : vector<2x8xf32>
    %528 = math.exp %527 : vector<2x8xf32>
    %cst_161 = arith.constant dense<0.000000e+00> : vector<2xf32>
    %529 = vector.multi_reduction <add>, %528, %cst_161 [1] : vector<2x8xf32> to vector<2xf32>
    %530 = vector.shape_cast %529 : vector<2xf32> to vector<2x1xf32>
    %531 = tpu.reciprocal %530 {approx = true} : vector<2x1xf32> -> vector<2x1xf32>
    %532 = vector.broadcast %531 : vector<2x1xf32> to vector<2x8xf32>
    %533 = arith.mulf %528, %532 : vector<2x8xf32>
    %534 = vector.extract_strided_slice %385 {offsets = [0, 96], sizes = [2, 32], strides = [1, 1]} : vector<2x128xf32> to vector<2x32xf32>
    %c30 = arith.constant 30 : index
    %c0_162 = arith.constant 0 : index
    %535 = vector.load %arg2[%c30, %c0_162] : memref<40x128xf32, #tpu.memory_space<vmem>>, vector<1x32xf32>
    %536 = vector.broadcast %535 : vector<1x32xf32> to vector<2x32xf32>
    %537 = arith.addf %534, %536 : vector<2x32xf32>
    %538 = arith.truncf %533 : vector<2x8xf32> to vector<2x8xbf16>
    %c480 = arith.constant 480 : index
    %c0_163 = arith.constant 0 : index
    %539 = vector.load %arg1[%c480, %c0_163] : memref<640x128xf32, #tpu.memory_space<vmem>>, vector<8x32xf32>
    %540 = arith.truncf %539 : vector<8x32xf32> to vector<8x32xbf16>
    %cst_164 = arith.constant dense<0.000000e+00> : vector<2x32xf32>
    %541 = tpu.matmul %538, %540, %cst_164 {dimension_numbers = #tpu.dot_dimension_numbers<[1], [0], [0], [1], [0, 0, 1, 1], [], []>} : vector<2x8xbf16>, vector<8x32xbf16>, vector<2x32xf32> -> vector<2x32xf32>
    %542 = arith.addf %537, %541 : vector<2x32xf32>
    %c31 = arith.constant 31 : index
    %c0_165 = arith.constant 0 : index
    %543 = vector.load %arg2[%c31, %c0_165] : memref<40x128xf32, #tpu.memory_space<vmem>>, vector<1x32xf32>
    %c32_166 = arith.constant 32 : index
    %c0_167 = arith.constant 0 : index
    %544 = vector.load %arg2[%c32_166, %c0_167] : memref<40x128xf32, #tpu.memory_space<vmem>>, vector<1x32xf32>
    %cst_168 = arith.constant dense<0.000000e+00> : vector<2xf32>
    %545 = vector.multi_reduction <add>, %542, %cst_168 [1] : vector<2x32xf32> to vector<2xf32>
    %546 = vector.shape_cast %545 : vector<2xf32> to vector<2x1xf32>
    %cst_169 = arith.constant 3.200000e+01 : f32
    %547 = vector.broadcast %cst_169 : f32 to vector<2x1xf32>
    %548 = arith.divf %546, %547 : vector<2x1xf32>
    %549 = vector.broadcast %548 : vector<2x1xf32> to vector<2x32xf32>
    %550 = arith.subf %542, %549 : vector<2x32xf32>
    %551 = arith.mulf %550, %550 : vector<2x32xf32>
    %cst_170 = arith.constant dense<0.000000e+00> : vector<2xf32>
    %552 = vector.multi_reduction <add>, %551, %cst_170 [1] : vector<2x32xf32> to vector<2xf32>
    %553 = vector.shape_cast %552 : vector<2xf32> to vector<2x1xf32>
    %cst_171 = arith.constant 3.200000e+01 : f32
    %554 = vector.broadcast %cst_171 : f32 to vector<2x1xf32>
    %555 = arith.divf %553, %554 : vector<2x1xf32>
    %cst_172 = arith.constant 9.99999974E-6 : f32
    %556 = vector.broadcast %cst_172 : f32 to vector<2x1xf32>
    %557 = arith.addf %555, %556 : vector<2x1xf32>
    %558 = math.rsqrt %557 : vector<2x1xf32>
    %559 = vector.broadcast %558 : vector<2x1xf32> to vector<2x32xf32>
    %560 = arith.mulf %550, %559 : vector<2x32xf32>
    %561 = vector.broadcast %543 : vector<1x32xf32> to vector<2x32xf32>
    %562 = arith.mulf %560, %561 : vector<2x32xf32>
    %563 = vector.broadcast %544 : vector<1x32xf32> to vector<2x32xf32>
    %564 = arith.addf %562, %563 : vector<2x32xf32>
    %cst_173 = arith.constant 0.000000e+00 : f32
    %565 = vector.broadcast %cst_173 : f32 to vector<2x32xf32>
    %566 = arith.maximumf %564, %565 : vector<2x32xf32>
    %567 = arith.truncf %566 : vector<2x32xf32> to vector<2x32xbf16>
    %c608 = arith.constant 608 : index
    %c0_174 = arith.constant 0 : index
    %568 = vector.load %arg1[%c608, %c0_174] : memref<640x128xf32, #tpu.memory_space<vmem>>, vector<32x8xf32>
    %569 = arith.truncf %568 : vector<32x8xf32> to vector<32x8xbf16>
    %cst_175 = arith.constant dense<0.000000e+00> : vector<2x8xf32>
    %570 = tpu.matmul %567, %569, %cst_175 {dimension_numbers = #tpu.dot_dimension_numbers<[1], [0], [0], [1], [0, 0, 1, 1], [], []>} : vector<2x32xbf16>, vector<32x8xbf16>, vector<2x8xf32> -> vector<2x8xf32>
    %c33 = arith.constant 33 : index
    %c0_176 = arith.constant 0 : index
    %571 = vector.load %arg2[%c33, %c0_176] : memref<40x128xf32, #tpu.memory_space<vmem>>, vector<1x8xf32>
    %572 = vector.broadcast %571 : vector<1x8xf32> to vector<2x8xf32>
    %573 = arith.addf %570, %572 : vector<2x8xf32>
    %c0_177 = arith.constant 0 : index
    %c24_178 = arith.constant 24 : index
    %574 = vector.load %arg3[%c0_177, %c24_178] : memref<2x32xf32, #tpu.memory_space<vmem>>, vector<2x8xf32>
    tpu.vector_store %arg3[%c0_177, %c24_178], %573 {strides = array<i32>} : memref<2x32xf32, #tpu.memory_space<vmem>>, vector<2x8xf32>,
    return
  }
}

</mosaic_0001>

<llo_original>
// kernel: hierarchical_transformer_forward.1
$region0: #{hierarchical_transformer_forward.1}
  #allocation0 [shape = 'u32[]', space=smem, size = 0x4, offset = 0x4, fixed_abs, tag = 'smem constant byte address 0x4 - core index']
  #allocation1 [shape = 'u32[72,128]{1,0:T(1,128)}', space=vmem, size = 0x9000, scoped, tag = 'internal scratch']
  %s0 = inlined_call_operand.hbm [shape: f32[16,32], index: 0, kind: input, shape index: {}]
  %s1 = inlined_call_operand.hbm [shape: f32[640,128], index: 1, kind: input, shape index: {}]
  %s2 = inlined_call_operand.hbm [shape: f32[40,128], index: 2, kind: input, shape index: {}]
  %s3 = inlined_call_operand.vmem [shape: f32[2,32], index: 3, kind: output, shape index: {}]
  %s4 = sld [smem:[#allocation0]]
  $region34: #{hierarchical_transformer_forward.1} parent=0
    _
  %s6 = ssub.s32 1, %s4
  %s7 = scalar_select 0, %s6, %s4
  $region1: #{hierarchical_transformer_forward.1} parent=0
    #allocation2 [shape = 'u8[8192]{0}', space=vmem, size = 0x2000, scoped, tag = 'input window, operand 0, single buffered']
    #allocation3 [shape = 's32[1]{0}', space=sflag, size = 0x4, scoped, tag = 'scoped memory for hierarchical_transformer_forward.1']
    #allocation4 [shape = 'u8[327680]{0}', space=vmem, size = 0x50000, scoped, tag = 'input window, operand 1, single buffered']
    #allocation5 [shape = 's32[1]{0}', space=sflag, size = 0x4, scoped, tag = 'scoped memory for hierarchical_transformer_forward.1']
    #allocation6 [shape = 'u8[20480]{0}', space=vmem, size = 0x5000, scoped, tag = 'input window, operand 2, single buffered']
    %8 = vsyncpa [#allocation3], 0
    %9 = vsyncpa [#allocation5], 0
    // Predicated region
    $region2: #{hierarchical_transformer_forward.1} parent=1 // pred_check
      _
    $region3: #{hierarchical_transformer_forward.1} parent=1 // pred_check_branch
      %11 = sbr.rel (0) target = $region5
    $region4: #{hierarchical_transformer_forward.1} parent=1 // pred_region
      %13 = vsyncadd [#allocation3], 0
      %s14 = sshll.u32 %s0, 4
      %s15 = int_to_ptr.hbm [resolvable:$true] %s14
      %s16 = sshll.u32 [#allocation2], 4
      %s17 = int_to_ptr.vmem [resolvable:$true] %s16
      %22 = dma.hbm_to_vmem [thread:$0]  %s15, 256, %s17, [#allocation3], 128, 128, 8
    $region5: #{hierarchical_transformer_forward.1} parent=1 // pred_fallthru
      _
    // Predicated region
    $region6: #{hierarchical_transformer_forward.1} parent=1 // pred_check
      _
    $region7: #{hierarchical_transformer_forward.1} parent=1 // pred_check_branch
      %24 = sbr.rel (0) target = $region9
    $region8: #{hierarchical_transformer_forward.1} parent=1 // pred_region
      %26 = vsyncadd [#allocation5], 0
      %s27 = sshll.u32 %s1, 4
      %s28 = int_to_ptr.hbm [resolvable:$true] %s27
      %s29 = sshll.u32 [#allocation4], 4
      %s30 = int_to_ptr.vmem [resolvable:$true] %s29
      %35 = dma.hbm_to_vmem [thread:$0]  %s28, 10240, %s30, [#allocation5], 128, 128, 8
    $region9: #{hierarchical_transformer_forward.1} parent=1 // pred_fallthru
      _
    // Predicated region
    $region10: #{hierarchical_transformer_forward.1} parent=1 // pred_check
      _
    $region11: #{hierarchical_transformer_forward.1} parent=1 // pred_check_branch
      %37 = sbr.rel (0) target = $region13
    $region12: #{hierarchical_transformer_forward.1} parent=1 // pred_region
      %39 = vsyncadd [#allocation5], 0
      %s40 = sshll.u32 %s2, 4
      %s41 = int_to_ptr.hbm [resolvable:$true] %s40
      %s42 = sshll.u32 [#allocation6], 4
      %s43 = int_to_ptr.vmem [resolvable:$true] %s42
      %48 = dma.hbm_to_vmem [thread:$0]  %s41, 640, %s43, [#allocation5], 128, 128, 8
    $region13: #{hierarchical_transformer_forward.1} parent=1 // pred_fallthru
      _
    // Predicated region
    $region14: #{hierarchical_transformer_forward.1} parent=1 // pred_check
      _
    $region15: #{hierarchical_transformer_forward.1} parent=1 // pred_check_branch
      %50 = sbr.rel (0) target = $region17
    $region16: #{hierarchical_transformer_forward.1} parent=1 // pred_region
      %52 = dma.done [#allocation3], 256
    $region17: #{hierarchical_transformer_forward.1} parent=1 // pred_fallthru
      _
    // Predicated region
    $region18: #{hierarchical_transformer_forward.1} parent=1 // pred_check
      _
    $region19: #{hierarchical_transformer_forward.1} parent=1 // pred_check_branch
      %54 = sbr.rel (0) target = $region21
    $region20: #{hierarchical_transformer_forward.1} parent=1 // pred_region
      %56 = dma.done [#allocation5], 10240
    $region21: #{hierarchical_transformer_forward.1} parent=1 // pred_fallthru
      _
    // Predicated region
    $region22: #{hierarchical_transformer_forward.1} parent=1 // pred_check
      _
    $region23: #{hierarchical_transformer_forward.1} parent=1 // pred_check_branch
      %58 = sbr.rel (0) target = $region25
    $region24: #{hierarchical_transformer_forward.1} parent=1 // pred_region
      %60 = dma.done [#allocation5], 640
    $region25: #{hierarchical_transformer_forward.1} parent=1 // pred_fallthru
      _
    %v62 = vld [vmem:[#allocation2] sm:$0xff]
    %v63 = vld [vmem:[#allocation2 + $0x8] sm:$0xff]
    %v64 = vpack.c.bf16 %v63, %v62
    %v65 = vld [vmem:[#allocation4] sm:$0xff]
    %v66 = vld [vmem:[#allocation4 + $0x8] sm:$0xff]
    %v67 = vld [vmem:[#allocation4 + $0x10] sm:$0xff]
    %v68 = vld [vmem:[#allocation4 + $0x18] sm:$0xff]
    %v69 = vpack.c.bf16 %v66, %v65
    %v70 = vpack.c.bf16 %v68, %v67
    %v71 = vld [vmem:[#allocation6] sm:$0x1]
    %v72 = vperm.slane %v71, 0
    %vm73 = vcmask 261120
    %v75 = vsel %vm73, %v64, 0
    %77 = vmatpush.bf16.msra.mxu0 0
    %78 = vmatpush.bf16.msra.mxu0 0
    %79 = vmatpush.bf16.msra.mxu0 0
    %80 = vmatpush.bf16.msra.mxu0 0
    %81 = vmatpush.bf16.msra.mxu0 0
    %82 = vmatpush.bf16.msra.mxu0 0
    %83 = vmatpush.bf16.msra.mxu0 %v70
    %84 = vmatpush.bf16.msra.mxu0 %v69
    %85 = vmatmul.bf16.gmra.mxu0 %v75
    %v86 = vpop.f32.mrf.mxu0
    %v87 = vadd.f32 %v72, %v86
    %v88 = vpop.f32.mrf.mxu0
    %v89 = vadd.f32 %v72, %v88
    %90 = vdwg.mxu0
    %v91 = vpack.c.bf16 %v89, %v87
    %v92 = vld [vmem:[#allocation4 + $0x20] sm:$0xff]
    %v93 = vld [vmem:[#allocation4 + $0x28] sm:$0xff]
    %v94 = vld [vmem:[#allocation4 + $0x30] sm:$0xff]
    %v95 = vld [vmem:[#allocation4 + $0x38] sm:$0xff]
    %v96 = vpack.c.bf16 %v93, %v92
    %v97 = vpack.c.bf16 %v95, %v94
    %v98 = vld [vmem:[#allocation6 + $0x1] sm:$0x1]
    %v99 = vperm.slane %v98, 0
    %v101 = vsel %vm73, %v91, 0
    %103 = vmatpush.bf16.msra.mxu0 0
    %104 = vmatpush.bf16.msra.mxu0 0
    %105 = vmatpush.bf16.msra.mxu0 0
    %106 = vmatpush.bf16.msra.mxu0 0
    %107 = vmatpush.bf16.msra.mxu0 0
    %108 = vmatpush.bf16.msra.mxu0 0
    %109 = vmatpush.bf16.msra.mxu0 %v97
    %110 = vmatpush.bf16.msra.mxu0 %v96
    %111 = vmatmul.bf16.gmra.mxu0 %v101
    %v112 = vpop.f32.mrf.mxu0
    %v113 = vadd.f32 %v99, %v112
    %v114 = vpop.f32.mrf.mxu0
    %v115 = vadd.f32 %v99, %v114
    %116 = vdwg.mxu0
    %v117 = vpack.c.bf16 %v113, %v113
    %v118 = vpack.c.bf16 %v115, %v115
    %v120 = vunpack.c.l.b16 %v117
    %v121 = vpack.c.b16 %v120, %v120
    %122 = vrot.lane.b32.xlu0 %v121, 96
    %v123 = vpop.permute.xlu0 %122
    %vm124 = vcmask 64512
    %v126 = vsel %vm124, %v117, 0
    %v129 = vsel %vm124, %v123, 0
    %131 = vmatpush.bf16.xpose.msra.mxu0 0
    %132 = vmatpush.bf16.xpose.msra.mxu0 0
    %133 = vmatpush.bf16.xpose.msra.mxu0 0
    %134 = vmatpush.bf16.xpose.msra.mxu0 0
    %135 = vmatpush.bf16.xpose.msra.mxu0 0
    %136 = vmatpush.bf16.xpose.msra.mxu0 0
    %137 = vmatpush.bf16.xpose.msra.mxu0 0
    %138 = vmatpush.bf16.xpose.msra.mxu0 %v129
    %139 = vmatmul.bf16.gmra.mxu0 %v126
    %v140 = vpop.f32.mrf.mxu0
    %v141 = vadd.f32 0.0, %v140
    %v142 = vpop.f32.mrf.mxu0
    %143 = vdwg.mxu0
    %v145 = vunpack.c.l.b16 %v118
    %v146 = vpack.c.b16 %v145, %v145
    %147 = vrot.lane.b32.xlu0 %v146, 96
    %v148 = vpop.permute.xlu0 %147
    %v150 = vsel %vm124, %v118, 0
    %v153 = vsel %vm124, %v148, 0
    %155 = vmatpush.bf16.xpose.msra.mxu0 0
    %156 = vmatpush.bf16.xpose.msra.mxu0 0
    %157 = vmatpush.bf16.xpose.msra.mxu0 0
    %158 = vmatpush.bf16.xpose.msra.mxu0 0
    %159 = vmatpush.bf16.xpose.msra.mxu0 0
    %160 = vmatpush.bf16.xpose.msra.mxu0 0
    %161 = vmatpush.bf16.xpose.msra.mxu0 0
    %162 = vmatpush.bf16.xpose.msra.mxu0 %v153
    %163 = vmatmul.bf16.gmra.mxu0 %v150
    %v164 = vpop.f32.mrf.mxu0
    %v165 = vadd.f32 0.0, %v164
    %v166 = vpop.f32.mrf.mxu0
    %167 = vdwg.mxu0
    %v168 = vsel %vm124, %v141, -inf
    %169 = vmax.xlane.f32.xlu0 %v168
    %v170 = vpop.xlane.xlu0 %169
    %v171 = vsel %vm124, %v165, -inf
    %172 = vmax.xlane.f32.xlu0 %v171
    %v173 = vpop.xlane.xlu0 %172
    %v174 = vsub.f32 %v141, %v170
    %v175 = vsub.f32 %v165, %v173
    %v176 = vmul.f32 %v174, 1.442695
    %v177 = vpow.pop %v176
    %v178 = vmul.f32 %v175, 1.442695
    %v179 = vpow.pop %v178
    %v180 = vsel %vm124, %v177, 0.0
    %181 = vadd.xlane.f32.xlu0 %v180
    %v182 = vpop.xlane.xlu0 %181
    %v183 = vsel %vm124, %v179, 0.0
    %184 = vadd.xlane.f32.xlu0 %v183
    %v185 = vpop.xlane.xlu0 %184
    %v186 = vrcp.pop %v182
    %v187 = vrcp.pop %v185
    %v188 = vmul.f32 %v177, %v186
    %v189 = vmul.f32 %v179, %v187
    %v190 = vpack.c.bf16 %v188, %v188
    %v191 = vpack.c.bf16 %v189, %v189
    %192 = vrot.lane.b32.xlu0 %v121, 64
    %v193 = vpop.permute.xlu0 %192
    %v195 = vsel %vm124, %v190, 0
    %vm197 = vcmask 1043456
    %v199 = vsel %vm197, %v193, 0
    %201 = vmatpush.bf16.msra.mxu0 0
    %202 = vmatpush.bf16.msra.mxu0 0
    %203 = vmatpush.bf16.msra.mxu0 0
    %204 = vmatpush.bf16.msra.mxu0 0
    %205 = vmatpush.bf16.msra.mxu0 0
    %206 = vmatpush.bf16.msra.mxu0 0
    %207 = vmatpush.bf16.msra.mxu0 0
    %208 = vmatpush.bf16.msra.mxu0 %v199
    %209 = vmatmul.bf16.gmra.mxu0 %v195
    %v210 = vpop.f32.mrf.mxu0
    %v211 = vadd.f32 0.0, %v210
    %v212 = vpop.f32.mrf.mxu0
    %213 = vdwg.mxu0
    %214 = vrot.lane.b32.xlu0 %v146, 64
    %v215 = vpop.permute.xlu0 %214
    %v217 = vsel %vm124, %v191, 0
    %v220 = vsel %vm197, %v215, 0
    %222 = vmatpush.bf16.msra.mxu0 0
    %223 = vmatpush.bf16.msra.mxu0 0
    %224 = vmatpush.bf16.msra.mxu0 0
    %225 = vmatpush.bf16.msra.mxu0 0
    %226 = vmatpush.bf16.msra.mxu0 0
    %227 = vmatpush.bf16.msra.mxu0 0
    %228 = vmatpush.bf16.msra.mxu0 0
    %229 = vmatpush.bf16.msra.mxu0 %v220
    %230 = vmatmul.bf16.gmra.mxu0 %v217
    %v231 = vpop.f32.mrf.mxu0
    %v232 = vadd.f32 0.0, %v231
    %v233 = vpop.f32.mrf.mxu0
    %234 = vdwg.mxu0
    %v235 = vld [vmem:[#allocation4 + $0x40] sm:$0xff]
    %v236 = vpack.c.bf16 %v235, %v235
    %v237 = vpack.c.bf16 %v232, %v211
    %238 = vrot.lane.b32.xlu0 %v121, 120
    %v239 = vpop.permute.xlu0 %238
    %240 = vrot.lane.b32.xlu0 %v121, 88
    %v241 = vpop.permute.xlu0 %240
    %v243 = vsel %vm124, %v239, 0
    %v246 = vsel %vm124, %v241, 0
    %248 = vmatpush.bf16.xpose.msra.mxu0 0
    %249 = vmatpush.bf16.xpose.msra.mxu0 0
    %250 = vmatpush.bf16.xpose.msra.mxu0 0
    %251 = vmatpush.bf16.xpose.msra.mxu0 0
    %252 = vmatpush.bf16.xpose.msra.mxu0 0
    %253 = vmatpush.bf16.xpose.msra.mxu0 0
    %254 = vmatpush.bf16.xpose.msra.mxu0 0
    %255 = vmatpush.bf16.xpose.msra.mxu0 %v246
    %256 = vmatmul.bf16.gmra.mxu0 %v243
    %v257 = vpop.f32.mrf.mxu0
    %v258 = vadd.f32 0.0, %v257
    %v259 = vpop.f32.mrf.mxu0
    %260 = vdwg.mxu0
    %261 = vrot.lane.b32.xlu0 %v146, 120
    %v262 = vpop.permute.xlu0 %261
    %263 = vrot.lane.b32.xlu0 %v146, 88
    %v264 = vpop.permute.xlu0 %263
    %v266 = vsel %vm124, %v262, 0
    %v269 = vsel %vm124, %v264, 0
    %271 = vmatpush.bf16.xpose.msra.mxu0 0
    %272 = vmatpush.bf16.xpose.msra.mxu0 0
    %273 = vmatpush.bf16.xpose.msra.mxu0 0
    %274 = vmatpush.bf16.xpose.msra.mxu0 0
    %275 = vmatpush.bf16.xpose.msra.mxu0 0
    %276 = vmatpush.bf16.xpose.msra.mxu0 0
    %277 = vmatpush.bf16.xpose.msra.mxu0 0
    %278 = vmatpush.bf16.xpose.msra.mxu0 %v269
    %279 = vmatmul.bf16.gmra.mxu0 %v266
    %v280 = vpop.f32.mrf.mxu0
    %v281 = vadd.f32 0.0, %v280
    %v282 = vpop.f32.mrf.mxu0
    %283 = vdwg.mxu0
    %v284 = vsel %vm124, %v258, -inf
    %285 = vmax.xlane.f32.xlu0 %v284
    %v286 = vpop.xlane.xlu0 %285
    %v287 = vsel %vm124, %v281, -inf
    %288 = vmax.xlane.f32.xlu0 %v287
    %v289 = vpop.xlane.xlu0 %288
    %v290 = vsub.f32 %v258, %v286
    %v291 = vsub.f32 %v281, %v289
    %v292 = vmul.f32 %v290, 1.442695
    %v293 = vpow.pop %v292
    %v294 = vmul.f32 %v291, 1.442695
    %v295 = vpow.pop %v294
    %v296 = vsel %vm124, %v293, 0.0
    %297 = vadd.xlane.f32.xlu0 %v296
    %v298 = vpop.xlane.xlu0 %297
    %v299 = vsel %vm124, %v295, 0.0
    %300 = vadd.xlane.f32.xlu0 %v299
    %v301 = vpop.xlane.xlu0 %300
    %v302 = vrcp.pop %v298
    %v303 = vrcp.pop %v301
    %v304 = vmul.f32 %v293, %v302
    %v305 = vmul.f32 %v295, %v303
    %v306 = vpack.c.bf16 %v304, %v304
    %v307 = vpack.c.bf16 %v305, %v305
    %308 = vrot.lane.b32.xlu0 %v121, 56
    %v309 = vpop.permute.xlu0 %308
    %v311 = vsel %vm124, %v306, 0
    %v314 = vsel %vm197, %v309, 0
    %316 = vmatpush.bf16.msra.mxu0 0
    %317 = vmatpush.bf16.msra.mxu0 0
    %318 = vmatpush.bf16.msra.mxu0 0
    %319 = vmatpush.bf16.msra.mxu0 0
    %320 = vmatpush.bf16.msra.mxu0 0
    %321 = vmatpush.bf16.msra.mxu0 0
    %322 = vmatpush.bf16.msra.mxu0 0
    %323 = vmatpush.bf16.msra.mxu0 %v314
    %324 = vmatmul.bf16.gmra.mxu0 %v311
    %v325 = vpop.f32.mrf.mxu0
    %v326 = vadd.f32 0.0, %v325
    %v327 = vpop.f32.mrf.mxu0
    %328 = vdwg.mxu0
    %329 = vrot.lane.b32.xlu0 %v146, 56
    %v330 = vpop.permute.xlu0 %329
    %v332 = vsel %vm124, %v307, 0
    %v335 = vsel %vm197, %v330, 0
    %337 = vmatpush.bf16.msra.mxu0 0
    %338 = vmatpush.bf16.msra.mxu0 0
    %339 = vmatpush.bf16.msra.mxu0 0
    %340 = vmatpush.bf16.msra.mxu0 0
    %341 = vmatpush.bf16.msra.mxu0 0
    %342 = vmatpush.bf16.msra.mxu0 0
    %343 = vmatpush.bf16.msra.mxu0 0
    %344 = vmatpush.bf16.msra.mxu0 %v335
    %345 = vmatmul.bf16.gmra.mxu0 %v332
    %v346 = vpop.f32.mrf.mxu0
    %v347 = vadd.f32 0.0, %v346
    %v348 = vpop.f32.mrf.mxu0
    %349 = vdwg.mxu0
    %v350 = vld [vmem:[#allocation4 + $0x48] sm:$0xff]
    %v351 = vpack.c.bf16 %v350, %v350
    %v352 = vpack.c.bf16 %v347, %v326
    %v354 = vsel %vm124, %v352, 0
    %v357 = vsel %vm197, %v351, 0
    %359 = vmatpush.bf16.msra.mxu0 0
    %360 = vmatpush.bf16.msra.mxu0 0
    %361 = vmatpush.bf16.msra.mxu0 0
    %362 = vmatpush.bf16.msra.mxu0 0
    %363 = vmatpush.bf16.msra.mxu0 0
    %364 = vmatpush.bf16.msra.mxu0 0
    %365 = vmatpush.bf16.msra.mxu0 0
    %366 = vmatpush.bf16.msra.mxu0 %v357
    %367 = vmatmul.bf16.gmra.mxu0 %v354
    %v368 = vpop.f32.mrf.mxu0
    %v369 = vadd.f32 0.0, %v368
    %v370 = vpop.f32.mrf.mxu0
    %v371 = vadd.f32 0.0, %v370
    %372 = vdwg.mxu0
    %v374 = vsel %vm124, %v237, 0
    %v377 = vsel %vm197, %v236, 0
    %379 = vmatpush.bf16.msra.mxu0 0
    %380 = vmatpush.bf16.msra.mxu0 0
    %381 = vmatpush.bf16.msra.mxu0 0
    %382 = vmatpush.bf16.msra.mxu0 0
    %383 = vmatpush.bf16.msra.mxu0 0
    %384 = vmatpush.bf16.msra.mxu0 0
    %385 = vmatpush.bf16.msra.mxu0 0
    %386 = vmatpush.bf16.msra.mxu0 %v377
    %387 = vmatmul.bf16.gmra.mxu0 %v374
    %v388 = vpop.f32.mrf.mxu0
    %v389 = vadd.f32 %v369, %v388
    %v390 = vpop.f32.mrf.mxu0
    %v391 = vadd.f32 %v371, %v390
    %392 = vdwg.mxu0
    %393 = vrot.lane.b32.xlu0 %v121, 112
    %v394 = vpop.permute.xlu0 %393
    %395 = vrot.lane.b32.xlu0 %v121, 80
    %v396 = vpop.permute.xlu0 %395
    %v398 = vsel %vm124, %v394, 0
    %v401 = vsel %vm124, %v396, 0
    %403 = vmatpush.bf16.xpose.msra.mxu0 0
    %404 = vmatpush.bf16.xpose.msra.mxu0 0
    %405 = vmatpush.bf16.xpose.msra.mxu0 0
    %406 = vmatpush.bf16.xpose.msra.mxu0 0
    %407 = vmatpush.bf16.xpose.msra.mxu0 0
    %408 = vmatpush.bf16.xpose.msra.mxu0 0
    %409 = vmatpush.bf16.xpose.msra.mxu0 0
    %410 = vmatpush.bf16.xpose.msra.mxu0 %v401
    %411 = vmatmul.bf16.gmra.mxu0 %v398
    %v412 = vpop.f32.mrf.mxu0
    %v413 = vadd.f32 0.0, %v412
    %v414 = vpop.f32.mrf.mxu0
    %415 = vdwg.mxu0
    %416 = vrot.lane.b32.xlu0 %v146, 112
    %v417 = vpop.permute.xlu0 %416
    %418 = vrot.lane.b32.xlu0 %v146, 80
    %v419 = vpop.permute.xlu0 %418
    %v421 = vsel %vm124, %v417, 0
    %v424 = vsel %vm124, %v419, 0
    %426 = vmatpush.bf16.xpose.msra.mxu0 0
    %427 = vmatpush.bf16.xpose.msra.mxu0 0
    %428 = vmatpush.bf16.xpose.msra.mxu0 0
    %429 = vmatpush.bf16.xpose.msra.mxu0 0
    %430 = vmatpush.bf16.xpose.msra.mxu0 0
    %431 = vmatpush.bf16.xpose.msra.mxu0 0
    %432 = vmatpush.bf16.xpose.msra.mxu0 0
    %433 = vmatpush.bf16.xpose.msra.mxu0 %v424
    %434 = vmatmul.bf16.gmra.mxu0 %v421
    %v435 = vpop.f32.mrf.mxu0
    %v436 = vadd.f32 0.0, %v435
    %v437 = vpop.f32.mrf.mxu0
    %438 = vdwg.mxu0
    %v439 = vsel %vm124, %v413, -inf
    %440 = vmax.xlane.f32.xlu0 %v439
    %v441 = vpop.xlane.xlu0 %440
    %v442 = vsel %vm124, %v436, -inf
    %443 = vmax.xlane.f32.xlu0 %v442
    %v444 = vpop.xlane.xlu0 %443
    %v445 = vsub.f32 %v413, %v441
    %v446 = vsub.f32 %v436, %v444
    %v447 = vmul.f32 %v445, 1.442695
    %v448 = vpow.pop %v447
    %v449 = vmul.f32 %v446, 1.442695
    %v450 = vpow.pop %v449
    %v451 = vsel %vm124, %v448, 0.0
    %452 = vadd.xlane.f32.xlu0 %v451
    %v453 = vpop.xlane.xlu0 %452
    %v454 = vsel %vm124, %v450, 0.0
    %455 = vadd.xlane.f32.xlu0 %v454
    %v456 = vpop.xlane.xlu0 %455
    %v457 = vrcp.pop %v453
    %v458 = vrcp.pop %v456
    %v459 = vmul.f32 %v448, %v457
    %v460 = vmul.f32 %v450, %v458
    %v461 = vpack.c.bf16 %v459, %v459
    %v462 = vpack.c.bf16 %v460, %v460
    %463 = vrot.lane.b32.xlu0 %v121, 48
    %v464 = vpop.permute.xlu0 %463
    %v466 = vsel %vm124, %v461, 0
    %v469 = vsel %vm197, %v464, 0
    %471 = vmatpush.bf16.msra.mxu0 0
    %472 = vmatpush.bf16.msra.mxu0 0
    %473 = vmatpush.bf16.msra.mxu0 0
    %474 = vmatpush.bf16.msra.mxu0 0
    %475 = vmatpush.bf16.msra.mxu0 0
    %476 = vmatpush.bf16.msra.mxu0 0
    %477 = vmatpush.bf16.msra.mxu0 0
    %478 = vmatpush.bf16.msra.mxu0 %v469
    %479 = vmatmul.bf16.gmra.mxu0 %v466
    %v480 = vpop.f32.mrf.mxu0
    %v481 = vadd.f32 0.0, %v480
    %v482 = vpop.f32.mrf.mxu0
    %483 = vdwg.mxu0
    %484 = vrot.lane.b32.xlu0 %v146, 48
    %v485 = vpop.permute.xlu0 %484
    %v487 = vsel %vm124, %v462, 0
    %v490 = vsel %vm197, %v485, 0
    %492 = vmatpush.bf16.msra.mxu0 0
    %493 = vmatpush.bf16.msra.mxu0 0
    %494 = vmatpush.bf16.msra.mxu0 0
    %495 = vmatpush.bf16.msra.mxu0 0
    %496 = vmatpush.bf16.msra.mxu0 0
    %497 = vmatpush.bf16.msra.mxu0 0
    %498 = vmatpush.bf16.msra.mxu0 0
    %499 = vmatpush.bf16.msra.mxu0 %v490
    %500 = vmatmul.bf16.gmra.mxu0 %v487
    %v501 = vpop.f32.mrf.mxu0
    %v502 = vadd.f32 0.0, %v501
    %v503 = vpop.f32.mrf.mxu0
    %504 = vdwg.mxu0
    %v505 = vld [vmem:[#allocation4 + $0x50] sm:$0xff]
    %v506 = vpack.c.bf16 %v505, %v505
    %v507 = vpack.c.bf16 %v502, %v481
    %v509 = vsel %vm124, %v507, 0
    %v512 = vsel %vm197, %v506, 0
    %514 = vmatpush.bf16.msra.mxu0 0
    %515 = vmatpush.bf16.msra.mxu0 0
    %516 = vmatpush.bf16.msra.mxu0 0
    %517 = vmatpush.bf16.msra.mxu0 0
    %518 = vmatpush.bf16.msra.mxu0 0
    %519 = vmatpush.bf16.msra.mxu0 0
    %520 = vmatpush.bf16.msra.mxu0 0
    %521 = vmatpush.bf16.msra.mxu0 %v512
    %522 = vmatmul.bf16.gmra.mxu0 %v509
    %v523 = vpop.f32.mrf.mxu0
    %v524 = vadd.f32 0.0, %v523
    %v525 = vpop.f32.mrf.mxu0
    %v526 = vadd.f32 0.0, %v525
    %527 = vdwg.mxu0
    %v528 = vadd.f32 %v389, %v524
    %v529 = vadd.f32 %v391, %v526
    %530 = vrot.lane.b32.xlu0 %v121, 104
    %v531 = vpop.permute.xlu0 %530
    %532 = vrot.lane.b32.xlu0 %v121, 72
    %v533 = vpop.permute.xlu0 %532
    %v535 = vsel %vm124, %v531, 0
    %v538 = vsel %vm124, %v533, 0
    %540 = vmatpush.bf16.xpose.msra.mxu0 0
    %541 = vmatpush.bf16.xpose.msra.mxu0 0
    %542 = vmatpush.bf16.xpose.msra.mxu0 0
    %543 = vmatpush.bf16.xpose.msra.mxu0 0
    %544 = vmatpush.bf16.xpose.msra.mxu0 0
    %545 = vmatpush.bf16.xpose.msra.mxu0 0
    %546 = vmatpush.bf16.xpose.msra.mxu0 0
    %547 = vmatpush.bf16.xpose.msra.mxu0 %v538
    %548 = vmatmul.bf16.gmra.mxu0 %v535
    %v549 = vpop.f32.mrf.mxu0
    %v550 = vadd.f32 0.0, %v549
    %v551 = vpop.f32.mrf.mxu0
    %552 = vdwg.mxu0
    %553 = vrot.lane.b32.xlu0 %v146, 104
    %v554 = vpop.permute.xlu0 %553
    %555 = vrot.lane.b32.xlu0 %v146, 72
    %v556 = vpop.permute.xlu0 %555
    %v558 = vsel %vm124, %v554, 0
    %v561 = vsel %vm124, %v556, 0
    %563 = vmatpush.bf16.xpose.msra.mxu0 0
    %564 = vmatpush.bf16.xpose.msra.mxu0 0
    %565 = vmatpush.bf16.xpose.msra.mxu0 0
    %566 = vmatpush.bf16.xpose.msra.mxu0 0
    %567 = vmatpush.bf16.xpose.msra.mxu0 0
    %568 = vmatpush.bf16.xpose.msra.mxu0 0
    %569 = vmatpush.bf16.xpose.msra.mxu0 0
    %570 = vmatpush.bf16.xpose.msra.mxu0 %v561
    %571 = vmatmul.bf16.gmra.mxu0 %v558
    %v572 = vpop.f32.mrf.mxu0
    %v573 = vadd.f32 0.0, %v572
    %v574 = vpop.f32.mrf.mxu0
    %575 = vdwg.mxu0
    %v576 = vsel %vm124, %v550, -inf
    %577 = vmax.xlane.f32.xlu0 %v576
    %v578 = vpop.xlane.xlu0 %577
    %v579 = vsel %vm124, %v573, -inf
    %580 = vmax.xlane.f32.xlu0 %v579
    %v581 = vpop.xlane.xlu0 %580
    %v582 = vsub.f32 %v550, %v578
    %v583 = vsub.f32 %v573, %v581
    %v584 = vmul.f32 %v582, 1.442695
    %v585 = vpow.pop %v584
    %v586 = vmul.f32 %v583, 1.442695
    %v587 = vpow.pop %v586
    %v588 = vsel %vm124, %v585, 0.0
    %589 = vadd.xlane.f32.xlu0 %v588
    %v590 = vpop.xlane.xlu0 %589
    %v591 = vsel %vm124, %v587, 0.0
    %592 = vadd.xlane.f32.xlu0 %v591
    %v593 = vpop.xlane.xlu0 %592
    %v594 = vrcp.pop %v590
    %v595 = vrcp.pop %v593
    %v596 = vmul.f32 %v585, %v594
    %v597 = vmul.f32 %v587, %v595
    %v598 = vpack.c.bf16 %v596, %v596
    %v599 = vpack.c.bf16 %v597, %v597
    %600 = vrot.lane.b32.xlu0 %v121, 40
    %v601 = vpop.permute.xlu0 %600
    %v603 = vsel %vm124, %v598, 0
    %v606 = vsel %vm197, %v601, 0
    %608 = vmatpush.bf16.msra.mxu0 0
    %609 = vmatpush.bf16.msra.mxu0 0
    %610 = vmatpush.bf16.msra.mxu0 0
    %611 = vmatpush.bf16.msra.mxu0 0
    %612 = vmatpush.bf16.msra.mxu0 0
    %613 = vmatpush.bf16.msra.mxu0 0
    %614 = vmatpush.bf16.msra.mxu0 0
    %615 = vmatpush.bf16.msra.mxu0 %v606
    %616 = vmatmul.bf16.gmra.mxu0 %v603
    %v617 = vpop.f32.mrf.mxu0
    %v618 = vadd.f32 0.0, %v617
    %v619 = vpop.f32.mrf.mxu0
    %620 = vdwg.mxu0
    %621 = vrot.lane.b32.xlu0 %v146, 40
    %v622 = vpop.permute.xlu0 %621
    %v624 = vsel %vm124, %v599, 0
    %v627 = vsel %vm197, %v622, 0
    %629 = vmatpush.bf16.msra.mxu0 0
    %630 = vmatpush.bf16.msra.mxu0 0
    %631 = vmatpush.bf16.msra.mxu0 0
    %632 = vmatpush.bf16.msra.mxu0 0
    %633 = vmatpush.bf16.msra.mxu0 0
    %634 = vmatpush.bf16.msra.mxu0 0
    %635 = vmatpush.bf16.msra.mxu0 0
    %636 = vmatpush.bf16.msra.mxu0 %v627
    %637 = vmatmul.bf16.gmra.mxu0 %v624
    %v638 = vpop.f32.mrf.mxu0
    %v639 = vadd.f32 0.0, %v638
    %v640 = vpop.f32.mrf.mxu0
    %641 = vdwg.mxu0
    %v642 = vld [vmem:[#allocation4 + $0x58] sm:$0xff]
    %v643 = vpack.c.bf16 %v642, %v642
    %v644 = vpack.c.bf16 %v639, %v618
    %v646 = vsel %vm124, %v644, 0
    %v649 = vsel %vm197, %v643, 0
    %651 = vmatpush.bf16.msra.mxu0 0
    %652 = vmatpush.bf16.msra.mxu0 0
    %653 = vmatpush.bf16.msra.mxu0 0
    %654 = vmatpush.bf16.msra.mxu0 0
    %655 = vmatpush.bf16.msra.mxu0 0
    %656 = vmatpush.bf16.msra.mxu0 0
    %657 = vmatpush.bf16.msra.mxu0 0
    %658 = vmatpush.bf16.msra.mxu0 %v649
    %659 = vmatmul.bf16.gmra.mxu0 %v646
    %v660 = vpop.f32.mrf.mxu0
    %v661 = vadd.f32 0.0, %v660
    %v662 = vpop.f32.mrf.mxu0
    %v663 = vadd.f32 0.0, %v662
    %664 = vdwg.mxu0
    %v665 = vadd.f32 %v528, %v661
    %v666 = vadd.f32 %v529, %v663
    %v667 = vld [vmem:[#allocation6 + $0x2] sm:$0x1]
    %v668 = vperm.slane %v667, 0
    %v669 = vadd.f32 %v665, %v668
    %v670 = vadd.f32 %v666, %v668
    %v671 = vadd.f32 %v87, %v669
    %v672 = vadd.f32 %v89, %v670
    %v673 = vld [vmem:[#allocation6 + $0x3] sm:$0x1]
    %v674 = vld [vmem:[#allocation6 + $0x4] sm:$0x1]
    %v675 = vsel %vm73, %v671, 0.0
    %676 = vadd.xlane.f32.xlu0 %v675
    %v677 = vpop.xlane.xlu0 %676
    %v678 = vsel %vm73, %v672, 0.0
    %679 = vadd.xlane.f32.xlu0 %v678
    %v680 = vpop.xlane.xlu0 %679
    %v681 = vrcp.pop 32.0
    %v682 = vmul.f32 32.0, %v681
    %v683 = vsub.f32 1.0, %v682
    %v684 = vmul.f32 %v681, %v683
    %v685 = vadd.f32 %v681, %v684
    %vm686 = vweird.f32 %v681
    %v687 = vsel %vm686, %v681, %v685
    %v688 = vmul.f32 %v677, %v687
    %v689 = vmul.f32 %v680, %v687
    %v690 = vsub.f32 %v671, %v688
    %v691 = vsub.f32 %v672, %v689
    %v692 = vmul.f32 %v690, %v690
    %v693 = vmul.f32 %v691, %v691
    %v694 = vsel %vm73, %v692, 0.0
    %695 = vadd.xlane.f32.xlu0 %v694
    %v696 = vpop.xlane.xlu0 %695
    %v697 = vsel %vm73, %v693, 0.0
    %698 = vadd.xlane.f32.xlu0 %v697
    %v699 = vpop.xlane.xlu0 %698
    %v700 = vmul.f32 %v696, %v687
    %v701 = vmul.f32 %v699, %v687
    %v702 = vadd.f32 %v700, 1e-05
    %v703 = vadd.f32 %v701, 1e-05
    %v704 = vrsqrt.pop %v702
    %v705 = vmul.f32 %v704, %v702
    %v706 = vmul.f32 %v705, %v704
    %v707 = vmul.f32 0.5, %v706
    %v708 = vsub.f32 1.5, %v707
    %v709 = vmul.f32 %v704, %v708
    %vm710 = vweird.f32 %v702
    %vm711 = vweird.f32 %v704
    %vm712 = vmor %vm710, %vm711
    %v713 = vsel %vm712, %v704, %v709
    %v714 = vrsqrt.pop %v703
    %v715 = vmul.f32 %v714, %v703
    %v716 = vmul.f32 %v715, %v714
    %v717 = vmul.f32 0.5, %v716
    %v718 = vsub.f32 1.5, %v717
    %v719 = vmul.f32 %v714, %v718
    %vm720 = vweird.f32 %v703
    %vm721 = vweird.f32 %v714
    %vm722 = vmor %vm720, %vm721
    %v723 = vsel %vm722, %v714, %v719
    %v724 = vmul.f32 %v690, %v713
    %v725 = vmul.f32 %v691, %v723
    %v726 = vperm.slane %v673, 0
    %v727 = vmul.f32 %v724, %v726
    %v728 = vmul.f32 %v725, %v726
    %v729 = vperm.slane %v674, 0
    %v730 = vadd.f32 %v727, %v729
    %v731 = vadd.f32 %v728, %v729
    %v732 = vpack.c.bf16 %v731, %v730
    %v733 = vld [vmem:[#allocation4 + $0x60] sm:$0xff]
    %v734 = vld [vmem:[#allocation4 + $0x68] sm:$0xff]
    %v735 = vld [vmem:[#allocation4 + $0x70] sm:$0xff]
    %v736 = vld [vmem:[#allocation4 + $0x78] sm:$0xff]
    %v737 = vpack.c.bf16 %v734, %v733
    %v738 = vpack.c.bf16 %v736, %v735
    %v739 = vld [vmem:[#allocation6 + $0x5] sm:$0x1]
    %v740 = vperm.slane %v739, 0
    %v742 = vsel %vm73, %v732, 0
    %744 = vmatpush.bf16.msra.mxu0 0
    %745 = vmatpush.bf16.msra.mxu0 0
    %746 = vmatpush.bf16.msra.mxu0 0
    %747 = vmatpush.bf16.msra.mxu0 0
    %748 = vmatpush.bf16.msra.mxu0 0
    %749 = vmatpush.bf16.msra.mxu0 0
    %750 = vmatpush.bf16.msra.mxu0 %v738
    %751 = vmatpush.bf16.msra.mxu0 %v737
    %752 = vmatmul.bf16.gmra.mxu0 %v742
    %v753 = vpop.f32.mrf.mxu0
    %v754 = vadd.f32 %v740, %v753
    %v755 = vpop.f32.mrf.mxu0
    %v756 = vadd.f32 %v740, %v755
    %757 = vdwg.mxu0
    %v758 = vmax.f32 %v754, 0.0
    %v759 = vmax.f32 %v756, 0.0
    %v760 = vpack.c.bf16 %v759, %v758
    %v761 = vld [vmem:[#allocation4 + $0x80] sm:$0xff]
    %v762 = vld [vmem:[#allocation4 + $0x88] sm:$0xff]
    %v763 = vld [vmem:[#allocation4 + $0x90] sm:$0xff]
    %v764 = vld [vmem:[#allocation4 + $0x98] sm:$0xff]
    %v765 = vld [vmem:[#allocation4 + $0xa0] sm:$0xff]
    %v766 = vld [vmem:[#allocation4 + $0xa8] sm:$0xff]
    %v767 = vld [vmem:[#allocation4 + $0xb0] sm:$0xff]
    %v768 = vld [vmem:[#allocation4 + $0xb8] sm:$0xff]
    %v769 = vpack.c.bf16 %v762, %v761
    %v770 = vpack.c.bf16 %v764, %v763
    %v771 = vpack.c.bf16 %v766, %v765
    %v772 = vpack.c.bf16 %v768, %v767
    %v773 = vld [vmem:[#allocation6 + $0x6] sm:$0x1]
    %v774 = vperm.slane %v773, 0
    %vm775 = vcmask 523264
    %v777 = vsel %vm775, %v760, 0
    %779 = vmatpush.bf16.msra.mxu0 0
    %780 = vmatpush.bf16.msra.mxu0 0
    %781 = vmatpush.bf16.msra.mxu0 0
    %782 = vmatpush.bf16.msra.mxu0 0
    %783 = vmatpush.bf16.msra.mxu0 %v772
    %784 = vmatpush.bf16.msra.mxu0 %v771
    %785 = vmatpush.bf16.msra.mxu0 %v770
    %786 = vmatpush.bf16.msra.mxu0 %v769
    %787 = vmatmul.bf16.gmra.mxu0 %v777
    %v788 = vpop.f32.mrf.mxu0
    %v789 = vadd.f32 %v774, %v788
    %v790 = vpop.f32.mrf.mxu0
    %v791 = vadd.f32 %v774, %v790
    %792 = vdwg.mxu0
    %v793 = vadd.f32 %v730, %v789
    %v794 = vadd.f32 %v731, %v791
    %v795 = vld [vmem:[#allocation6 + $0x7] sm:$0x1]
    %v796 = vld [vmem:[#allocation6 + $0x8] sm:$0x1]
    %v797 = vsel %vm73, %v793, 0.0
    %798 = vadd.xlane.f32.xlu0 %v797
    %v799 = vpop.xlane.xlu0 %798
    %v800 = vsel %vm73, %v794, 0.0
    %801 = vadd.xlane.f32.xlu0 %v800
    %v802 = vpop.xlane.xlu0 %801
    %v803 = vmul.f32 %v799, %v687
    %v804 = vmul.f32 %v802, %v687
    %v805 = vsub.f32 %v793, %v803
    %v806 = vsub.f32 %v794, %v804
    %v807 = vmul.f32 %v805, %v805
    %v808 = vmul.f32 %v806, %v806
    %v809 = vsel %vm73, %v807, 0.0
    %810 = vadd.xlane.f32.xlu0 %v809
    %v811 = vpop.xlane.xlu0 %810
    %v812 = vsel %vm73, %v808, 0.0
    %813 = vadd.xlane.f32.xlu0 %v812
    %v814 = vpop.xlane.xlu0 %813
    %v815 = vmul.f32 %v811, %v687
    %v816 = vmul.f32 %v814, %v687
    %v817 = vadd.f32 %v815, 1e-05
    %v818 = vadd.f32 %v816, 1e-05
    %v819 = vrsqrt.pop %v817
    %v820 = vmul.f32 %v819, %v817
    %v821 = vmul.f32 %v820, %v819
    %v822 = vmul.f32 0.5, %v821
    %v823 = vsub.f32 1.5, %v822
    %v824 = vmul.f32 %v819, %v823
    %vm825 = vweird.f32 %v817
    %vm826 = vweird.f32 %v819
    %vm827 = vmor %vm825, %vm826
    %v828 = vsel %vm827, %v819, %v824
    %v829 = vrsqrt.pop %v818
    %v830 = vmul.f32 %v829, %v818
    %v831 = vmul.f32 %v830, %v829
    %v832 = vmul.f32 0.5, %v831
    %v833 = vsub.f32 1.5, %v832
    %v834 = vmul.f32 %v829, %v833
    %vm835 = vweird.f32 %v818
    %vm836 = vweird.f32 %v829
    %vm837 = vmor %vm835, %vm836
    %v838 = vsel %vm837, %v829, %v834
    %v839 = vmul.f32 %v805, %v828
    %v840 = vmul.f32 %v806, %v838
    %v841 = vperm.slane %v795, 0
    %v842 = vmul.f32 %v839, %v841
    %v843 = vmul.f32 %v840, %v841
    %v844 = vperm.slane %v796, 0
    %v845 = vadd.f32 %v842, %v844
    %v846 = vadd.f32 %v843, %v844
    %v847 = vpack.c.bf16 %v846, %v845
    %v848 = vld [vmem:[#allocation4 + $0xc0] sm:$0xff]
    %v849 = vld [vmem:[#allocation4 + $0xc8] sm:$0xff]
    %v850 = vld [vmem:[#allocation4 + $0xd0] sm:$0xff]
    %v851 = vld [vmem:[#allocation4 + $0xd8] sm:$0xff]
    %v852 = vpack.c.bf16 %v849, %v848
    %v853 = vpack.c.bf16 %v851, %v850
    %v854 = vld [vmem:[#allocation6 + $0x9] sm:$0x1]
    %v855 = vperm.slane %v854, 0
    %v857 = vsel %vm73, %v847, 0
    %859 = vmatpush.bf16.msra.mxu0 0
    %860 = vmatpush.bf16.msra.mxu0 0
    %861 = vmatpush.bf16.msra.mxu0 0
    %862 = vmatpush.bf16.msra.mxu0 0
    %863 = vmatpush.bf16.msra.mxu0 0
    %864 = vmatpush.bf16.msra.mxu0 0
    %865 = vmatpush.bf16.msra.mxu0 %v853
    %866 = vmatpush.bf16.msra.mxu0 %v852
    %867 = vmatmul.bf16.gmra.mxu0 %v857
    %v868 = vpop.f32.mrf.mxu0
    %v869 = vadd.f32 %v855, %v868
    %v870 = vpop.f32.mrf.mxu0
    %v871 = vadd.f32 %v855, %v870
    %872 = vdwg.mxu0
    %v873 = vpack.c.bf16 %v869, %v869
    %v874 = vpack.c.bf16 %v871, %v871
    %v876 = vunpack.c.l.b16 %v873
    %v877 = vpack.c.b16 %v876, %v876
    %878 = vrot.lane.b32.xlu0 %v877, 96
    %v879 = vpop.permute.xlu0 %878
    %v881 = vsel %vm124, %v873, 0
    %v884 = vsel %vm124, %v879, 0
    %886 = vmatpush.bf16.xpose.msra.mxu0 0
    %887 = vmatpush.bf16.xpose.msra.mxu0 0
    %888 = vmatpush.bf16.xpose.msra.mxu0 0
    %889 = vmatpush.bf16.xpose.msra.mxu0 0
    %890 = vmatpush.bf16.xpose.msra.mxu0 0
    %891 = vmatpush.bf16.xpose.msra.mxu0 0
    %892 = vmatpush.bf16.xpose.msra.mxu0 0
    %893 = vmatpush.bf16.xpose.msra.mxu0 %v884
    %894 = vmatmul.bf16.gmra.mxu0 %v881
    %v895 = vpop.f32.mrf.mxu0
    %v896 = vadd.f32 0.0, %v895
    %v897 = vpop.f32.mrf.mxu0
    %898 = vdwg.mxu0
    %v900 = vunpack.c.l.b16 %v874
    %v901 = vpack.c.b16 %v900, %v900
    %902 = vrot.lane.b32.xlu0 %v901, 96
    %v903 = vpop.permute.xlu0 %902
    %v905 = vsel %vm124, %v874, 0
    %v908 = vsel %vm124, %v903, 0
    %910 = vmatpush.bf16.xpose.msra.mxu0 0
    %911 = vmatpush.bf16.xpose.msra.mxu0 0
    %912 = vmatpush.bf16.xpose.msra.mxu0 0
    %913 = vmatpush.bf16.xpose.msra.mxu0 0
    %914 = vmatpush.bf16.xpose.msra.mxu0 0
    %915 = vmatpush.bf16.xpose.msra.mxu0 0
    %916 = vmatpush.bf16.xpose.msra.mxu0 0
    %917 = vmatpush.bf16.xpose.msra.mxu0 %v908
    %918 = vmatmul.bf16.gmra.mxu0 %v905
    %v919 = vpop.f32.mrf.mxu0
    %v920 = vadd.f32 0.0, %v919
    %v921 = vpop.f32.mrf.mxu0
    %922 = vdwg.mxu0
    %v923 = vsel %vm124, %v896, -inf
    %924 = vmax.xlane.f32.xlu0 %v923
    %v925 = vpop.xlane.xlu0 %924
    %v926 = vsel %vm124, %v920, -inf
    %927 = vmax.xlane.f32.xlu0 %v926
    %v928 = vpop.xlane.xlu0 %927
    %v929 = vsub.f32 %v896, %v925
    %v930 = vsub.f32 %v920, %v928
    %v931 = vmul.f32 %v929, 1.442695
    %v932 = vpow.pop %v931
    %v933 = vmul.f32 %v930, 1.442695
    %v934 = vpow.pop %v933
    %v935 = vsel %vm124, %v932, 0.0
    %936 = vadd.xlane.f32.xlu0 %v935
    %v937 = vpop.xlane.xlu0 %936
    %v938 = vsel %vm124, %v934, 0.0
    %939 = vadd.xlane.f32.xlu0 %v938
    %v940 = vpop.xlane.xlu0 %939
    %v941 = vrcp.pop %v937
    %v942 = vrcp.pop %v940
    %v943 = vmul.f32 %v932, %v941
    %v944 = vmul.f32 %v934, %v942
    %v945 = vpack.c.bf16 %v943, %v943
    %v946 = vpack.c.bf16 %v944, %v944
    %947 = vrot.lane.b32.xlu0 %v877, 64
    %v948 = vpop.permute.xlu0 %947
    %v950 = vsel %vm124, %v945, 0
    %v953 = vsel %vm197, %v948, 0
    %955 = vmatpush.bf16.msra.mxu0 0
    %956 = vmatpush.bf16.msra.mxu0 0
    %957 = vmatpush.bf16.msra.mxu0 0
    %958 = vmatpush.bf16.msra.mxu0 0
    %959 = vmatpush.bf16.msra.mxu0 0
    %960 = vmatpush.bf16.msra.mxu0 0
    %961 = vmatpush.bf16.msra.mxu0 0
    %962 = vmatpush.bf16.msra.mxu0 %v953
    %963 = vmatmul.bf16.gmra.mxu0 %v950
    %v964 = vpop.f32.mrf.mxu0
    %v965 = vadd.f32 0.0, %v964
    %v966 = vpop.f32.mrf.mxu0
    %967 = vdwg.mxu0
    %968 = vrot.lane.b32.xlu0 %v901, 64
    %v969 = vpop.permute.xlu0 %968
    %v971 = vsel %vm124, %v946, 0
    %v974 = vsel %vm197, %v969, 0
    %976 = vmatpush.bf16.msra.mxu0 0
    %977 = vmatpush.bf16.msra.mxu0 0
    %978 = vmatpush.bf16.msra.mxu0 0
    %979 = vmatpush.bf16.msra.mxu0 0
    %980 = vmatpush.bf16.msra.mxu0 0
    %981 = vmatpush.bf16.msra.mxu0 0
    %982 = vmatpush.bf16.msra.mxu0 0
    %983 = vmatpush.bf16.msra.mxu0 %v974
    %984 = vmatmul.bf16.gmra.mxu0 %v971
    %v985 = vpop.f32.mrf.mxu0
    %v986 = vadd.f32 0.0, %v985
    %v987 = vpop.f32.mrf.mxu0
    %988 = vdwg.mxu0
    %v989 = vld [vmem:[#allocation4 + $0xe0] sm:$0xff]
    %v990 = vpack.c.bf16 %v989, %v989
    %v991 = vpack.c.bf16 %v986, %v965
    %992 = vrot.lane.b32.xlu0 %v877, 120
    %v993 = vpop.permute.xlu0 %992
    %994 = vrot.lane.b32.xlu0 %v877, 88
    %v995 = vpop.permute.xlu0 %994
    %v997 = vsel %vm124, %v993, 0
    %v1000 = vsel %vm124, %v995, 0
    %1002 = vmatpush.bf16.xpose.msra.mxu0 0
    %1003 = vmatpush.bf16.xpose.msra.mxu0 0
    %1004 = vmatpush.bf16.xpose.msra.mxu0 0
    %1005 = vmatpush.bf16.xpose.msra.mxu0 0
    %1006 = vmatpush.bf16.xpose.msra.mxu0 0
    %1007 = vmatpush.bf16.xpose.msra.mxu0 0
    %1008 = vmatpush.bf16.xpose.msra.mxu0 0
    %1009 = vmatpush.bf16.xpose.msra.mxu0 %v1000
    %1010 = vmatmul.bf16.gmra.mxu0 %v997
    %v1011 = vpop.f32.mrf.mxu0
    %v1012 = vadd.f32 0.0, %v1011
    %v1013 = vpop.f32.mrf.mxu0
    %1014 = vdwg.mxu0
    %1015 = vrot.lane.b32.xlu0 %v901, 120
    %v1016 = vpop.permute.xlu0 %1015
    %1017 = vrot.lane.b32.xlu0 %v901, 88
    %v1018 = vpop.permute.xlu0 %1017
    %v1020 = vsel %vm124, %v1016, 0
    %v1023 = vsel %vm124, %v1018, 0
    %1025 = vmatpush.bf16.xpose.msra.mxu0 0
    %1026 = vmatpush.bf16.xpose.msra.mxu0 0
    %1027 = vmatpush.bf16.xpose.msra.mxu0 0
    %1028 = vmatpush.bf16.xpose.msra.mxu0 0
    %1029 = vmatpush.bf16.xpose.msra.mxu0 0
    %1030 = vmatpush.bf16.xpose.msra.mxu0 0
    %1031 = vmatpush.bf16.xpose.msra.mxu0 0
    %1032 = vmatpush.bf16.xpose.msra.mxu0 %v1023
    %1033 = vmatmul.bf16.gmra.mxu0 %v1020
    %v1034 = vpop.f32.mrf.mxu0
    %v1035 = vadd.f32 0.0, %v1034
    %v1036 = vpop.f32.mrf.mxu0
    %1037 = vdwg.mxu0
    %v1038 = vsel %vm124, %v1012, -inf
    %1039 = vmax.xlane.f32.xlu0 %v1038
    %v1040 = vpop.xlane.xlu0 %1039
    %v1041 = vsel %vm124, %v1035, -inf
    %1042 = vmax.xlane.f32.xlu0 %v1041
    %v1043 = vpop.xlane.xlu0 %1042
    %v1044 = vsub.f32 %v1012, %v1040
    %v1045 = vsub.f32 %v1035, %v1043
    %v1046 = vmul.f32 %v1044, 1.442695
    %v1047 = vpow.pop %v1046
    %v1048 = vmul.f32 %v1045, 1.442695
    %v1049 = vpow.pop %v1048
    %v1050 = vsel %vm124, %v1047, 0.0
    %1051 = vadd.xlane.f32.xlu0 %v1050
    %v1052 = vpop.xlane.xlu0 %1051
    %v1053 = vsel %vm124, %v1049, 0.0
    %1054 = vadd.xlane.f32.xlu0 %v1053
    %v1055 = vpop.xlane.xlu0 %1054
    %v1056 = vrcp.pop %v1052
    %v1057 = vrcp.pop %v1055
    %v1058 = vmul.f32 %v1047, %v1056
    %v1059 = vmul.f32 %v1049, %v1057
    %v1060 = vpack.c.bf16 %v1058, %v1058
    %v1061 = vpack.c.bf16 %v1059, %v1059
    %1062 = vrot.lane.b32.xlu0 %v877, 56
    %v1063 = vpop.permute.xlu0 %1062
    %v1065 = vsel %vm124, %v1060, 0
    %v1068 = vsel %vm197, %v1063, 0
    %1070 = vmatpush.bf16.msra.mxu0 0
    %1071 = vmatpush.bf16.msra.mxu0 0
    %1072 = vmatpush.bf16.msra.mxu0 0
    %1073 = vmatpush.bf16.msra.mxu0 0
    %1074 = vmatpush.bf16.msra.mxu0 0
    %1075 = vmatpush.bf16.msra.mxu0 0
    %1076 = vmatpush.bf16.msra.mxu0 0
    %1077 = vmatpush.bf16.msra.mxu0 %v1068
    %1078 = vmatmul.bf16.gmra.mxu0 %v1065
    %v1079 = vpop.f32.mrf.mxu0
    %v1080 = vadd.f32 0.0, %v1079
    %v1081 = vpop.f32.mrf.mxu0
    %1082 = vdwg.mxu0
    %1083 = vrot.lane.b32.xlu0 %v901, 56
    %v1084 = vpop.permute.xlu0 %1083
    %v1086 = vsel %vm124, %v1061, 0
    %v1089 = vsel %vm197, %v1084, 0
    %1091 = vmatpush.bf16.msra.mxu0 0
    %1092 = vmatpush.bf16.msra.mxu0 0
    %1093 = vmatpush.bf16.msra.mxu0 0
    %1094 = vmatpush.bf16.msra.mxu0 0
    %1095 = vmatpush.bf16.msra.mxu0 0
    %1096 = vmatpush.bf16.msra.mxu0 0
    %1097 = vmatpush.bf16.msra.mxu0 0
    %1098 = vmatpush.bf16.msra.mxu0 %v1089
    %1099 = vmatmul.bf16.gmra.mxu0 %v1086
    %v1100 = vpop.f32.mrf.mxu0
    %v1101 = vadd.f32 0.0, %v1100
    %v1102 = vpop.f32.mrf.mxu0
    %1103 = vdwg.mxu0
    %v1104 = vld [vmem:[#allocation4 + $0xe8] sm:$0xff]
    %v1105 = vpack.c.bf16 %v1104, %v1104
    %v1106 = vpack.c.bf16 %v1101, %v1080
    %v1108 = vsel %vm124, %v1106, 0
    %v1111 = vsel %vm197, %v1105, 0
    %1113 = vmatpush.bf16.msra.mxu0 0
    %1114 = vmatpush.bf16.msra.mxu0 0
    %1115 = vmatpush.bf16.msra.mxu0 0
    %1116 = vmatpush.bf16.msra.mxu0 0
    %1117 = vmatpush.bf16.msra.mxu0 0
    %1118 = vmatpush.bf16.msra.mxu0 0
    %1119 = vmatpush.bf16.msra.mxu0 0
    %1120 = vmatpush.bf16.msra.mxu0 %v1111
    %1121 = vmatmul.bf16.gmra.mxu0 %v1108
    %v1122 = vpop.f32.mrf.mxu0
    %v1123 = vadd.f32 0.0, %v1122
    %v1124 = vpop.f32.mrf.mxu0
    %v1125 = vadd.f32 0.0, %v1124
    %1126 = vdwg.mxu0
    %v1128 = vsel %vm124, %v991, 0
    %v1131 = vsel %vm197, %v990, 0
    %1133 = vmatpush.bf16.msra.mxu0 0
    %1134 = vmatpush.bf16.msra.mxu0 0
    %1135 = vmatpush.bf16.msra.mxu0 0
    %1136 = vmatpush.bf16.msra.mxu0 0
    %1137 = vmatpush.bf16.msra.mxu0 0
    %1138 = vmatpush.bf16.msra.mxu0 0
    %1139 = vmatpush.bf16.msra.mxu0 0
    %1140 = vmatpush.bf16.msra.mxu0 %v1131
    %1141 = vmatmul.bf16.gmra.mxu0 %v1128
    %v1142 = vpop.f32.mrf.mxu0
    %v1143 = vadd.f32 %v1123, %v1142
    %v1144 = vpop.f32.mrf.mxu0
    %v1145 = vadd.f32 %v1125, %v1144
    %1146 = vdwg.mxu0
    %1147 = vrot.lane.b32.xlu0 %v877, 112
    %v1148 = vpop.permute.xlu0 %1147
    %1149 = vrot.lane.b32.xlu0 %v877, 80
    %v1150 = vpop.permute.xlu0 %1149
    %v1152 = vsel %vm124, %v1148, 0
    %v1155 = vsel %vm124, %v1150, 0
    %1157 = vmatpush.bf16.xpose.msra.mxu0 0
    %1158 = vmatpush.bf16.xpose.msra.mxu0 0
    %1159 = vmatpush.bf16.xpose.msra.mxu0 0
    %1160 = vmatpush.bf16.xpose.msra.mxu0 0
    %1161 = vmatpush.bf16.xpose.msra.mxu0 0
    %1162 = vmatpush.bf16.xpose.msra.mxu0 0
    %1163 = vmatpush.bf16.xpose.msra.mxu0 0
    %1164 = vmatpush.bf16.xpose.msra.mxu0 %v1155
    %1165 = vmatmul.bf16.gmra.mxu0 %v1152
    %v1166 = vpop.f32.mrf.mxu0
    %v1167 = vadd.f32 0.0, %v1166
    %v1168 = vpop.f32.mrf.mxu0
    %1169 = vdwg.mxu0
    %1170 = vrot.lane.b32.xlu0 %v901, 112
    %v1171 = vpop.permute.xlu0 %1170
    %1172 = vrot.lane.b32.xlu0 %v901, 80
    %v1173 = vpop.permute.xlu0 %1172
    %v1175 = vsel %vm124, %v1171, 0
    %v1178 = vsel %vm124, %v1173, 0
    %1180 = vmatpush.bf16.xpose.msra.mxu0 0
    %1181 = vmatpush.bf16.xpose.msra.mxu0 0
    %1182 = vmatpush.bf16.xpose.msra.mxu0 0
    %1183 = vmatpush.bf16.xpose.msra.mxu0 0
    %1184 = vmatpush.bf16.xpose.msra.mxu0 0
    %1185 = vmatpush.bf16.xpose.msra.mxu0 0
    %1186 = vmatpush.bf16.xpose.msra.mxu0 0
    %1187 = vmatpush.bf16.xpose.msra.mxu0 %v1178
    %1188 = vmatmul.bf16.gmra.mxu0 %v1175
    %v1189 = vpop.f32.mrf.mxu0
    %v1190 = vadd.f32 0.0, %v1189
    %v1191 = vpop.f32.mrf.mxu0
    %1192 = vdwg.mxu0
    %v1193 = vsel %vm124, %v1167, -inf
    %1194 = vmax.xlane.f32.xlu0 %v1193
    %v1195 = vpop.xlane.xlu0 %1194
    %v1196 = vsel %vm124, %v1190, -inf
    %1197 = vmax.xlane.f32.xlu0 %v1196
    %v1198 = vpop.xlane.xlu0 %1197
    %v1199 = vsub.f32 %v1167, %v1195
    %v1200 = vsub.f32 %v1190, %v1198
    %v1201 = vmul.f32 %v1199, 1.442695
    %v1202 = vpow.pop %v1201
    %v1203 = vmul.f32 %v1200, 1.442695
    %v1204 = vpow.pop %v1203
    %v1205 = vsel %vm124, %v1202, 0.0
    %1206 = vadd.xlane.f32.xlu0 %v1205
    %v1207 = vpop.xlane.xlu0 %1206
    %v1208 = vsel %vm124, %v1204, 0.0
    %1209 = vadd.xlane.f32.xlu0 %v1208
    %v1210 = vpop.xlane.xlu0 %1209
    %v1211 = vrcp.pop %v1207
    %v1212 = vrcp.pop %v1210
    %v1213 = vmul.f32 %v1202, %v1211
    %v1214 = vmul.f32 %v1204, %v1212
    %v1215 = vpack.c.bf16 %v1213, %v1213
    %v1216 = vpack.c.bf16 %v1214, %v1214
    %1217 = vrot.lane.b32.xlu0 %v877, 48
    %v1218 = vpop.permute.xlu0 %1217
    %v1220 = vsel %vm124, %v1215, 0
    %v1223 = vsel %vm197, %v1218, 0
    %1225 = vmatpush.bf16.msra.mxu0 0
    %1226 = vmatpush.bf16.msra.mxu0 0
    %1227 = vmatpush.bf16.msra.mxu0 0
    %1228 = vmatpush.bf16.msra.mxu0 0
    %1229 = vmatpush.bf16.msra.mxu0 0
    %1230 = vmatpush.bf16.msra.mxu0 0
    %1231 = vmatpush.bf16.msra.mxu0 0
    %1232 = vmatpush.bf16.msra.mxu0 %v1223
    %1233 = vmatmul.bf16.gmra.mxu0 %v1220
    %v1234 = vpop.f32.mrf.mxu0
    %v1235 = vadd.f32 0.0, %v1234
    %v1236 = vpop.f32.mrf.mxu0
    %1237 = vdwg.mxu0
    %1238 = vrot.lane.b32.xlu0 %v901, 48
    %v1239 = vpop.permute.xlu0 %1238
    %v1241 = vsel %vm124, %v1216, 0
    %v1244 = vsel %vm197, %v1239, 0
    %1246 = vmatpush.bf16.msra.mxu0 0
    %1247 = vmatpush.bf16.msra.mxu0 0
    %1248 = vmatpush.bf16.msra.mxu0 0
    %1249 = vmatpush.bf16.msra.mxu0 0
    %1250 = vmatpush.bf16.msra.mxu0 0
    %1251 = vmatpush.bf16.msra.mxu0 0
    %1252 = vmatpush.bf16.msra.mxu0 0
    %1253 = vmatpush.bf16.msra.mxu0 %v1244
    %1254 = vmatmul.bf16.gmra.mxu0 %v1241
    %v1255 = vpop.f32.mrf.mxu0
    %v1256 = vadd.f32 0.0, %v1255
    %v1257 = vpop.f32.mrf.mxu0
    %1258 = vdwg.mxu0
    %v1259 = vld [vmem:[#allocation4 + $0xf0] sm:$0xff]
    %v1260 = vpack.c.bf16 %v1259, %v1259
    %v1261 = vpack.c.bf16 %v1256, %v1235
    %v1263 = vsel %vm124, %v1261, 0
    %v1266 = vsel %vm197, %v1260, 0
    %1268 = vmatpush.bf16.msra.mxu0 0
    %1269 = vmatpush.bf16.msra.mxu0 0
    %1270 = vmatpush.bf16.msra.mxu0 0
    %1271 = vmatpush.bf16.msra.mxu0 0
    %1272 = vmatpush.bf16.msra.mxu0 0
    %1273 = vmatpush.bf16.msra.mxu0 0
    %1274 = vmatpush.bf16.msra.mxu0 0
    %1275 = vmatpush.bf16.msra.mxu0 %v1266
    %1276 = vmatmul.bf16.gmra.mxu0 %v1263
    %v1277 = vpop.f32.mrf.mxu0
    %v1278 = vadd.f32 0.0, %v1277
    %v1279 = vpop.f32.mrf.mxu0
    %v1280 = vadd.f32 0.0, %v1279
    %1281 = vdwg.mxu0
    %v1282 = vadd.f32 %v1143, %v1278
    %v1283 = vadd.f32 %v1145, %v1280
    %1284 = vrot.lane.b32.xlu0 %v877, 104
    %v1285 = vpop.permute.xlu0 %1284
    %1286 = vrot.lane.b32.xlu0 %v877, 72
    %v1287 = vpop.permute.xlu0 %1286
    %v1289 = vsel %vm124, %v1285, 0
    %v1292 = vsel %vm124, %v1287, 0
    %1294 = vmatpush.bf16.xpose.msra.mxu0 0
    %1295 = vmatpush.bf16.xpose.msra.mxu0 0
    %1296 = vmatpush.bf16.xpose.msra.mxu0 0
    %1297 = vmatpush.bf16.xpose.msra.mxu0 0
    %1298 = vmatpush.bf16.xpose.msra.mxu0 0
    %1299 = vmatpush.bf16.xpose.msra.mxu0 0
    %1300 = vmatpush.bf16.xpose.msra.mxu0 0
    %1301 = vmatpush.bf16.xpose.msra.mxu0 %v1292
    %1302 = vmatmul.bf16.gmra.mxu0 %v1289
    %v1303 = vpop.f32.mrf.mxu0
    %v1304 = vadd.f32 0.0, %v1303
    %v1305 = vpop.f32.mrf.mxu0
    %1306 = vdwg.mxu0
    %1307 = vrot.lane.b32.xlu0 %v901, 104
    %v1308 = vpop.permute.xlu0 %1307
    %1309 = vrot.lane.b32.xlu0 %v901, 72
    %v1310 = vpop.permute.xlu0 %1309
    %v1312 = vsel %vm124, %v1308, 0
    %v1315 = vsel %vm124, %v1310, 0
    %1317 = vmatpush.bf16.xpose.msra.mxu0 0
    %1318 = vmatpush.bf16.xpose.msra.mxu0 0
    %1319 = vmatpush.bf16.xpose.msra.mxu0 0
    %1320 = vmatpush.bf16.xpose.msra.mxu0 0
    %1321 = vmatpush.bf16.xpose.msra.mxu0 0
    %1322 = vmatpush.bf16.xpose.msra.mxu0 0
    %1323 = vmatpush.bf16.xpose.msra.mxu0 0
    %1324 = vmatpush.bf16.xpose.msra.mxu0 %v1315
    %1325 = vmatmul.bf16.gmra.mxu0 %v1312
    %v1326 = vpop.f32.mrf.mxu0
    %v1327 = vadd.f32 0.0, %v1326
    %v1328 = vpop.f32.mrf.mxu0
    %1329 = vdwg.mxu0
    %v1330 = vsel %vm124, %v1304, -inf
    %1331 = vmax.xlane.f32.xlu0 %v1330
    %v1332 = vpop.xlane.xlu0 %1331
    %v1333 = vsel %vm124, %v1327, -inf
    %1334 = vmax.xlane.f32.xlu0 %v1333
    %v1335 = vpop.xlane.xlu0 %1334
    %v1336 = vsub.f32 %v1304, %v1332
    %v1337 = vsub.f32 %v1327, %v1335
    %v1338 = vmul.f32 %v1336, 1.442695
    %v1339 = vpow.pop %v1338
    %v1340 = vmul.f32 %v1337, 1.442695
    %v1341 = vpow.pop %v1340
    %v1342 = vsel %vm124, %v1339, 0.0
    %1343 = vadd.xlane.f32.xlu0 %v1342
    %v1344 = vpop.xlane.xlu0 %1343
    %v1345 = vsel %vm124, %v1341, 0.0
    %1346 = vadd.xlane.f32.xlu0 %v1345
    %v1347 = vpop.xlane.xlu0 %1346
    %v1348 = vrcp.pop %v1344
    %v1349 = vrcp.pop %v1347
    %v1350 = vmul.f32 %v1339, %v1348
    %v1351 = vmul.f32 %v1341, %v1349
    %v1352 = vpack.c.bf16 %v1350, %v1350
    %v1353 = vpack.c.bf16 %v1351, %v1351
    %1354 = vrot.lane.b32.xlu0 %v877, 40
    %v1355 = vpop.permute.xlu0 %1354
    %v1357 = vsel %vm124, %v1352, 0
    %v1360 = vsel %vm197, %v1355, 0
    %1362 = vmatpush.bf16.msra.mxu0 0
    %1363 = vmatpush.bf16.msra.mxu0 0
    %1364 = vmatpush.bf16.msra.mxu0 0
    %1365 = vmatpush.bf16.msra.mxu0 0
    %1366 = vmatpush.bf16.msra.mxu0 0
    %1367 = vmatpush.bf16.msra.mxu0 0
    %1368 = vmatpush.bf16.msra.mxu0 0
    %1369 = vmatpush.bf16.msra.mxu0 %v1360
    %1370 = vmatmul.bf16.gmra.mxu0 %v1357
    %v1371 = vpop.f32.mrf.mxu0
    %v1372 = vadd.f32 0.0, %v1371
    %v1373 = vpop.f32.mrf.mxu0
    %1374 = vdwg.mxu0
    %1375 = vrot.lane.b32.xlu0 %v901, 40
    %v1376 = vpop.permute.xlu0 %1375
    %v1378 = vsel %vm124, %v1353, 0
    %v1381 = vsel %vm197, %v1376, 0
    %1383 = vmatpush.bf16.msra.mxu0 0
    %1384 = vmatpush.bf16.msra.mxu0 0
    %1385 = vmatpush.bf16.msra.mxu0 0
    %1386 = vmatpush.bf16.msra.mxu0 0
    %1387 = vmatpush.bf16.msra.mxu0 0
    %1388 = vmatpush.bf16.msra.mxu0 0
    %1389 = vmatpush.bf16.msra.mxu0 0
    %1390 = vmatpush.bf16.msra.mxu0 %v1381
    %1391 = vmatmul.bf16.gmra.mxu0 %v1378
    %v1392 = vpop.f32.mrf.mxu0
    %v1393 = vadd.f32 0.0, %v1392
    %v1394 = vpop.f32.mrf.mxu0
    %1395 = vdwg.mxu0
    %v1396 = vld [vmem:[#allocation4 + $0xf8] sm:$0xff]
    %v1397 = vpack.c.bf16 %v1396, %v1396
    %v1398 = vpack.c.bf16 %v1393, %v1372
    %v1400 = vsel %vm124, %v1398, 0
    %v1403 = vsel %vm197, %v1397, 0
    %1405 = vmatpush.bf16.msra.mxu0 0
    %1406 = vmatpush.bf16.msra.mxu0 0
    %1407 = vmatpush.bf16.msra.mxu0 0
    %1408 = vmatpush.bf16.msra.mxu0 0
    %1409 = vmatpush.bf16.msra.mxu0 0
    %1410 = vmatpush.bf16.msra.mxu0 0
    %1411 = vmatpush.bf16.msra.mxu0 0
    %1412 = vmatpush.bf16.msra.mxu0 %v1403
    %1413 = vmatmul.bf16.gmra.mxu0 %v1400
    %v1414 = vpop.f32.mrf.mxu0
    %v1415 = vadd.f32 0.0, %v1414
    %v1416 = vpop.f32.mrf.mxu0
    %v1417 = vadd.f32 0.0, %v1416
    %1418 = vdwg.mxu0
    %v1419 = vadd.f32 %v1282, %v1415
    %v1420 = vadd.f32 %v1283, %v1417
    %v1421 = vld [vmem:[#allocation6 + $0xa] sm:$0x1]
    %v1422 = vperm.slane %v1421, 0
    %v1423 = vadd.f32 %v1419, %v1422
    %v1424 = vadd.f32 %v1420, %v1422
    %v1425 = vadd.f32 %v845, %v1423
    %v1426 = vadd.f32 %v846, %v1424
    %v1427 = vld [vmem:[#allocation6 + $0xb] sm:$0x1]
    %v1428 = vld [vmem:[#allocation6 + $0xc] sm:$0x1]
    %v1429 = vsel %vm73, %v1425, 0.0
    %1430 = vadd.xlane.f32.xlu0 %v1429
    %v1431 = vpop.xlane.xlu0 %1430
    %v1432 = vsel %vm73, %v1426, 0.0
    %1433 = vadd.xlane.f32.xlu0 %v1432
    %v1434 = vpop.xlane.xlu0 %1433
    %v1435 = vmul.f32 %v1431, %v687
    %v1436 = vmul.f32 %v1434, %v687
    %v1437 = vsub.f32 %v1425, %v1435
    %v1438 = vsub.f32 %v1426, %v1436
    %v1439 = vmul.f32 %v1437, %v1437
    %v1440 = vmul.f32 %v1438, %v1438
    %v1441 = vsel %vm73, %v1439, 0.0
    %1442 = vadd.xlane.f32.xlu0 %v1441
    %v1443 = vpop.xlane.xlu0 %1442
    %v1444 = vsel %vm73, %v1440, 0.0
    %1445 = vadd.xlane.f32.xlu0 %v1444
    %v1446 = vpop.xlane.xlu0 %1445
    %v1447 = vmul.f32 %v1443, %v687
    %v1448 = vmul.f32 %v1446, %v687
    %v1449 = vadd.f32 %v1447, 1e-05
    %v1450 = vadd.f32 %v1448, 1e-05
    %v1451 = vrsqrt.pop %v1449
    %v1452 = vmul.f32 %v1451, %v1449
    %v1453 = vmul.f32 %v1452, %v1451
    %v1454 = vmul.f32 0.5, %v1453
    %v1455 = vsub.f32 1.5, %v1454
    %v1456 = vmul.f32 %v1451, %v1455
    %vm1457 = vweird.f32 %v1449
    %vm1458 = vweird.f32 %v1451
    %vm1459 = vmor %vm1457, %vm1458
    %v1460 = vsel %vm1459, %v1451, %v1456
    %v1461 = vrsqrt.pop %v1450
    %v1462 = vmul.f32 %v1461, %v1450
    %v1463 = vmul.f32 %v1462, %v1461
    %v1464 = vmul.f32 0.5, %v1463
    %v1465 = vsub.f32 1.5, %v1464
    %v1466 = vmul.f32 %v1461, %v1465
    %vm1467 = vweird.f32 %v1450
    %vm1468 = vweird.f32 %v1461
    %vm1469 = vmor %vm1467, %vm1468
    %v1470 = vsel %vm1469, %v1461, %v1466
    %v1471 = vmul.f32 %v1437, %v1460
    %v1472 = vmul.f32 %v1438, %v1470
    %v1473 = vperm.slane %v1427, 0
    %v1474 = vmul.f32 %v1471, %v1473
    %v1475 = vmul.f32 %v1472, %v1473
    %v1476 = vperm.slane %v1428, 0
    %v1477 = vadd.f32 %v1474, %v1476
    %v1478 = vadd.f32 %v1475, %v1476
    %v1479 = vpack.c.bf16 %v1478, %v1477
    %v1480 = vld [vmem:[#allocation4 + $0x100] sm:$0xff]
    %v1481 = vld [vmem:[#allocation4 + $0x108] sm:$0xff]
    %v1482 = vld [vmem:[#allocation4 + $0x110] sm:$0xff]
    %v1483 = vld [vmem:[#allocation4 + $0x118] sm:$0xff]
    %v1484 = vpack.c.bf16 %v1481, %v1480
    %v1485 = vpack.c.bf16 %v1483, %v1482
    %v1486 = vld [vmem:[#allocation6 + $0xd] sm:$0x1]
    %v1487 = vperm.slane %v1486, 0
    %v1489 = vsel %vm73, %v1479, 0
    %1491 = vmatpush.bf16.msra.mxu0 0
    %1492 = vmatpush.bf16.msra.mxu0 0
    %1493 = vmatpush.bf16.msra.mxu0 0
    %1494 = vmatpush.bf16.msra.mxu0 0
    %1495 = vmatpush.bf16.msra.mxu0 0
    %1496 = vmatpush.bf16.msra.mxu0 0
    %1497 = vmatpush.bf16.msra.mxu0 %v1485
    %1498 = vmatpush.bf16.msra.mxu0 %v1484
    %1499 = vmatmul.bf16.gmra.mxu0 %v1489
    %v1500 = vpop.f32.mrf.mxu0
    %v1501 = vadd.f32 %v1487, %v1500
    %v1502 = vpop.f32.mrf.mxu0
    %v1503 = vadd.f32 %v1487, %v1502
    %1504 = vdwg.mxu0
    %v1505 = vmax.f32 %v1501, 0.0
    %v1506 = vmax.f32 %v1503, 0.0
    %v1507 = vpack.c.bf16 %v1506, %v1505
    %v1508 = vld [vmem:[#allocation4 + $0x120] sm:$0xff]
    %v1509 = vld [vmem:[#allocation4 + $0x128] sm:$0xff]
    %v1510 = vld [vmem:[#allocation4 + $0x130] sm:$0xff]
    %v1511 = vld [vmem:[#allocation4 + $0x138] sm:$0xff]
    %v1512 = vld [vmem:[#allocation4 + $0x140] sm:$0xff]
    %v1513 = vld [vmem:[#allocation4 + $0x148] sm:$0xff]
    %v1514 = vld [vmem:[#allocation4 + $0x150] sm:$0xff]
    %v1515 = vld [vmem:[#allocation4 + $0x158] sm:$0xff]
    %v1516 = vpack.c.bf16 %v1509, %v1508
    %v1517 = vpack.c.bf16 %v1511, %v1510
    %v1518 = vpack.c.bf16 %v1513, %v1512
    %v1519 = vpack.c.bf16 %v1515, %v1514
    %v1520 = vld [vmem:[#allocation6 + $0xe] sm:$0x1]
    %v1521 = vperm.slane %v1520, 0
    %v1523 = vsel %vm775, %v1507, 0
    %1525 = vmatpush.bf16.msra.mxu0 0
    %1526 = vmatpush.bf16.msra.mxu0 0
    %1527 = vmatpush.bf16.msra.mxu0 0
    %1528 = vmatpush.bf16.msra.mxu0 0
    %1529 = vmatpush.bf16.msra.mxu0 %v1519
    %1530 = vmatpush.bf16.msra.mxu0 %v1518
    %1531 = vmatpush.bf16.msra.mxu0 %v1517
    %1532 = vmatpush.bf16.msra.mxu0 %v1516
    %1533 = vmatmul.bf16.gmra.mxu0 %v1523
    %v1534 = vpop.f32.mrf.mxu0
    %v1535 = vadd.f32 %v1521, %v1534
    %v1536 = vpop.f32.mrf.mxu0
    %v1537 = vadd.f32 %v1521, %v1536
    %1538 = vdwg.mxu0
    %v1539 = vadd.f32 %v1477, %v1535
    %v1540 = vadd.f32 %v1478, %v1537
    %v1541 = vld [vmem:[#allocation6 + $0xf] sm:$0x1]
    %v1542 = vld [vmem:[#allocation6 + $0x10] sm:$0x1]
    %v1543 = vsel %vm73, %v1539, 0.0
    %1544 = vadd.xlane.f32.xlu0 %v1543
    %v1545 = vpop.xlane.xlu0 %1544
    %v1546 = vsel %vm73, %v1540, 0.0
    %1547 = vadd.xlane.f32.xlu0 %v1546
    %v1548 = vpop.xlane.xlu0 %1547
    %v1549 = vmul.f32 %v1545, %v687
    %v1550 = vmul.f32 %v1548, %v687
    %v1551 = vsub.f32 %v1539, %v1549
    %v1552 = vsub.f32 %v1540, %v1550
    %v1553 = vmul.f32 %v1551, %v1551
    %v1554 = vmul.f32 %v1552, %v1552
    %v1555 = vsel %vm73, %v1553, 0.0
    %1556 = vadd.xlane.f32.xlu0 %v1555
    %v1557 = vpop.xlane.xlu0 %1556
    %v1558 = vsel %vm73, %v1554, 0.0
    %1559 = vadd.xlane.f32.xlu0 %v1558
    %v1560 = vpop.xlane.xlu0 %1559
    %v1561 = vmul.f32 %v1557, %v687
    %v1562 = vmul.f32 %v1560, %v687
    %v1563 = vadd.f32 %v1561, 1e-05
    %v1564 = vadd.f32 %v1562, 1e-05
    %v1565 = vrsqrt.pop %v1563
    %v1566 = vmul.f32 %v1565, %v1563
    %v1567 = vmul.f32 %v1566, %v1565
    %v1568 = vmul.f32 0.5, %v1567
    %v1569 = vsub.f32 1.5, %v1568
    %v1570 = vmul.f32 %v1565, %v1569
    %vm1571 = vweird.f32 %v1563
    %vm1572 = vweird.f32 %v1565
    %vm1573 = vmor %vm1571, %vm1572
    %v1574 = vsel %vm1573, %v1565, %v1570
    %v1575 = vrsqrt.pop %v1564
    %v1576 = vmul.f32 %v1575, %v1564
    %v1577 = vmul.f32 %v1576, %v1575
    %v1578 = vmul.f32 0.5, %v1577
    %v1579 = vsub.f32 1.5, %v1578
    %v1580 = vmul.f32 %v1575, %v1579
    %vm1581 = vweird.f32 %v1564
    %vm1582 = vweird.f32 %v1575
    %vm1583 = vmor %vm1581, %vm1582
    %v1584 = vsel %vm1583, %v1575, %v1580
    %v1585 = vmul.f32 %v1551, %v1574
    %v1586 = vmul.f32 %v1552, %v1584
    %v1587 = vperm.slane %v1541, 0
    %v1588 = vmul.f32 %v1585, %v1587
    %v1589 = vmul.f32 %v1586, %v1587
    %v1590 = vperm.slane %v1542, 0
    %v1591 = vadd.f32 %v1588, %v1590
    %v1592 = vadd.f32 %v1589, %v1590
    %v1593 = vld [vmem:[#allocation6 + $0x11] sm:$0x1]
    %v1594 = vperm.slane %v1593, 0
    %v1595 = vmul.f32 %v1591, %v1594
    %v1596 = vmul.f32 %v1592, %v1594
    %v1597 = vsel %vm73, %v1595, 0.0
    %1598 = vadd.xlane.f32.xlu0 %v1597
    %v1599 = vpop.xlane.xlu0 %1598
    %v1600 = vsel %vm73, %v1596, 0.0
    %1601 = vadd.xlane.f32.xlu0 %v1600
    %v1602 = vpop.xlane.xlu0 %1601
    %v1603 = vrot.slane %v1599, 4
    %v1604 = vmax.f32 %v1599, %v1603
    %v1605 = vrot.slane %v1604, 2
    %v1606 = vmax.f32 %v1604, %v1605
    %v1607 = vrot.slane %v1606, 1
    %v1608 = vmax.f32 %v1606, %v1607
    %v1609 = vrot.slane %v1602, 4
    %v1610 = vmax.f32 %v1602, %v1609
    %v1611 = vrot.slane %v1610, 2
    %v1612 = vmax.f32 %v1610, %v1611
    %v1613 = vrot.slane %v1612, 1
    %v1614 = vmax.f32 %v1612, %v1613
    %v1615 = vsub.f32 %v1599, %v1608
    %v1616 = vsub.f32 %v1602, %v1614
    %v1617 = vmul.f32 %v1615, 1.442695
    %v1618 = vpow.pop %v1617
    %v1619 = vmul.f32 %v1616, 1.442695
    %v1620 = vpow.pop %v1619
    %v1621 = vrot.slane %v1618, 4
    %v1622 = vadd.f32 %v1618, %v1621
    %v1623 = vrot.slane %v1622, 2
    %v1624 = vadd.f32 %v1622, %v1623
    %v1625 = vrot.slane %v1624, 1
    %v1626 = vadd.f32 %v1624, %v1625
    %v1627 = vrot.slane %v1620, 4
    %v1628 = vadd.f32 %v1620, %v1627
    %v1629 = vrot.slane %v1628, 2
    %v1630 = vadd.f32 %v1628, %v1629
    %v1631 = vrot.slane %v1630, 1
    %v1632 = vadd.f32 %v1630, %v1631
    %v1633 = vrcp.pop %v1626
    %v1634 = vrcp.pop %v1632
    %v1635 = vmul.f32 %v1618, %v1633
    %v1636 = vmul.f32 %v1620, %v1634
    %v1637 = vmul.f32 %v1635, %v1591
    %v1638 = vmul.f32 %v1636, %v1592
    %v1639 = vsel %vm73, %v1637, 0.0
    %v1640 = vrot.slane %v1639, 4
    %v1641 = vadd.f32 %v1639, %v1640
    %v1642 = vrot.slane %v1641, 2
    %v1643 = vadd.f32 %v1641, %v1642
    %v1644 = vrot.slane %v1643, 1
    %v1645 = vadd.f32 %v1643, %v1644
    %v1646 = vsel %vm73, %v1638, 0.0
    %v1647 = vrot.slane %v1646, 4
    %v1648 = vadd.f32 %v1646, %v1647
    %v1649 = vrot.slane %v1648, 2
    %v1650 = vadd.f32 %v1648, %v1649
    %v1651 = vrot.slane %v1650, 1
    %v1652 = vadd.f32 %v1650, %v1651
    %v1653 = vpack.c.bf16 %v1645, %v1645
    %v1654 = vpack.c.bf16 %v1652, %v1652
    %v1655 = vld [vmem:[#allocation4 + $0x160] sm:$0xff]
    %v1656 = vld [vmem:[#allocation4 + $0x168] sm:$0xff]
    %v1657 = vld [vmem:[#allocation4 + $0x170] sm:$0xff]
    %v1658 = vld [vmem:[#allocation4 + $0x178] sm:$0xff]
    %v1659 = vpack.c.bf16 %v1656, %v1655
    %v1660 = vpack.c.bf16 %v1658, %v1657
    %v1663 = vunpack.c.l.b16 %v1653
    %v1664 = vunpack.c.l.b16 %v1654
    %vm1665 = vcmask 1041409
    %v1666 = vsel %vm1665, %v1664, %v1663
    %v1667 = vpack.c.b16 %v1666, %v1666
    %v1669 = vsel %vm73, %v1667, 0
    %1671 = vmatpush.bf16.msra.mxu0 0
    %1672 = vmatpush.bf16.msra.mxu0 0
    %1673 = vmatpush.bf16.msra.mxu0 0
    %1674 = vmatpush.bf16.msra.mxu0 0
    %1675 = vmatpush.bf16.msra.mxu0 0
    %1676 = vmatpush.bf16.msra.mxu0 0
    %1677 = vmatpush.bf16.msra.mxu0 %v1660
    %1678 = vmatpush.bf16.msra.mxu0 %v1659
    %1679 = vmatmul.bf16.gmra.mxu0 %v1669
    %v1680 = vpop.f32.mrf.mxu0
    %v1681 = vadd.f32 0.0, %v1680
    %v1682 = vpop.f32.mrf.mxu0
    %1683 = vdwg.mxu0
    %v1684 = vld [vmem:[#allocation6 + $0x12] sm:$0x1]
    %v1685 = vperm.slane %v1684, 0
    %v1686 = vadd.f32 %v1681, %v1685
    %v1687 = vld [vmem:[#allocation6 + $0x13] sm:$0x1]
    %v1688 = vld [vmem:[#allocation6 + $0x14] sm:$0x1]
    %vm1689 = vcmask 254976
    %v1690 = vsel %vm1689, %v1686, 0.0
    %1691 = vadd.xlane.f32.xlu0 %v1690
    %v1692 = vpop.xlane.xlu0 %1691
    %v1693 = vmul.f32 %v1692, %v687
    %v1694 = vsub.f32 %v1686, %v1693
    %v1695 = vmul.f32 %v1694, %v1694
    %v1696 = vsel %vm1689, %v1695, 0.0
    %1697 = vadd.xlane.f32.xlu0 %v1696
    %v1698 = vpop.xlane.xlu0 %1697
    %v1699 = vmul.f32 %v1698, %v687
    %v1700 = vadd.f32 %v1699, 1e-05
    %v1701 = vrsqrt.pop %v1700
    %v1702 = vmul.f32 %v1701, %v1700
    %v1703 = vmul.f32 %v1702, %v1701
    %v1704 = vmul.f32 0.5, %v1703
    %v1705 = vsub.f32 1.5, %v1704
    %v1706 = vmul.f32 %v1701, %v1705
    %vm1707 = vweird.f32 %v1700
    %vm1708 = vweird.f32 %v1701
    %vm1709 = vmor %vm1707, %vm1708
    %v1710 = vsel %vm1709, %v1701, %v1706
    %v1711 = vmul.f32 %v1694, %v1710
    %v1712 = vperm.slane %v1687, 0
    %v1713 = vmul.f32 %v1711, %v1712
    %v1714 = vperm.slane %v1688, 0
    %v1715 = vadd.f32 %v1713, %v1714
    %v1716 = vmax.f32 %v1715, 0.0
    %v1717 = vpack.c.bf16 %v1716, %v1716
    %v1718 = vld [vmem:[#allocation4 + $0x200] sm:$0xff]
    %v1719 = vld [vmem:[#allocation4 + $0x208] sm:$0xff]
    %v1720 = vld [vmem:[#allocation4 + $0x210] sm:$0xff]
    %v1721 = vld [vmem:[#allocation4 + $0x218] sm:$0xff]
    %v1722 = vpack.c.bf16 %v1719, %v1718
    %v1723 = vpack.c.bf16 %v1721, %v1720
    %v1724 = vld [vmem:[#allocation6 + $0x15] sm:$0x1]
    %v1725 = vperm.slane %v1724, 0
    %v1727 = vsel %vm73, %v1717, 0
    %1729 = vmatpush.bf16.msra.mxu0 0
    %1730 = vmatpush.bf16.msra.mxu0 0
    %1731 = vmatpush.bf16.msra.mxu0 0
    %1732 = vmatpush.bf16.msra.mxu0 0
    %1733 = vmatpush.bf16.msra.mxu0 0
    %1734 = vmatpush.bf16.msra.mxu0 0
    %1735 = vmatpush.bf16.msra.mxu0 %v1723
    %1736 = vmatpush.bf16.msra.mxu0 %v1722
    %1737 = vmatmul.bf16.gmra.mxu0 %v1727
    %v1738 = vpop.f32.mrf.mxu0
    %v1739 = vadd.f32 %v1725, %v1738
    %v1740 = vpop.f32.mrf.mxu0
    %1741 = vdwg.mxu0
    %vm1742 = vcmask 58368
    %1743 = vst.msk [vmem:[%s3] sm:$0x3] %vm1742, %v1739
    %v1744 = vsel %vm1742, %v1739, -inf
    %1745 = vmax.xlane.f32.xlu0 %v1744
    %v1746 = vpop.xlane.xlu0 %1745
    %v1747 = vsub.f32 %v1739, %v1746
    %v1748 = vmul.f32 %v1747, 1.442695
    %v1749 = vpow.pop %v1748
    %v1750 = vsel %vm1742, %v1749, 0.0
    %1751 = vadd.xlane.f32.xlu0 %v1750
    %v1752 = vpop.xlane.xlu0 %1751
    %v1753 = vrcp.pop %v1752
    %v1754 = vmul.f32 %v1749, %v1753
    %v1755 = vld [vmem:[#allocation6 + $0x16] sm:$0x1]
    %v1756 = vperm.slane %v1755, 0
    %1758 = vrot.lane.b32.xlu0 %v1756, 32
    %v1759 = vpop.permute.xlu0 %1758
    %v1761 = vadd.f32 %v1681, %v1759
    %v1762 = vpack.c.bf16 %v1754, %v1754
    %v1763 = vld [vmem:[#allocation4 + $0x1a0] sm:$0xff]
    %v1764 = vpack.c.bf16 %v1763, %v1763
    %v1766 = vsel %vm124, %v1762, 0
    %v1769 = vsel %vm197, %v1764, 0
    %1771 = vmatpush.bf16.msra.mxu0 0
    %1772 = vmatpush.bf16.msra.mxu0 0
    %1773 = vmatpush.bf16.msra.mxu0 0
    %1774 = vmatpush.bf16.msra.mxu0 0
    %1775 = vmatpush.bf16.msra.mxu0 0
    %1776 = vmatpush.bf16.msra.mxu0 0
    %1777 = vmatpush.bf16.msra.mxu0 0
    %1778 = vmatpush.bf16.msra.mxu0 %v1769
    %1779 = vmatmul.bf16.gmra.mxu0 %v1766
    %v1780 = vpop.f32.mrf.mxu0
    %v1781 = vadd.f32 0.0, %v1780
    %v1782 = vpop.f32.mrf.mxu0
    %1783 = vdwg.mxu0
    %1785 = vrot.lane.b32.xlu0 %v1781, 32
    %v1786 = vpop.permute.xlu0 %1785
    %v1788 = vadd.f32 %v1761, %v1786
    %v1789 = vld [vmem:[#allocation6 + $0x17] sm:$0x1]
    %v1790 = vld [vmem:[#allocation6 + $0x18] sm:$0x1]
    %1792 = vrot.lane.b32.xlu0 %v1788, 96
    %v1793 = vpop.permute.xlu0 %1792
    %v1795 = vsel %vm1689, %v1793, 0.0
    %1796 = vadd.xlane.f32.xlu0 %v1795
    %v1797 = vpop.xlane.xlu0 %1796
    %v1798 = vmul.f32 %v1797, %v687
    %v1799 = vsub.f32 %v1788, %v1798
    %v1800 = vmul.f32 %v1799, %v1799
    %1802 = vrot.lane.b32.xlu0 %v1800, 96
    %v1803 = vpop.permute.xlu0 %1802
    %v1805 = vsel %vm1689, %v1803, 0.0
    %1806 = vadd.xlane.f32.xlu0 %v1805
    %v1807 = vpop.xlane.xlu0 %1806
    %v1808 = vmul.f32 %v1807, %v687
    %v1809 = vadd.f32 %v1808, 1e-05
    %v1810 = vrsqrt.pop %v1809
    %v1811 = vmul.f32 %v1810, %v1809
    %v1812 = vmul.f32 %v1811, %v1810
    %v1813 = vmul.f32 0.5, %v1812
    %v1814 = vsub.f32 1.5, %v1813
    %v1815 = vmul.f32 %v1810, %v1814
    %vm1816 = vweird.f32 %v1809
    %vm1817 = vweird.f32 %v1810
    %vm1818 = vmor %vm1816, %vm1817
    %v1819 = vsel %vm1818, %v1810, %v1815
    %v1820 = vmul.f32 %v1799, %v1819
    %v1821 = vperm.slane %v1789, 0
    %1823 = vrot.lane.b32.xlu0 %v1821, 32
    %v1824 = vpop.permute.xlu0 %1823
    %v1826 = vmul.f32 %v1820, %v1824
    %v1827 = vperm.slane %v1790, 0
    %1829 = vrot.lane.b32.xlu0 %v1827, 32
    %v1830 = vpop.permute.xlu0 %1829
    %v1832 = vadd.f32 %v1826, %v1830
    %v1833 = vmax.f32 %v1832, 0.0
    %v1834 = vpack.c.bf16 %v1833, %v1833
    %v1835 = vld [vmem:[#allocation4 + $0x220] sm:$0xff]
    %v1836 = vld [vmem:[#allocation4 + $0x228] sm:$0xff]
    %v1837 = vld [vmem:[#allocation4 + $0x230] sm:$0xff]
    %v1838 = vld [vmem:[#allocation4 + $0x238] sm:$0xff]
    %v1839 = vpack.c.bf16 %v1836, %v1835
    %v1840 = vpack.c.bf16 %v1838, %v1837
    %v1841 = vld [vmem:[#allocation6 + $0x19] sm:$0x1]
    %v1842 = vperm.slane %v1841, 0
    %1844 = vrot.lane.b32.xlu0 %v1834, 96
    %v1845 = vpop.permute.xlu0 %1844
    %v1847 = vsel %vm73, %v1845, 0
    %1849 = vmatpush.bf16.msra.mxu0 0
    %1850 = vmatpush.bf16.msra.mxu0 0
    %1851 = vmatpush.bf16.msra.mxu0 0
    %1852 = vmatpush.bf16.msra.mxu0 0
    %1853 = vmatpush.bf16.msra.mxu0 0
    %1854 = vmatpush.bf16.msra.mxu0 0
    %1855 = vmatpush.bf16.msra.mxu0 %v1840
    %1856 = vmatpush.bf16.msra.mxu0 %v1839
    %1857 = vmatmul.bf16.gmra.mxu0 %v1847
    %v1858 = vpop.f32.mrf.mxu0
    %v1859 = vadd.f32 %v1842, %v1858
    %v1860 = vpop.f32.mrf.mxu0
    %1861 = vdwg.mxu0
    %1863 = vrot.lane.b32.xlu0 %v1859, 8
    %v1864 = vpop.permute.xlu0 %1863
    %vm1866 = vcmask 123968
    %1867 = vst.msk [vmem:[%s3] sm:$0x3] %vm1866, %v1864
    %v1868 = vsel %vm1742, %v1859, -inf
    %1869 = vmax.xlane.f32.xlu0 %v1868
    %v1870 = vpop.xlane.xlu0 %1869
    %v1871 = vsub.f32 %v1859, %v1870
    %v1872 = vmul.f32 %v1871, 1.442695
    %v1873 = vpow.pop %v1872
    %v1874 = vsel %vm1742, %v1873, 0.0
    %1875 = vadd.xlane.f32.xlu0 %v1874
    %v1876 = vpop.xlane.xlu0 %1875
    %v1877 = vrcp.pop %v1876
    %v1878 = vmul.f32 %v1873, %v1877
    %v1879 = vld [vmem:[#allocation6 + $0x1a] sm:$0x1]
    %v1880 = vperm.slane %v1879, 0
    %1882 = vrot.lane.b32.xlu0 %v1880, 64
    %v1883 = vpop.permute.xlu0 %1882
    %v1885 = vadd.f32 %v1681, %v1883
    %v1886 = vpack.c.bf16 %v1878, %v1878
    %v1887 = vld [vmem:[#allocation4 + $0x1c0] sm:$0xff]
    %v1888 = vpack.c.bf16 %v1887, %v1887
    %v1890 = vsel %vm124, %v1886, 0
    %v1893 = vsel %vm197, %v1888, 0
    %1895 = vmatpush.bf16.msra.mxu0 0
    %1896 = vmatpush.bf16.msra.mxu0 0
    %1897 = vmatpush.bf16.msra.mxu0 0
    %1898 = vmatpush.bf16.msra.mxu0 0
    %1899 = vmatpush.bf16.msra.mxu0 0
    %1900 = vmatpush.bf16.msra.mxu0 0
    %1901 = vmatpush.bf16.msra.mxu0 0
    %1902 = vmatpush.bf16.msra.mxu0 %v1893
    %1903 = vmatmul.bf16.gmra.mxu0 %v1890
    %v1904 = vpop.f32.mrf.mxu0
    %v1905 = vadd.f32 0.0, %v1904
    %v1906 = vpop.f32.mrf.mxu0
    %1907 = vdwg.mxu0
    %1909 = vrot.lane.b32.xlu0 %v1905, 64
    %v1910 = vpop.permute.xlu0 %1909
    %v1912 = vadd.f32 %v1885, %v1910
    %v1913 = vld [vmem:[#allocation6 + $0x1b] sm:$0x1]
    %v1914 = vld [vmem:[#allocation6 + $0x1c] sm:$0x1]
    %1916 = vrot.lane.b32.xlu0 %v1912, 64
    %v1917 = vpop.permute.xlu0 %1916
    %v1919 = vsel %vm1689, %v1917, 0.0
    %1920 = vadd.xlane.f32.xlu0 %v1919
    %v1921 = vpop.xlane.xlu0 %1920
    %v1922 = vmul.f32 %v1921, %v687
    %v1923 = vsub.f32 %v1912, %v1922
    %v1924 = vmul.f32 %v1923, %v1923
    %1926 = vrot.lane.b32.xlu0 %v1924, 64
    %v1927 = vpop.permute.xlu0 %1926
    %v1929 = vsel %vm1689, %v1927, 0.0
    %1930 = vadd.xlane.f32.xlu0 %v1929
    %v1931 = vpop.xlane.xlu0 %1930
    %v1932 = vmul.f32 %v1931, %v687
    %v1933 = vadd.f32 %v1932, 1e-05
    %v1934 = vrsqrt.pop %v1933
    %v1935 = vmul.f32 %v1934, %v1933
    %v1936 = vmul.f32 %v1935, %v1934
    %v1937 = vmul.f32 0.5, %v1936
    %v1938 = vsub.f32 1.5, %v1937
    %v1939 = vmul.f32 %v1934, %v1938
    %vm1940 = vweird.f32 %v1933
    %vm1941 = vweird.f32 %v1934
    %vm1942 = vmor %vm1940, %vm1941
    %v1943 = vsel %vm1942, %v1934, %v1939
    %v1944 = vmul.f32 %v1923, %v1943
    %v1945 = vperm.slane %v1913, 0
    %1947 = vrot.lane.b32.xlu0 %v1945, 64
    %v1948 = vpop.permute.xlu0 %1947
    %v1950 = vmul.f32 %v1944, %v1948
    %v1951 = vperm.slane %v1914, 0
    %1953 = vrot.lane.b32.xlu0 %v1951, 64
    %v1954 = vpop.permute.xlu0 %1953
    %v1956 = vadd.f32 %v1950, %v1954
    %v1957 = vmax.f32 %v1956, 0.0
    %v1958 = vpack.c.bf16 %v1957, %v1957
    %v1959 = vld [vmem:[#allocation4 + $0x240] sm:$0xff]
    %v1960 = vld [vmem:[#allocation4 + $0x248] sm:$0xff]
    %v1961 = vld [vmem:[#allocation4 + $0x250] sm:$0xff]
    %v1962 = vld [vmem:[#allocation4 + $0x258] sm:$0xff]
    %v1963 = vpack.c.bf16 %v1960, %v1959
    %v1964 = vpack.c.bf16 %v1962, %v1961
    %v1965 = vld [vmem:[#allocation6 + $0x1d] sm:$0x1]
    %v1966 = vperm.slane %v1965, 0
    %1968 = vrot.lane.b32.xlu0 %v1958, 64
    %v1969 = vpop.permute.xlu0 %1968
    %v1971 = vsel %vm73, %v1969, 0
    %1973 = vmatpush.bf16.msra.mxu0 0
    %1974 = vmatpush.bf16.msra.mxu0 0
    %1975 = vmatpush.bf16.msra.mxu0 0
    %1976 = vmatpush.bf16.msra.mxu0 0
    %1977 = vmatpush.bf16.msra.mxu0 0
    %1978 = vmatpush.bf16.msra.mxu0 0
    %1979 = vmatpush.bf16.msra.mxu0 %v1964
    %1980 = vmatpush.bf16.msra.mxu0 %v1963
    %1981 = vmatmul.bf16.gmra.mxu0 %v1971
    %v1982 = vpop.f32.mrf.mxu0
    %v1983 = vadd.f32 %v1966, %v1982
    %v1984 = vpop.f32.mrf.mxu0
    %1985 = vdwg.mxu0
    %1987 = vrot.lane.b32.xlu0 %v1983, 16
    %v1988 = vpop.permute.xlu0 %1987
    %vm1990 = vcmask 189568
    %1991 = vst.msk [vmem:[%s3] sm:$0x3] %vm1990, %v1988
    %v1992 = vsel %vm1742, %v1983, -inf
    %1993 = vmax.xlane.f32.xlu0 %v1992
    %v1994 = vpop.xlane.xlu0 %1993
    %v1995 = vsub.f32 %v1983, %v1994
    %v1996 = vmul.f32 %v1995, 1.442695
    %v1997 = vpow.pop %v1996
    %v1998 = vsel %vm1742, %v1997, 0.0
    %1999 = vadd.xlane.f32.xlu0 %v1998
    %v2000 = vpop.xlane.xlu0 %1999
    %v2001 = vrcp.pop %v2000
    %v2002 = vmul.f32 %v1997, %v2001
    %v2003 = vld [vmem:[#allocation6 + $0x1e] sm:$0x1]
    %v2004 = vperm.slane %v2003, 0
    %2006 = vrot.lane.b32.xlu0 %v2004, 96
    %v2007 = vpop.permute.xlu0 %2006
    %v2009 = vadd.f32 %v1681, %v2007
    %v2010 = vpack.c.bf16 %v2002, %v2002
    %v2011 = vld [vmem:[#allocation4 + $0x1e0] sm:$0xff]
    %v2012 = vpack.c.bf16 %v2011, %v2011
    %v2014 = vsel %vm124, %v2010, 0
    %v2017 = vsel %vm197, %v2012, 0
    %2019 = vmatpush.bf16.msra.mxu0 0
    %2020 = vmatpush.bf16.msra.mxu0 0
    %2021 = vmatpush.bf16.msra.mxu0 0
    %2022 = vmatpush.bf16.msra.mxu0 0
    %2023 = vmatpush.bf16.msra.mxu0 0
    %2024 = vmatpush.bf16.msra.mxu0 0
    %2025 = vmatpush.bf16.msra.mxu0 0
    %2026 = vmatpush.bf16.msra.mxu0 %v2017
    %2027 = vmatmul.bf16.gmra.mxu0 %v2014
    %v2028 = vpop.f32.mrf.mxu0
    %v2029 = vadd.f32 0.0, %v2028
    %v2030 = vpop.f32.mrf.mxu0
    %2031 = vdwg.mxu0
    %2033 = vrot.lane.b32.xlu0 %v2029, 96
    %v2034 = vpop.permute.xlu0 %2033
    %v2036 = vadd.f32 %v2009, %v2034
    %v2037 = vld [vmem:[#allocation6 + $0x1f] sm:$0x1]
    %v2038 = vld [vmem:[#allocation6 + $0x20] sm:$0x1]
    %2040 = vrot.lane.b32.xlu0 %v2036, 32
    %v2041 = vpop.permute.xlu0 %2040
    %v2043 = vsel %vm1689, %v2041, 0.0
    %2044 = vadd.xlane.f32.xlu0 %v2043
    %v2045 = vpop.xlane.xlu0 %2044
    %v2046 = vmul.f32 %v2045, %v687
    %v2047 = vsub.f32 %v2036, %v2046
    %v2048 = vmul.f32 %v2047, %v2047
    %2050 = vrot.lane.b32.xlu0 %v2048, 32
    %v2051 = vpop.permute.xlu0 %2050
    %v2053 = vsel %vm1689, %v2051, 0.0
    %2054 = vadd.xlane.f32.xlu0 %v2053
    %v2055 = vpop.xlane.xlu0 %2054
    %v2056 = vmul.f32 %v2055, %v687
    %v2057 = vadd.f32 %v2056, 1e-05
    %v2058 = vrsqrt.pop %v2057
    %v2059 = vmul.f32 %v2058, %v2057
    %v2060 = vmul.f32 %v2059, %v2058
    %v2061 = vmul.f32 0.5, %v2060
    %v2062 = vsub.f32 1.5, %v2061
    %v2063 = vmul.f32 %v2058, %v2062
    %vm2064 = vweird.f32 %v2057
    %vm2065 = vweird.f32 %v2058
    %vm2066 = vmor %vm2064, %vm2065
    %v2067 = vsel %vm2066, %v2058, %v2063
    %v2068 = vmul.f32 %v2047, %v2067
    %v2069 = vperm.slane %v2037, 0
    %2071 = vrot.lane.b32.xlu0 %v2069, 96
    %v2072 = vpop.permute.xlu0 %2071
    %v2074 = vmul.f32 %v2068, %v2072
    %v2075 = vperm.slane %v2038, 0
    %2077 = vrot.lane.b32.xlu0 %v2075, 96
    %v2078 = vpop.permute.xlu0 %2077
    %v2080 = vadd.f32 %v2074, %v2078
    %v2081 = vmax.f32 %v2080, 0.0
    %v2082 = vpack.c.bf16 %v2081, %v2081
    %v2083 = vld [vmem:[#allocation4 + $0x260] sm:$0xff]
    %v2084 = vld [vmem:[#allocation4 + $0x268] sm:$0xff]
    %v2085 = vld [vmem:[#allocation4 + $0x270] sm:$0xff]
    %v2086 = vld [vmem:[#allocation4 + $0x278] sm:$0xff]
    %v2087 = vpack.c.bf16 %v2084, %v2083
    %v2088 = vpack.c.bf16 %v2086, %v2085
    %v2089 = vld [vmem:[#allocation6 + $0x21] sm:$0x1]
    %v2090 = vperm.slane %v2089, 0
    %2092 = vrot.lane.b32.xlu0 %v2082, 32
    %v2093 = vpop.permute.xlu0 %2092
    %v2095 = vsel %vm73, %v2093, 0
    %2097 = vmatpush.bf16.msra.mxu0 0
    %2098 = vmatpush.bf16.msra.mxu0 0
    %2099 = vmatpush.bf16.msra.mxu0 0
    %2100 = vmatpush.bf16.msra.mxu0 0
    %2101 = vmatpush.bf16.msra.mxu0 0
    %2102 = vmatpush.bf16.msra.mxu0 0
    %2103 = vmatpush.bf16.msra.mxu0 %v2088
    %2104 = vmatpush.bf16.msra.mxu0 %v2087
    %2105 = vmatmul.bf16.gmra.mxu0 %v2095
    %v2106 = vpop.f32.mrf.mxu0
    %v2107 = vadd.f32 %v2090, %v2106
    %v2108 = vpop.f32.mrf.mxu0
    %2109 = vdwg.mxu0
    %2111 = vrot.lane.b32.xlu0 %v2107, 24
    %v2112 = vpop.permute.xlu0 %2111
    %vm2114 = vcmask 255168
    %2115 = vst.msk [vmem:[%s3] sm:$0x3] %vm2114, %v2112
    // Predicated region
    $region26: #{hierarchical_transformer_forward.1} parent=1 // pred_check
      _
    $region27: #{hierarchical_transformer_forward.1} parent=1 // pred_check_branch
      %2117 = sbr.rel (0) target = $region29
    $region28: #{hierarchical_transformer_forward.1} parent=1 // pred_region
      _
    $region29: #{hierarchical_transformer_forward.1} parent=1 // pred_fallthru
      _
    // Predicated region
    $region30: #{hierarchical_transformer_forward.1} parent=1 // pred_check
      _
    $region31: #{hierarchical_transformer_forward.1} parent=1 // pred_check_branch
      %2119 = sbr.rel (0) target = $region33
    $region32: #{hierarchical_transformer_forward.1} parent=1 // pred_region
      _
    $region33: #{hierarchical_transformer_forward.1} parent=1 // pred_fallthru
      _
    %2120 = vsyncpa [#allocation3], 1
    %2121 = vsyncpa [#allocation5], 1

</llo_original>
